<compile_context>
chip_gen: v5e
topology: v5e:2x2
jax: 0.10.0
libtpu: 0.0.40
codegen_flags: <defaults>
</compile_context>

<pallas_src>
import functools

import jax
import jax.numpy as jnp
from jax.experimental import pallas as pl
from jax.experimental.pallas import tpu as pltpu

# Logical (torch) layer dims and their 128-lane-padded counterparts.
_DIMS = [(784, 784), (784, 400), (400, 196), (196, 10)]
_PAD_IN = [896, 896, 512, 256]
_PAD_OUT = [896, 512, 256, 10]   # final 10-class dim left unpadded (softmax stays unmasked)


def _round_up(v, m):
    return (v + m - 1) // m * m


def _mlp4b_kernel(x_ref,
                  w1_ref, b1_ref,
                  w2_ref, b2_ref,
                  w4_ref, b4_ref,
                  w5_ref, b5_ref,
                  logits_ref, probs_ref):
    """One batch tile of the forward pass. x/weights bf16, biases/outputs f32."""
    h = jnp.dot(x_ref[...], w1_ref[...], preferred_element_type=jnp.float32)
    h = jnp.maximum(h + b1_ref[...], 0.0)                          # (TB, 896) f32

    h = jnp.dot(h.astype(jnp.bfloat16), w2_ref[...], preferred_element_type=jnp.float32)
    h = jnp.maximum(h + b2_ref[...], 0.0)                          # (TB, 512) f32

    h = jnp.dot(h.astype(jnp.bfloat16), w4_ref[...], preferred_element_type=jnp.float32)
    h = jnp.maximum(h + b4_ref[...], 0.0)                          # (TB, 256) f32

    # dropout: identity (module in eval mode)
    # TODO(synk): training-mode dropout would use pltpu.prng_seed / prng_random_bits masking.

    logits = jnp.dot(h.astype(jnp.bfloat16), w5_ref[...], preferred_element_type=jnp.float32)
    logits = jnp.maximum(logits + b5_ref[...], 0.0)                # (TB, 10) f32
    logits_ref[...] = logits

    # softmax over the 10 classes (f32, EUP exp + approx reciprocal)
    m = jnp.max(logits, axis=1, keepdims=True)
    e = jnp.exp(logits - m)
    probs_ref[...] = e * pl.reciprocal(jnp.sum(e, axis=1, keepdims=True), approx=True)


def prepare_params(raw_params):
    """Zero-pad feature dims to lane multiples; weights -> bf16, biases stay f32.

    raw_params = (w1, b1, w2, b2, w4, b4, w5, b5) with torch-layout-transposed
    weights of shape (in_features, out_features) and biases of shape (1, out).
    """
    ws = raw_params[0::2]
    bs = raw_params[1::2]
    out = []
    for w, bvec, pin, pout in zip(ws, bs, _PAD_IN, _PAD_OUT):
        fi, fo = w.shape
        wp = jnp.zeros((pin, pout), jnp.float32).at[:fi, :fo].set(w).astype(jnp.bfloat16)
        bp = jnp.zeros((1, pout), jnp.float32).at[:, :fo].set(bvec)
        out.extend([wp, bp])
    return tuple(out)


@functools.partial(jax.jit, static_argnames=())
def mlp4b_forward(x_nchw, params):
    """MLP4b forward. x_nchw: (B, 1, 28, 28) f32; params from prepare_params().

    Returns (logits, probs), both (B, 10) f32.
    """
    b = x_nchw.shape[0]
    x = x_nchw.reshape(b, 784)                      # glue: torch's x.view(-1, 784)

    # Batch tile: 512 rows when the batch is large, else the 8-rounded batch.
    tb = 512 if b >= 512 else _round_up(b, 8)
    b_pad = _round_up(b, tb)
    d_in = _PAD_IN[0]                               # 896

    # Pad batch + feature dims with zeros (identity through matmul+ReLU), cast to bf16.
    xp = jnp.zeros((b_pad, d_in), jnp.float32).at[:b, :784].set(x).astype(jnp.bfloat16)

    w1, b1, w2, b2, w4, b4, w5, b5 = params

    def _const(i):      # weights/biases: same block every grid step -> stay VMEM-resident
        return (0, 0)

    def _batched(i):    # activation tiles march down the batch
        return (i, 0)

    in_specs = [
        pl.BlockSpec((tb, d_in), _batched),
        pl.BlockSpec(w1.shape, _const), pl.BlockSpec(b1.shape, _const),
        pl.BlockSpec(w2.shape, _const), pl.BlockSpec(b2.shape, _const),
        pl.BlockSpec(w4.shape, _const), pl.BlockSpec(b4.shape, _const),
        pl.BlockSpec(w5.shape, _const), pl.BlockSpec(b5.shape, _const),
    ]
    out_specs = (
        pl.BlockSpec((tb, 10), _batched),
        pl.BlockSpec((tb, 10), _batched),
    )

    # Advisory cost model: tiny-FLOP, weight-DMA-bound custom call.
    padded_macs = 896 * 896 + 896 * 512 + 512 * 256 + 256 * 10
    weight_bytes = 2 * padded_macs                                   # bf16 weights
    bias_bytes = 4 * (896 + 512 + 256 + 10)                          # f32 biases
    act_bytes = 2 * b_pad * d_in + 2 * 4 * b_pad * 10                # bf16 in, 2x f32 out
    cost = pl.CostEstimate(
        flops=2 * b_pad * padded_macs,
        transcendentals=b_pad * 10,
        bytes_accessed=weight_bytes + bias_bytes + act_bytes,
    )

    logits, probs = pl.pallas_call(
        _mlp4b_kernel,
        out_shape=(
            jax.ShapeDtypeStruct((b_pad, 10), jnp.float32),
            jax.ShapeDtypeStruct((b_pad, 10), jnp.float32),
        ),
        grid=(b_pad // tb,),
        in_specs=in_specs,
        out_specs=out_specs,
        compiler_params=pltpu.CompilerParams(dimension_semantics=("parallel",)),
        cost_estimate=cost,
    )(xp, w1, b1, w2, b2, w4, b4, w5, b5)

    return logits[:b], probs[:b]


def init_params(key):
    """Deterministic Linear-layer params. Weights are (in_features, out_features), f32."""
    params = []
    for i, (fan_in, fan_out) in enumerate(_DIMS):
        kw, kb = jax.random.split(jax.random.fold_in(key, i))
        bound = 1.0 / jnp.sqrt(fan_in)
        w = jax.random.uniform(kw, (fan_in, fan_out), jnp.float32, -bound, bound)
        bvec = jax.random.uniform(kb, (1, fan_out), jnp.float32, -bound, bound)
        params.extend([w, bvec])
    return tuple(params)


def _reference_forward(x_nchw, raw_params):
    """Pure-JAX f32 reference of the torch forward (eval mode)."""
    h = x_nchw.reshape(x_nchw.shape[0], 784)
    w1, b1, w2, b2, w4, b4, w5, b5 = raw_params
    h = jax.nn.relu(h @ w1 + b1)
    h = jax.nn.relu(h @ w2 + b2)
    h = jax.nn.relu(h @ w4 + b4)
    lg = jax.nn.relu(h @ w5 + b5)
    return lg, jax.nn.softmax(lg, axis=1)


if __name__ == "__main__":
    key = jax.random.PRNGKey(0)
    raw_params = init_params(key)
    params = prepare_params(raw_params)   # pad + bf16-cast once, outside the hot path

    # small deterministic input, MNIST-like NCHW
    x = jax.random.normal(jax.random.fold_in(key, 100), (2, 1, 28, 28), jnp.float32)

    logits, probs = mlp4b_forward(x, params)
    jax.block_until_ready((logits, probs))

    assert logits.shape == (2, 10) and probs.shape == (2, 10)
    # probs rows sum to ~1 (approx reciprocal in the softmax)
    assert jnp.allclose(jnp.sum(probs, axis=1), 1.0, atol=5e-3)

    # match the f32 pure-JAX reference within bf16 tolerance
    ref_logits, ref_probs = _reference_forward(x, raw_params)
    assert jnp.allclose(logits, ref_logits, atol=1e-1, rtol=1e-1)
    assert jnp.allclose(probs, ref_probs, atol=5e-2)

    print("KERNEL_OK")
</pallas_src>

<mosaic_0001>
module attributes {stable_mosaic.version = 11 : i64} {
  func.func @_mlp4b_kernel(%arg0: i32, %arg1: memref<8x896xbf16, #tpu.memory_space<vmem>>, %arg2: memref<896x896xbf16, #tpu.memory_space<vmem>>, %arg3: memref<1x896xf32, #tpu.memory_space<vmem>>, %arg4: memref<896x512xbf16, #tpu.memory_space<vmem>>, %arg5: memref<1x512xf32, #tpu.memory_space<vmem>>, %arg6: memref<512x256xbf16, #tpu.memory_space<vmem>>, %arg7: memref<1x256xf32, #tpu.memory_space<vmem>>, %arg8: memref<256x10xbf16, #tpu.memory_space<vmem>>, %arg9: memref<1x10xf32, #tpu.memory_space<vmem>>, %arg10: memref<8x10xf32, #tpu.memory_space<vmem>>, %arg11: memref<8x10xf32, #tpu.memory_space<vmem>>) attributes {dimension_semantics = [#tpu.dimension_semantics<parallel>], iteration_bounds = array<i64: 1>, scalar_prefetch = 0 : i64, scratch_operands = 0 : i64, tpu.core_type = #tpu.core_type<tc>, window_params = [{transform_indices = @transform_0, window_bounds = array<i64: 8, 896>}, {pipeline_mode = #tpu.pipeline_mode<synchronous>, transform_indices = @transform_1, window_bounds = array<i64: 896, 896>}, {pipeline_mode = #tpu.pipeline_mode<synchronous>, transform_indices = @transform_2, window_bounds = array<i64: 1, 896>}, {pipeline_mode = #tpu.pipeline_mode<synchronous>, transform_indices = @transform_3, window_bounds = array<i64: 896, 512>}, {pipeline_mode = #tpu.pipeline_mode<synchronous>, transform_indices = @transform_4, window_bounds = array<i64: 1, 512>}, {pipeline_mode = #tpu.pipeline_mode<synchronous>, transform_indices = @transform_5, window_bounds = array<i64: 512, 256>}, {pipeline_mode = #tpu.pipeline_mode<synchronous>, transform_indices = @transform_6, window_bounds = array<i64: 1, 256>}, {pipeline_mode = #tpu.pipeline_mode<synchronous>, transform_indices = @transform_7, window_bounds = array<i64: 256, 10>}, {pipeline_mode = #tpu.pipeline_mode<synchronous>, transform_indices = @transform_8, window_bounds = array<i64: 1, 10>}, {transform_indices = @transform_9, window_bounds = array<i64: 8, 10>}, {transform_indices = @transform_10, window_bounds = array<i64: 8, 10>}]} {
    %c0 = arith.constant 0 : index
    %c0_0 = arith.constant 0 : index
    %0 = vector.load %arg1[%c0, %c0_0] : memref<8x896xbf16, #tpu.memory_space<vmem>>, vector<8x896xbf16>
    %c0_1 = arith.constant 0 : index
    %c0_2 = arith.constant 0 : index
    %1 = vector.load %arg2[%c0_1, %c0_2] : memref<896x896xbf16, #tpu.memory_space<vmem>>, vector<896x896xbf16>
    %cst = arith.constant dense<0.000000e+00> : vector<8x896xf32>
    %2 = tpu.matmul %0, %1, %cst {dimension_numbers = #tpu.dot_dimension_numbers<[1], [0], [0], [1], [0, 0, 1, 1], [], []>} : vector<8x896xbf16>, vector<896x896xbf16>, vector<8x896xf32> -> vector<8x896xf32>
    %c0_3 = arith.constant 0 : index
    %c0_4 = arith.constant 0 : index
    %3 = vector.load %arg3[%c0_3, %c0_4] : memref<1x896xf32, #tpu.memory_space<vmem>>, vector<1x896xf32>
    %4 = vector.broadcast %3 : vector<1x896xf32> to vector<8x896xf32>
    %5 = arith.addf %2, %4 : vector<8x896xf32>
    %cst_5 = arith.constant 0.000000e+00 : f32
    %6 = vector.broadcast %cst_5 : f32 to vector<8x896xf32>
    %7 = arith.maximumf %5, %6 : vector<8x896xf32>
    %8 = arith.truncf %7 : vector<8x896xf32> to vector<8x896xbf16>
    %c0_6 = arith.constant 0 : index
    %c0_7 = arith.constant 0 : index
    %9 = vector.load %arg4[%c0_6, %c0_7] : memref<896x512xbf16, #tpu.memory_space<vmem>>, vector<896x512xbf16>
    %cst_8 = arith.constant dense<0.000000e+00> : vector<8x512xf32>
    %10 = tpu.matmul %8, %9, %cst_8 {dimension_numbers = #tpu.dot_dimension_numbers<[1], [0], [0], [1], [0, 0, 1, 1], [], []>} : vector<8x896xbf16>, vector<896x512xbf16>, vector<8x512xf32> -> vector<8x512xf32>
    %c0_9 = arith.constant 0 : index
    %c0_10 = arith.constant 0 : index
    %11 = vector.load %arg5[%c0_9, %c0_10] : memref<1x512xf32, #tpu.memory_space<vmem>>, vector<1x512xf32>
    %12 = vector.broadcast %11 : vector<1x512xf32> to vector<8x512xf32>
    %13 = arith.addf %10, %12 : vector<8x512xf32>
    %cst_11 = arith.constant 0.000000e+00 : f32
    %14 = vector.broadcast %cst_11 : f32 to vector<8x512xf32>
    %15 = arith.maximumf %13, %14 : vector<8x512xf32>
    %16 = arith.truncf %15 : vector<8x512xf32> to vector<8x512xbf16>
    %c0_12 = arith.constant 0 : index
    %c0_13 = arith.constant 0 : index
    %17 = vector.load %arg6[%c0_12, %c0_13] : memref<512x256xbf16, #tpu.memory_space<vmem>>, vector<512x256xbf16>
    %cst_14 = arith.constant dense<0.000000e+00> : vector<8x256xf32>
    %18 = tpu.matmul %16, %17, %cst_14 {dimension_numbers = #tpu.dot_dimension_numbers<[1], [0], [0], [1], [0, 0, 1, 1], [], []>} : vector<8x512xbf16>, vector<512x256xbf16>, vector<8x256xf32> -> vector<8x256xf32>
    %c0_15 = arith.constant 0 : index
    %c0_16 = arith.constant 0 : index
    %19 = vector.load %arg7[%c0_15, %c0_16] : memref<1x256xf32, #tpu.memory_space<vmem>>, vector<1x256xf32>
    %20 = vector.broadcast %19 : vector<1x256xf32> to vector<8x256xf32>
    %21 = arith.addf %18, %20 : vector<8x256xf32>
    %cst_17 = arith.constant 0.000000e+00 : f32
    %22 = vector.broadcast %cst_17 : f32 to vector<8x256xf32>
    %23 = arith.maximumf %21, %22 : vector<8x256xf32>
    %24 = arith.truncf %23 : vector<8x256xf32> to vector<8x256xbf16>
    %c0_18 = arith.constant 0 : index
    %c0_19 = arith.constant 0 : index
    %25 = vector.load %arg8[%c0_18, %c0_19] : memref<256x10xbf16, #tpu.memory_space<vmem>>, vector<256x10xbf16>
    %cst_20 = arith.constant dense<0.000000e+00> : vector<8x10xf32>
    %26 = tpu.matmul %24, %25, %cst_20 {dimension_numbers = #tpu.dot_dimension_numbers<[1], [0], [0], [1], [0, 0, 1, 1], [], []>} : vector<8x256xbf16>, vector<256x10xbf16>, vector<8x10xf32> -> vector<8x10xf32>
    %c0_21 = arith.constant 0 : index
    %c0_22 = arith.constant 0 : index
    %27 = vector.load %arg9[%c0_21, %c0_22] : memref<1x10xf32, #tpu.memory_space<vmem>>, vector<1x10xf32>
    %28 = vector.broadcast %27 : vector<1x10xf32> to vector<8x10xf32>
    %29 = arith.addf %26, %28 : vector<8x10xf32>
    %cst_23 = arith.constant 0.000000e+00 : f32
    %30 = vector.broadcast %cst_23 : f32 to vector<8x10xf32>
    %31 = arith.maximumf %29, %30 : vector<8x10xf32>
    %c0_24 = arith.constant 0 : index
    %c0_25 = arith.constant 0 : index
    %32 = vector.load %arg10[%c0_24, %c0_25] : memref<8x10xf32, #tpu.memory_space<vmem>>, vector<8x10xf32>
    tpu.vector_store %arg10[%c0_24, %c0_25], %31 {strides = array<i32>} : memref<8x10xf32, #tpu.memory_space<vmem>>, vector<8x10xf32>,
    %cst_26 = arith.constant dense<0xFF800000> : vector<8xf32>
    %33 = vector.multi_reduction <maximumf>, %31, %cst_26 [1] : vector<8x10xf32> to vector<8xf32>
    %34 = vector.shape_cast %33 : vector<8xf32> to vector<8x1xf32>
    %35 = vector.broadcast %34 : vector<8x1xf32> to vector<8x10xf32>
    %36 = arith.subf %31, %35 : vector<8x10xf32>
    %37 = math.exp %36 : vector<8x10xf32>
    %cst_27 = arith.constant dense<0.000000e+00> : vector<8xf32>
    %38 = vector.multi_reduction <add>, %37, %cst_27 [1] : vector<8x10xf32> to vector<8xf32>
    %39 = vector.shape_cast %38 : vector<8xf32> to vector<8x1xf32>
    %40 = tpu.reciprocal %39 {approx = true} : vector<8x1xf32> -> vector<8x1xf32>
    %41 = vector.broadcast %40 : vector<8x1xf32> to vector<8x10xf32>
    %42 = arith.mulf %37, %41 : vector<8x10xf32>
    %c0_28 = arith.constant 0 : index
    %c0_29 = arith.constant 0 : index
    %43 = vector.load %arg11[%c0_28, %c0_29] : memref<8x10xf32, #tpu.memory_space<vmem>>, vector<8x10xf32>
    tpu.vector_store %arg11[%c0_28, %c0_29], %42 {strides = array<i32>} : memref<8x10xf32, #tpu.memory_space<vmem>>, vector<8x10xf32>,
    return
  }
  func.func @transform_0(%arg0: i32) -> (i32, i32) {
    %c0_i32 = arith.constant 0 : i32
    %c0_i32_0 = arith.constant 0 : i32
    return %arg0, %c0_i32 : i32, i32
  }
  func.func @transform_1(%arg0: i32) -> (i32, i32) {
    %c0_i32 = arith.constant 0 : i32
    %c0_i32_0 = arith.constant 0 : i32
    %c0_i32_1 = arith.constant 0 : i32
    return %c0_i32, %c0_i32_0 : i32, i32
  }
  func.func @transform_2(%arg0: i32) -> (i32, i32) {
    %c0_i32 = arith.constant 0 : i32
    %c0_i32_0 = arith.constant 0 : i32
    %c0_i32_1 = arith.constant 0 : i32
    return %c0_i32, %c0_i32_0 : i32, i32
  }
  func.func @transform_3(%arg0: i32) -> (i32, i32) {
    %c0_i32 = arith.constant 0 : i32
    %c0_i32_0 = arith.constant 0 : i32
    %c0_i32_1 = arith.constant 0 : i32
    return %c0_i32, %c0_i32_0 : i32, i32
  }
  func.func @transform_4(%arg0: i32) -> (i32, i32) {
    %c0_i32 = arith.constant 0 : i32
    %c0_i32_0 = arith.constant 0 : i32
    %c0_i32_1 = arith.constant 0 : i32
    return %c0_i32, %c0_i32_0 : i32, i32
  }
  func.func @transform_5(%arg0: i32) -> (i32, i32) {
    %c0_i32 = arith.constant 0 : i32
    %c0_i32_0 = arith.constant 0 : i32
    %c0_i32_1 = arith.constant 0 : i32
    return %c0_i32, %c0_i32_0 : i32, i32
  }
  func.func @transform_6(%arg0: i32) -> (i32, i32) {
    %c0_i32 = arith.constant 0 : i32
    %c0_i32_0 = arith.constant 0 : i32
    %c0_i32_1 = arith.constant 0 : i32
    return %c0_i32, %c0_i32_0 : i32, i32
  }
  func.func @transform_7(%arg0: i32) -> (i32, i32) {
    %c0_i32 = arith.constant 0 : i32
    %c0_i32_0 = arith.constant 0 : i32
    %c0_i32_1 = arith.constant 0 : i32
    return %c0_i32, %c0_i32_0 : i32, i32
  }
  func.func @transform_8(%arg0: i32) -> (i32, i32) {
    %c0_i32 = arith.constant 0 : i32
    %c0_i32_0 = arith.constant 0 : i32
    %c0_i32_1 = arith.constant 0 : i32
    return %c0_i32, %c0_i32_0 : i32, i32
  }
  func.func @transform_9(%arg0: i32) -> (i32, i32) {
    %c0_i32 = arith.constant 0 : i32
    %c0_i32_0 = arith.constant 0 : i32
    return %arg0, %c0_i32 : i32, i32
  }
  func.func @transform_10(%arg0: i32) -> (i32, i32) {
    %c0_i32 = arith.constant 0 : i32
    %c0_i32_0 = arith.constant 0 : i32
    return %arg0, %c0_i32 : i32, i32
  }
}

</mosaic_0001>

<llo_original>
// kernel: mlp4b_forward.1
$region0: #{mlp4b_forward.1}
  #allocation0 [shape = 'u32[]', space=smem, size = 0x4, offset = 0x4, fixed_abs, tag = 'smem constant byte address 0x4 - core index']
  #allocation1 [shape = 'u32[72,128]{1,0:T(1,128)}', space=vmem, size = 0x9000, scoped, tag = 'internal scratch']
  %s0 = inlined_call_operand.vmem [shape: bf16[8,896], index: 0, kind: input, shape index: {}]
  %s1 = inlined_call_operand.hbm [shape: bf16[896,896], index: 1, kind: input, shape index: {}]
  %s2 = inlined_call_operand.hbm [shape: f32[1,896], index: 2, kind: input, shape index: {}]
  %s3 = inlined_call_operand.hbm [shape: bf16[896,512], index: 3, kind: input, shape index: {}]
  %s4 = inlined_call_operand.hbm [shape: f32[1,512], index: 4, kind: input, shape index: {}]
  %s5 = inlined_call_operand.hbm [shape: bf16[512,256], index: 5, kind: input, shape index: {}]
  %s6 = inlined_call_operand.hbm [shape: f32[1,256], index: 6, kind: input, shape index: {}]
  %s7 = inlined_call_operand.vmem [shape: bf16[256,10], index: 7, kind: input, shape index: {}]
  %s8 = inlined_call_operand.hbm [shape: f32[1,10], index: 8, kind: input, shape index: {}]
  %s9 = inlined_call_operand.vmem [shape: f32[8,10], index: 9, kind: output, shape index: {0}]
  %s10 = inlined_call_operand.vmem [shape: f32[8,10], index: 10, kind: output, shape index: {1}]
  %11 = xla_tuple %s9, %s10
  %s12 = sld [smem:[#allocation0]]
  $region82: #{mlp4b_forward.1} parent=0
    _
  %s14 = ssub.s32 1, %s12
  %s15 = scalar_select 0, %s14, %s12
  $region1: #{mlp4b_forward.1} parent=0
    #allocation2 [shape = 'u8[1605632]{0}', space=vmem, size = 0x188000, scoped, tag = 'input window, operand 1, single buffered']
    #allocation3 [shape = 's32[1]{0}', space=sflag, size = 0x4, scoped, tag = 'scoped memory for mlp4b_forward.1']
    #allocation4 [shape = 'u8[3584]{0}', space=vmem, size = 0x1000, scoped, tag = 'input window, operand 2, single buffered']
    #allocation5 [shape = 's32[1]{0}', space=sflag, size = 0x4, scoped, tag = 'scoped memory for mlp4b_forward.1']
    #allocation6 [shape = 'u8[917504]{0}', space=vmem, size = 0xe0000, scoped, tag = 'input window, operand 3, single buffered']
    #allocation7 [shape = 'u8[2048]{0}', space=vmem, size = 0x800, scoped, tag = 'input window, operand 4, single buffered']
    #allocation8 [shape = 's32[1]{0}', space=sflag, size = 0x4, scoped, tag = 'scoped memory for mlp4b_forward.1']
    #allocation9 [shape = 'u8[262144]{0}', space=vmem, size = 0x40000, scoped, tag = 'input window, operand 5, single buffered']
    #allocation10 [shape = 'u8[1024]{0}', space=vmem, size = 0x400, scoped, tag = 'input window, operand 6, single buffered']
    #allocation11 [shape = 's32[1]{0}', space=sflag, size = 0x4, scoped, tag = 'scoped memory for mlp4b_forward.1']
    #allocation12 [shape = 'u8[512]{0}', space=vmem, size = 0x400, scoped, tag = 'input window, operand 8, single buffered']
    %16 = vsyncpa [#allocation3], 0
    %17 = vsyncpa [#allocation5], 0
    %18 = vsyncpa [#allocation8], 0
    %19 = vsyncpa [#allocation11], 0
    // Predicated region
    $region2: #{mlp4b_forward.1} parent=1 // pred_check
      _
    $region3: #{mlp4b_forward.1} parent=1 // pred_check_branch
      %21 = sbr.rel (0) target = $region5
    $region4: #{mlp4b_forward.1} parent=1 // pred_region
      _
    $region5: #{mlp4b_forward.1} parent=1 // pred_fallthru
      _
    // Predicated region
    $region6: #{mlp4b_forward.1} parent=1 // pred_check
      _
    $region7: #{mlp4b_forward.1} parent=1 // pred_check_branch
      %23 = sbr.rel (0) target = $region9
    $region8: #{mlp4b_forward.1} parent=1 // pred_region
      %25 = vsyncadd [#allocation3], 0
      %s26 = sshll.u32 %s1, 4
      %s27 = int_to_ptr.hbm [resolvable:$true] %s26
      %s28 = sshll.u32 [#allocation2], 4
      %s29 = int_to_ptr.vmem [resolvable:$true] %s28
      %34 = dma.hbm_to_vmem [thread:$0]  %s27, 50176, %s29, [#allocation3], 448, 448, 28
    $region9: #{mlp4b_forward.1} parent=1 // pred_fallthru
      _
    // Predicated region
    $region10: #{mlp4b_forward.1} parent=1 // pred_check
      _
    $region11: #{mlp4b_forward.1} parent=1 // pred_check_branch
      %36 = sbr.rel (0) target = $region13
    $region12: #{mlp4b_forward.1} parent=1 // pred_region
      %38 = vsyncadd [#allocation5], 0
      %s40 = sshll.u32 %s2, 4
      %s41 = int_to_ptr.hbm [resolvable:$true] %s40
      %s42 = sshll.u32 [#allocation4], 4
      %s43 = int_to_ptr.vmem [resolvable:$true] %s42
      %45 = dma.hbm_to_vmem [thread:$0]  %s41, 112, %s43, [#allocation5]
    $region13: #{mlp4b_forward.1} parent=1 // pred_fallthru
      _
    // Predicated region
    $region14: #{mlp4b_forward.1} parent=1 // pred_check
      _
    $region15: #{mlp4b_forward.1} parent=1 // pred_check_branch
      %47 = sbr.rel (0) target = $region17
    $region16: #{mlp4b_forward.1} parent=1 // pred_region
      %49 = vsyncadd [#allocation5], 0
      %s50 = sshll.u32 %s3, 4
      %s51 = int_to_ptr.hbm [resolvable:$true] %s50
      %s52 = sshll.u32 [#allocation6], 4
      %s53 = int_to_ptr.vmem [resolvable:$true] %s52
      %58 = dma.hbm_to_vmem [thread:$0]  %s51, 28672, %s53, [#allocation5], 256, 256, 16
    $region17: #{mlp4b_forward.1} parent=1 // pred_fallthru
      _
    // Predicated region
    $region18: #{mlp4b_forward.1} parent=1 // pred_check
      _
    $region19: #{mlp4b_forward.1} parent=1 // pred_check_branch
      %60 = sbr.rel (0) target = $region21
    $region20: #{mlp4b_forward.1} parent=1 // pred_region
      %62 = vsyncadd [#allocation8], 0
      %s64 = sshll.u32 %s4, 4
      %s65 = int_to_ptr.hbm [resolvable:$true] %s64
      %s66 = sshll.u32 [#allocation7], 4
      %s67 = int_to_ptr.vmem [resolvable:$true] %s66
      %69 = dma.hbm_to_vmem [thread:$0]  %s65, 64, %s67, [#allocation8]
    $region21: #{mlp4b_forward.1} parent=1 // pred_fallthru
      _
    // Predicated region
    $region22: #{mlp4b_forward.1} parent=1 // pred_check
      _
    $region23: #{mlp4b_forward.1} parent=1 // pred_check_branch
      %71 = sbr.rel (0) target = $region25
    $region24: #{mlp4b_forward.1} parent=1 // pred_region
      %73 = vsyncadd [#allocation8], 0
      %s74 = sshll.u32 %s5, 4
      %s75 = int_to_ptr.hbm [resolvable:$true] %s74
      %s76 = sshll.u32 [#allocation9], 4
      %s77 = int_to_ptr.vmem [resolvable:$true] %s76
      %82 = dma.hbm_to_vmem [thread:$0]  %s75, 8192, %s77, [#allocation8], 128, 128, 8
    $region25: #{mlp4b_forward.1} parent=1 // pred_fallthru
      _
    // Predicated region
    $region26: #{mlp4b_forward.1} parent=1 // pred_check
      _
    $region27: #{mlp4b_forward.1} parent=1 // pred_check_branch
      %84 = sbr.rel (0) target = $region29
    $region28: #{mlp4b_forward.1} parent=1 // pred_region
      %86 = vsyncadd [#allocation11], 0
      %s88 = sshll.u32 %s6, 4
      %s89 = int_to_ptr.hbm [resolvable:$true] %s88
      %s90 = sshll.u32 [#allocation10], 4
      %s91 = int_to_ptr.vmem [resolvable:$true] %s90
      %93 = dma.hbm_to_vmem [thread:$0]  %s89, 32, %s91, [#allocation11]
    $region29: #{mlp4b_forward.1} parent=1 // pred_fallthru
      _
    // Predicated region
    $region30: #{mlp4b_forward.1} parent=1 // pred_check
      _
    $region31: #{mlp4b_forward.1} parent=1 // pred_check_branch
      %95 = sbr.rel (0) target = $region33
    $region32: #{mlp4b_forward.1} parent=1 // pred_region
      _
    $region33: #{mlp4b_forward.1} parent=1 // pred_fallthru
      _
    // Predicated region
    $region34: #{mlp4b_forward.1} parent=1 // pred_check
      _
    $region35: #{mlp4b_forward.1} parent=1 // pred_check_branch
      %97 = sbr.rel (0) target = $region37
    $region36: #{mlp4b_forward.1} parent=1 // pred_region
      %99 = vsyncadd [#allocation11], 0
      %s101 = sshll.u32 %s8, 4
      %s102 = int_to_ptr.hbm [resolvable:$true] %s101
      %s103 = sshll.u32 [#allocation12], 4
      %s104 = int_to_ptr.vmem [resolvable:$true] %s103
      %106 = dma.hbm_to_vmem [thread:$0]  %s102, 16, %s104, [#allocation11]
    $region37: #{mlp4b_forward.1} parent=1 // pred_fallthru
      _
    // Predicated region
    $region38: #{mlp4b_forward.1} parent=1 // pred_check
      _
    $region39: #{mlp4b_forward.1} parent=1 // pred_check_branch
      %108 = sbr.rel (0) target = $region41
    $region40: #{mlp4b_forward.1} parent=1 // pred_region
      %110 = dma.done [#allocation3], 50176
    $region41: #{mlp4b_forward.1} parent=1 // pred_fallthru
      _
    // Predicated region
    $region42: #{mlp4b_forward.1} parent=1 // pred_check
      _
    $region43: #{mlp4b_forward.1} parent=1 // pred_check_branch
      %112 = sbr.rel (0) target = $region45
    $region44: #{mlp4b_forward.1} parent=1 // pred_region
      %114 = dma.done [#allocation5], 112
    $region45: #{mlp4b_forward.1} parent=1 // pred_fallthru
      _
    // Predicated region
    $region46: #{mlp4b_forward.1} parent=1 // pred_check
      _
    $region47: #{mlp4b_forward.1} parent=1 // pred_check_branch
      %116 = sbr.rel (0) target = $region49
    $region48: #{mlp4b_forward.1} parent=1 // pred_region
      %118 = dma.done [#allocation5], 28672
    $region49: #{mlp4b_forward.1} parent=1 // pred_fallthru
      _
    // Predicated region
    $region50: #{mlp4b_forward.1} parent=1 // pred_check
      _
    $region51: #{mlp4b_forward.1} parent=1 // pred_check_branch
      %120 = sbr.rel (0) target = $region53
    $region52: #{mlp4b_forward.1} parent=1 // pred_region
      %122 = dma.done [#allocation8], 64
    $region53: #{mlp4b_forward.1} parent=1 // pred_fallthru
      _
    // Predicated region
    $region54: #{mlp4b_forward.1} parent=1 // pred_check
      _
    $region55: #{mlp4b_forward.1} parent=1 // pred_check_branch
      %124 = sbr.rel (0) target = $region57
    $region56: #{mlp4b_forward.1} parent=1 // pred_region
      %126 = dma.done [#allocation8], 8192
    $region57: #{mlp4b_forward.1} parent=1 // pred_fallthru
      _
    // Predicated region
    $region58: #{mlp4b_forward.1} parent=1 // pred_check
      _
    $region59: #{mlp4b_forward.1} parent=1 // pred_check_branch
      %128 = sbr.rel (0) target = $region61
    $region60: #{mlp4b_forward.1} parent=1 // pred_region
      %130 = dma.done [#allocation11], 32
    $region61: #{mlp4b_forward.1} parent=1 // pred_fallthru
      _
    // Predicated region
    $region62: #{mlp4b_forward.1} parent=1 // pred_check
      _
    $region63: #{mlp4b_forward.1} parent=1 // pred_check_branch
      %132 = sbr.rel (0) target = $region65
    $region64: #{mlp4b_forward.1} parent=1 // pred_region
      %134 = dma.done [#allocation11], 16
    $region65: #{mlp4b_forward.1} parent=1 // pred_fallthru
      _
    %v135 = vld [vmem:[%s0] sm:$0xff]
    %v136 = vld [vmem:[%s0 + $0x8] sm:$0xff]
    %v137 = vld [vmem:[%s0 + $0x10] sm:$0xff]
    %v138 = vld [vmem:[%s0 + $0x18] sm:$0xf]
    %v139 = vld [vmem:[#allocation2] sm:$0xff]
    %v140 = vld [vmem:[#allocation2 + $0x8] sm:$0xff]
    %v141 = vld [vmem:[#allocation2 + $0x10] sm:$0xff]
    %v142 = vld [vmem:[#allocation2 + $0x18] sm:$0xf]
    %v143 = vld [vmem:[#allocation2 + $0x1c] sm:$0xff]
    %v144 = vld [vmem:[#allocation2 + $0x24] sm:$0xff]
    %v145 = vld [vmem:[#allocation2 + $0x2c] sm:$0xff]
    %v146 = vld [vmem:[#allocation2 + $0x34] sm:$0xf]
    %v147 = vld [vmem:[#allocation2 + $0x38] sm:$0xff]
    %v148 = vld [vmem:[#allocation2 + $0x40] sm:$0xff]
    %v149 = vld [vmem:[#allocation2 + $0x48] sm:$0xff]
    %v150 = vld [vmem:[#allocation2 + $0x50] sm:$0xf]
    %v151 = vld [vmem:[#allocation2 + $0x54] sm:$0xff]
    %v152 = vld [vmem:[#allocation2 + $0x5c] sm:$0xff]
    %v153 = vld [vmem:[#allocation2 + $0x64] sm:$0xff]
    %v154 = vld [vmem:[#allocation2 + $0x6c] sm:$0xf]
    %v155 = vld [vmem:[#allocation2 + $0x70] sm:$0xff]
    %v156 = vld [vmem:[#allocation2 + $0x78] sm:$0xff]
    %v157 = vld [vmem:[#allocation2 + $0x80] sm:$0xff]
    %v158 = vld [vmem:[#allocation2 + $0x88] sm:$0xf]
    %v159 = vld [vmem:[#allocation2 + $0x8c] sm:$0xff]
    %v160 = vld [vmem:[#allocation2 + $0x94] sm:$0xff]
    %v161 = vld [vmem:[#allocation2 + $0x9c] sm:$0xff]
    %v162 = vld [vmem:[#allocation2 + $0xa4] sm:$0xf]
    %v163 = vld [vmem:[#allocation2 + $0xa8] sm:$0xff]
    %v164 = vld [vmem:[#allocation2 + $0xb0] sm:$0xff]
    %v165 = vld [vmem:[#allocation2 + $0xb8] sm:$0xff]
    %v166 = vld [vmem:[#allocation2 + $0xc0] sm:$0xf]
    %v167 = vld [vmem:[#allocation2 + $0xc4] sm:$0xff]
    %v168 = vld [vmem:[#allocation2 + $0xcc] sm:$0xff]
    %v169 = vld [vmem:[#allocation2 + $0xd4] sm:$0xff]
    %v170 = vld [vmem:[#allocation2 + $0xdc] sm:$0xf]
    %v171 = vld [vmem:[#allocation2 + $0xe0] sm:$0xff]
    %v172 = vld [vmem:[#allocation2 + $0xe8] sm:$0xff]
    %v173 = vld [vmem:[#allocation2 + $0xf0] sm:$0xff]
    %v174 = vld [vmem:[#allocation2 + $0xf8] sm:$0xf]
    %v175 = vld [vmem:[#allocation2 + $0xfc] sm:$0xff]
    %v176 = vld [vmem:[#allocation2 + $0x104] sm:$0xff]
    %v177 = vld [vmem:[#allocation2 + $0x10c] sm:$0xff]
    %v178 = vld [vmem:[#allocation2 + $0x114] sm:$0xf]
    %v179 = vld [vmem:[#allocation2 + $0x118] sm:$0xff]
    %v180 = vld [vmem:[#allocation2 + $0x120] sm:$0xff]
    %v181 = vld [vmem:[#allocation2 + $0x128] sm:$0xff]
    %v182 = vld [vmem:[#allocation2 + $0x130] sm:$0xf]
    %v183 = vld [vmem:[#allocation2 + $0x134] sm:$0xff]
    %v184 = vld [vmem:[#allocation2 + $0x13c] sm:$0xff]
    %v185 = vld [vmem:[#allocation2 + $0x144] sm:$0xff]
    %v186 = vld [vmem:[#allocation2 + $0x14c] sm:$0xf]
    %v187 = vld [vmem:[#allocation2 + $0x150] sm:$0xff]
    %v188 = vld [vmem:[#allocation2 + $0x158] sm:$0xff]
    %v189 = vld [vmem:[#allocation2 + $0x160] sm:$0xff]
    %v190 = vld [vmem:[#allocation2 + $0x168] sm:$0xf]
    %v191 = vld [vmem:[#allocation2 + $0x16c] sm:$0xff]
    %v192 = vld [vmem:[#allocation2 + $0x174] sm:$0xff]
    %v193 = vld [vmem:[#allocation2 + $0x17c] sm:$0xff]
    %v194 = vld [vmem:[#allocation2 + $0x184] sm:$0xf]
    %v195 = vld [vmem:[#allocation2 + $0x188] sm:$0xff]
    %v196 = vld [vmem:[#allocation2 + $0x190] sm:$0xff]
    %v197 = vld [vmem:[#allocation2 + $0x198] sm:$0xff]
    %v198 = vld [vmem:[#allocation2 + $0x1a0] sm:$0xf]
    %v199 = vld [vmem:[#allocation2 + $0x1a4] sm:$0xff]
    %v200 = vld [vmem:[#allocation2 + $0x1ac] sm:$0xff]
    %v201 = vld [vmem:[#allocation2 + $0x1b4] sm:$0xff]
    %v202 = vld [vmem:[#allocation2 + $0x1bc] sm:$0xf]
    %v203 = vld [vmem:[#allocation2 + $0x1c0] sm:$0xff]
    %v204 = vld [vmem:[#allocation2 + $0x1c8] sm:$0xff]
    %v205 = vld [vmem:[#allocation2 + $0x1d0] sm:$0xff]
    %v206 = vld [vmem:[#allocation2 + $0x1d8] sm:$0xf]
    %v207 = vld [vmem:[#allocation2 + $0x1dc] sm:$0xff]
    %v208 = vld [vmem:[#allocation2 + $0x1e4] sm:$0xff]
    %v209 = vld [vmem:[#allocation2 + $0x1ec] sm:$0xff]
    %v210 = vld [vmem:[#allocation2 + $0x1f4] sm:$0xf]
    %v211 = vld [vmem:[#allocation2 + $0x1f8] sm:$0xff]
    %v212 = vld [vmem:[#allocation2 + $0x200] sm:$0xff]
    %v213 = vld [vmem:[#allocation2 + $0x208] sm:$0xff]
    %v214 = vld [vmem:[#allocation2 + $0x210] sm:$0xf]
    %v215 = vld [vmem:[#allocation2 + $0x214] sm:$0xff]
    %v216 = vld [vmem:[#allocation2 + $0x21c] sm:$0xff]
    %v217 = vld [vmem:[#allocation2 + $0x224] sm:$0xff]
    %v218 = vld [vmem:[#allocation2 + $0x22c] sm:$0xf]
    %v219 = vld [vmem:[#allocation2 + $0x230] sm:$0xff]
    %v220 = vld [vmem:[#allocation2 + $0x238] sm:$0xff]
    %v221 = vld [vmem:[#allocation2 + $0x240] sm:$0xff]
    %v222 = vld [vmem:[#allocation2 + $0x248] sm:$0xf]
    %v223 = vld [vmem:[#allocation2 + $0x24c] sm:$0xff]
    %v224 = vld [vmem:[#allocation2 + $0x254] sm:$0xff]
    %v225 = vld [vmem:[#allocation2 + $0x25c] sm:$0xff]
    %v226 = vld [vmem:[#allocation2 + $0x264] sm:$0xf]
    %v227 = vld [vmem:[#allocation2 + $0x268] sm:$0xff]
    %v228 = vld [vmem:[#allocation2 + $0x270] sm:$0xff]
    %v229 = vld [vmem:[#allocation2 + $0x278] sm:$0xff]
    %v230 = vld [vmem:[#allocation2 + $0x280] sm:$0xf]
    %v231 = vld [vmem:[#allocation2 + $0x284] sm:$0xff]
    %v232 = vld [vmem:[#allocation2 + $0x28c] sm:$0xff]
    %v233 = vld [vmem:[#allocation2 + $0x294] sm:$0xff]
    %v234 = vld [vmem:[#allocation2 + $0x29c] sm:$0xf]
    %v235 = vld [vmem:[#allocation2 + $0x2a0] sm:$0xff]
    %v236 = vld [vmem:[#allocation2 + $0x2a8] sm:$0xff]
    %v237 = vld [vmem:[#allocation2 + $0x2b0] sm:$0xff]
    %v238 = vld [vmem:[#allocation2 + $0x2b8] sm:$0xf]
    %v239 = vld [vmem:[#allocation2 + $0x2bc] sm:$0xff]
    %v240 = vld [vmem:[#allocation2 + $0x2c4] sm:$0xff]
    %v241 = vld [vmem:[#allocation2 + $0x2cc] sm:$0xff]
    %v242 = vld [vmem:[#allocation2 + $0x2d4] sm:$0xf]
    %v243 = vld [vmem:[#allocation2 + $0x2d8] sm:$0xff]
    %v244 = vld [vmem:[#allocation2 + $0x2e0] sm:$0xff]
    %v245 = vld [vmem:[#allocation2 + $0x2e8] sm:$0xff]
    %v246 = vld [vmem:[#allocation2 + $0x2f0] sm:$0xf]
    %v247 = vld [vmem:[#allocation2 + $0x2f4] sm:$0xff]
    %v248 = vld [vmem:[#allocation2 + $0x2fc] sm:$0xff]
    %v249 = vld [vmem:[#allocation2 + $0x304] sm:$0xff]
    %v250 = vld [vmem:[#allocation2 + $0x30c] sm:$0xf]
    %v251 = vld [vmem:[#allocation2 + $0x310] sm:$0xff]
    %v252 = vld [vmem:[#allocation2 + $0x318] sm:$0xff]
    %v253 = vld [vmem:[#allocation2 + $0x320] sm:$0xff]
    %v254 = vld [vmem:[#allocation2 + $0x328] sm:$0xf]
    %v255 = vld [vmem:[#allocation2 + $0x32c] sm:$0xff]
    %v256 = vld [vmem:[#allocation2 + $0x334] sm:$0xff]
    %v257 = vld [vmem:[#allocation2 + $0x33c] sm:$0xff]
    %v258 = vld [vmem:[#allocation2 + $0x344] sm:$0xf]
    %v259 = vld [vmem:[#allocation2 + $0x348] sm:$0xff]
    %v260 = vld [vmem:[#allocation2 + $0x350] sm:$0xff]
    %v261 = vld [vmem:[#allocation2 + $0x358] sm:$0xff]
    %v262 = vld [vmem:[#allocation2 + $0x360] sm:$0xf]
    %v263 = vld [vmem:[#allocation2 + $0x364] sm:$0xff]
    %v264 = vld [vmem:[#allocation2 + $0x36c] sm:$0xff]
    %v265 = vld [vmem:[#allocation2 + $0x374] sm:$0xff]
    %v266 = vld [vmem:[#allocation2 + $0x37c] sm:$0xf]
    %v267 = vld [vmem:[#allocation2 + $0x380] sm:$0xff]
    %v268 = vld [vmem:[#allocation2 + $0x388] sm:$0xff]
    %v269 = vld [vmem:[#allocation2 + $0x390] sm:$0xff]
    %v270 = vld [vmem:[#allocation2 + $0x398] sm:$0xf]
    %v271 = vld [vmem:[#allocation2 + $0x39c] sm:$0xff]
    %v272 = vld [vmem:[#allocation2 + $0x3a4] sm:$0xff]
    %v273 = vld [vmem:[#allocation2 + $0x3ac] sm:$0xff]
    %v274 = vld [vmem:[#allocation2 + $0x3b4] sm:$0xf]
    %v275 = vld [vmem:[#allocation2 + $0x3b8] sm:$0xff]
    %v276 = vld [vmem:[#allocation2 + $0x3c0] sm:$0xff]
    %v277 = vld [vmem:[#allocation2 + $0x3c8] sm:$0xff]
    %v278 = vld [vmem:[#allocation2 + $0x3d0] sm:$0xf]
    %v279 = vld [vmem:[#allocation2 + $0x3d4] sm:$0xff]
    %v280 = vld [vmem:[#allocation2 + $0x3dc] sm:$0xff]
    %v281 = vld [vmem:[#allocation2 + $0x3e4] sm:$0xff]
    %v282 = vld [vmem:[#allocation2 + $0x3ec] sm:$0xf]
    %v283 = vld [vmem:[#allocation2 + $0x3f0] sm:$0xff]
    %v284 = vld [vmem:[#allocation2 + $0x3f8] sm:$0xff]
    %v285 = vld [vmem:[#allocation2 + $0x400] sm:$0xff]
    %v286 = vld [vmem:[#allocation2 + $0x408] sm:$0xf]
    %v287 = vld [vmem:[#allocation2 + $0x40c] sm:$0xff]
    %v288 = vld [vmem:[#allocation2 + $0x414] sm:$0xff]
    %v289 = vld [vmem:[#allocation2 + $0x41c] sm:$0xff]
    %v290 = vld [vmem:[#allocation2 + $0x424] sm:$0xf]
    %v291 = vld [vmem:[#allocation2 + $0x428] sm:$0xff]
    %v292 = vld [vmem:[#allocation2 + $0x430] sm:$0xff]
    %v293 = vld [vmem:[#allocation2 + $0x438] sm:$0xff]
    %v294 = vld [vmem:[#allocation2 + $0x440] sm:$0xf]
    %v295 = vld [vmem:[#allocation2 + $0x444] sm:$0xff]
    %v296 = vld [vmem:[#allocation2 + $0x44c] sm:$0xff]
    %v297 = vld [vmem:[#allocation2 + $0x454] sm:$0xff]
    %v298 = vld [vmem:[#allocation2 + $0x45c] sm:$0xf]
    %v299 = vld [vmem:[#allocation2 + $0x460] sm:$0xff]
    %v300 = vld [vmem:[#allocation2 + $0x468] sm:$0xff]
    %v301 = vld [vmem:[#allocation2 + $0x470] sm:$0xff]
    %v302 = vld [vmem:[#allocation2 + $0x478] sm:$0xf]
    %v303 = vld [vmem:[#allocation2 + $0x47c] sm:$0xff]
    %v304 = vld [vmem:[#allocation2 + $0x484] sm:$0xff]
    %v305 = vld [vmem:[#allocation2 + $0x48c] sm:$0xff]
    %v306 = vld [vmem:[#allocation2 + $0x494] sm:$0xf]
    %v307 = vld [vmem:[#allocation2 + $0x498] sm:$0xff]
    %v308 = vld [vmem:[#allocation2 + $0x4a0] sm:$0xff]
    %v309 = vld [vmem:[#allocation2 + $0x4a8] sm:$0xff]
    %v310 = vld [vmem:[#allocation2 + $0x4b0] sm:$0xf]
    %v311 = vld [vmem:[#allocation2 + $0x4b4] sm:$0xff]
    %v312 = vld [vmem:[#allocation2 + $0x4bc] sm:$0xff]
    %v313 = vld [vmem:[#allocation2 + $0x4c4] sm:$0xff]
    %v314 = vld [vmem:[#allocation2 + $0x4cc] sm:$0xf]
    %v315 = vld [vmem:[#allocation2 + $0x4d0] sm:$0xff]
    %v316 = vld [vmem:[#allocation2 + $0x4d8] sm:$0xff]
    %v317 = vld [vmem:[#allocation2 + $0x4e0] sm:$0xff]
    %v318 = vld [vmem:[#allocation2 + $0x4e8] sm:$0xf]
    %v319 = vld [vmem:[#allocation2 + $0x4ec] sm:$0xff]
    %v320 = vld [vmem:[#allocation2 + $0x4f4] sm:$0xff]
    %v321 = vld [vmem:[#allocation2 + $0x4fc] sm:$0xff]
    %v322 = vld [vmem:[#allocation2 + $0x504] sm:$0xf]
    %v323 = vld [vmem:[#allocation2 + $0x508] sm:$0xff]
    %v324 = vld [vmem:[#allocation2 + $0x510] sm:$0xff]
    %v325 = vld [vmem:[#allocation2 + $0x518] sm:$0xff]
    %v326 = vld [vmem:[#allocation2 + $0x520] sm:$0xf]
    %v327 = vld [vmem:[#allocation2 + $0x524] sm:$0xff]
    %v328 = vld [vmem:[#allocation2 + $0x52c] sm:$0xff]
    %v329 = vld [vmem:[#allocation2 + $0x534] sm:$0xff]
    %v330 = vld [vmem:[#allocation2 + $0x53c] sm:$0xf]
    %v331 = vld [vmem:[#allocation2 + $0x540] sm:$0xff]
    %v332 = vld [vmem:[#allocation2 + $0x548] sm:$0xff]
    %v333 = vld [vmem:[#allocation2 + $0x550] sm:$0xff]
    %v334 = vld [vmem:[#allocation2 + $0x558] sm:$0xf]
    %v335 = vld [vmem:[#allocation2 + $0x55c] sm:$0xff]
    %v336 = vld [vmem:[#allocation2 + $0x564] sm:$0xff]
    %v337 = vld [vmem:[#allocation2 + $0x56c] sm:$0xff]
    %v338 = vld [vmem:[#allocation2 + $0x574] sm:$0xf]
    %v339 = vld [vmem:[#allocation2 + $0x578] sm:$0xff]
    %v340 = vld [vmem:[#allocation2 + $0x580] sm:$0xff]
    %v341 = vld [vmem:[#allocation2 + $0x588] sm:$0xff]
    %v342 = vld [vmem:[#allocation2 + $0x590] sm:$0xf]
    %v343 = vld [vmem:[#allocation2 + $0x594] sm:$0xff]
    %v344 = vld [vmem:[#allocation2 + $0x59c] sm:$0xff]
    %v345 = vld [vmem:[#allocation2 + $0x5a4] sm:$0xff]
    %v346 = vld [vmem:[#allocation2 + $0x5ac] sm:$0xf]
    %v347 = vld [vmem:[#allocation2 + $0x5b0] sm:$0xff]
    %v348 = vld [vmem:[#allocation2 + $0x5b8] sm:$0xff]
    %v349 = vld [vmem:[#allocation2 + $0x5c0] sm:$0xff]
    %v350 = vld [vmem:[#allocation2 + $0x5c8] sm:$0xf]
    %v351 = vld [vmem:[#allocation2 + $0x5cc] sm:$0xff]
    %v352 = vld [vmem:[#allocation2 + $0x5d4] sm:$0xff]
    %v353 = vld [vmem:[#allocation2 + $0x5dc] sm:$0xff]
    %v354 = vld [vmem:[#allocation2 + $0x5e4] sm:$0xf]
    %v355 = vld [vmem:[#allocation2 + $0x5e8] sm:$0xff]
    %v356 = vld [vmem:[#allocation2 + $0x5f0] sm:$0xff]
    %v357 = vld [vmem:[#allocation2 + $0x5f8] sm:$0xff]
    %v358 = vld [vmem:[#allocation2 + $0x600] sm:$0xf]
    %v359 = vld [vmem:[#allocation2 + $0x604] sm:$0xff]
    %v360 = vld [vmem:[#allocation2 + $0x60c] sm:$0xff]
    %v361 = vld [vmem:[#allocation2 + $0x614] sm:$0xff]
    %v362 = vld [vmem:[#allocation2 + $0x61c] sm:$0xf]
    %v363 = vld [vmem:[#allocation2 + $0x620] sm:$0xff]
    %v364 = vld [vmem:[#allocation2 + $0x628] sm:$0xff]
    %v365 = vld [vmem:[#allocation2 + $0x630] sm:$0xff]
    %v366 = vld [vmem:[#allocation2 + $0x638] sm:$0xf]
    %v367 = vld [vmem:[#allocation2 + $0x63c] sm:$0xff]
    %v368 = vld [vmem:[#allocation2 + $0x644] sm:$0xff]
    %v369 = vld [vmem:[#allocation2 + $0x64c] sm:$0xff]
    %v370 = vld [vmem:[#allocation2 + $0x654] sm:$0xf]
    %v371 = vld [vmem:[#allocation2 + $0x658] sm:$0xff]
    %v372 = vld [vmem:[#allocation2 + $0x660] sm:$0xff]
    %v373 = vld [vmem:[#allocation2 + $0x668] sm:$0xff]
    %v374 = vld [vmem:[#allocation2 + $0x670] sm:$0xf]
    %v375 = vld [vmem:[#allocation2 + $0x674] sm:$0xff]
    %v376 = vld [vmem:[#allocation2 + $0x67c] sm:$0xff]
    %v377 = vld [vmem:[#allocation2 + $0x684] sm:$0xff]
    %v378 = vld [vmem:[#allocation2 + $0x68c] sm:$0xf]
    %v379 = vld [vmem:[#allocation2 + $0x690] sm:$0xff]
    %v380 = vld [vmem:[#allocation2 + $0x698] sm:$0xff]
    %v381 = vld [vmem:[#allocation2 + $0x6a0] sm:$0xff]
    %v382 = vld [vmem:[#allocation2 + $0x6a8] sm:$0xf]
    %v383 = vld [vmem:[#allocation2 + $0x6ac] sm:$0xff]
    %v384 = vld [vmem:[#allocation2 + $0x6b4] sm:$0xff]
    %v385 = vld [vmem:[#allocation2 + $0x6bc] sm:$0xff]
    %v386 = vld [vmem:[#allocation2 + $0x6c4] sm:$0xf]
    %v387 = vld [vmem:[#allocation2 + $0x6c8] sm:$0xff]
    %v388 = vld [vmem:[#allocation2 + $0x6d0] sm:$0xff]
    %v389 = vld [vmem:[#allocation2 + $0x6d8] sm:$0xff]
    %v390 = vld [vmem:[#allocation2 + $0x6e0] sm:$0xf]
    %v391 = vld [vmem:[#allocation2 + $0x6e4] sm:$0xff]
    %v392 = vld [vmem:[#allocation2 + $0x6ec] sm:$0xff]
    %v393 = vld [vmem:[#allocation2 + $0x6f4] sm:$0xff]
    %v394 = vld [vmem:[#allocation2 + $0x6fc] sm:$0xf]
    %v395 = vld [vmem:[#allocation2 + $0x700] sm:$0xff]
    %v396 = vld [vmem:[#allocation2 + $0x708] sm:$0xff]
    %v397 = vld [vmem:[#allocation2 + $0x710] sm:$0xff]
    %v398 = vld [vmem:[#allocation2 + $0x718] sm:$0xf]
    %v399 = vld [vmem:[#allocation2 + $0x71c] sm:$0xff]
    %v400 = vld [vmem:[#allocation2 + $0x724] sm:$0xff]
    %v401 = vld [vmem:[#allocation2 + $0x72c] sm:$0xff]
    %v402 = vld [vmem:[#allocation2 + $0x734] sm:$0xf]
    %v403 = vld [vmem:[#allocation2 + $0x738] sm:$0xff]
    %v404 = vld [vmem:[#allocation2 + $0x740] sm:$0xff]
    %v405 = vld [vmem:[#allocation2 + $0x748] sm:$0xff]
    %v406 = vld [vmem:[#allocation2 + $0x750] sm:$0xf]
    %v407 = vld [vmem:[#allocation2 + $0x754] sm:$0xff]
    %v408 = vld [vmem:[#allocation2 + $0x75c] sm:$0xff]
    %v409 = vld [vmem:[#allocation2 + $0x764] sm:$0xff]
    %v410 = vld [vmem:[#allocation2 + $0x76c] sm:$0xf]
    %v411 = vld [vmem:[#allocation2 + $0x770] sm:$0xff]
    %v412 = vld [vmem:[#allocation2 + $0x778] sm:$0xff]
    %v413 = vld [vmem:[#allocation2 + $0x780] sm:$0xff]
    %v414 = vld [vmem:[#allocation2 + $0x788] sm:$0xf]
    %v415 = vld [vmem:[#allocation2 + $0x78c] sm:$0xff]
    %v416 = vld [vmem:[#allocation2 + $0x794] sm:$0xff]
    %v417 = vld [vmem:[#allocation2 + $0x79c] sm:$0xff]
    %v418 = vld [vmem:[#allocation2 + $0x7a4] sm:$0xf]
    %v419 = vld [vmem:[#allocation2 + $0x7a8] sm:$0xff]
    %v420 = vld [vmem:[#allocation2 + $0x7b0] sm:$0xff]
    %v421 = vld [vmem:[#allocation2 + $0x7b8] sm:$0xff]
    %v422 = vld [vmem:[#allocation2 + $0x7c0] sm:$0xf]
    %v423 = vld [vmem:[#allocation2 + $0x7c4] sm:$0xff]
    %v424 = vld [vmem:[#allocation2 + $0x7cc] sm:$0xff]
    %v425 = vld [vmem:[#allocation2 + $0x7d4] sm:$0xff]
    %v426 = vld [vmem:[#allocation2 + $0x7dc] sm:$0xf]
    %v427 = vld [vmem:[#allocation2 + $0x7e0] sm:$0xff]
    %v428 = vld [vmem:[#allocation2 + $0x7e8] sm:$0xff]
    %v429 = vld [vmem:[#allocation2 + $0x7f0] sm:$0xff]
    %v430 = vld [vmem:[#allocation2 + $0x7f8] sm:$0xf]
    %v431 = vld [vmem:[#allocation2 + $0x7fc] sm:$0xff]
    %v432 = vld [vmem:[#allocation2 + $0x804] sm:$0xff]
    %v433 = vld [vmem:[#allocation2 + $0x80c] sm:$0xff]
    %v434 = vld [vmem:[#allocation2 + $0x814] sm:$0xf]
    %v435 = vld [vmem:[#allocation2 + $0x818] sm:$0xff]
    %v436 = vld [vmem:[#allocation2 + $0x820] sm:$0xff]
    %v437 = vld [vmem:[#allocation2 + $0x828] sm:$0xff]
    %v438 = vld [vmem:[#allocation2 + $0x830] sm:$0xf]
    %v439 = vld [vmem:[#allocation2 + $0x834] sm:$0xff]
    %v440 = vld [vmem:[#allocation2 + $0x83c] sm:$0xff]
    %v441 = vld [vmem:[#allocation2 + $0x844] sm:$0xff]
    %v442 = vld [vmem:[#allocation2 + $0x84c] sm:$0xf]
    %v443 = vld [vmem:[#allocation2 + $0x850] sm:$0xff]
    %v444 = vld [vmem:[#allocation2 + $0x858] sm:$0xff]
    %v445 = vld [vmem:[#allocation2 + $0x860] sm:$0xff]
    %v446 = vld [vmem:[#allocation2 + $0x868] sm:$0xf]
    %v447 = vld [vmem:[#allocation2 + $0x86c] sm:$0xff]
    %v448 = vld [vmem:[#allocation2 + $0x874] sm:$0xff]
    %v449 = vld [vmem:[#allocation2 + $0x87c] sm:$0xff]
    %v450 = vld [vmem:[#allocation2 + $0x884] sm:$0xf]
    %v451 = vld [vmem:[#allocation2 + $0x888] sm:$0xff]
    %v452 = vld [vmem:[#allocation2 + $0x890] sm:$0xff]
    %v453 = vld [vmem:[#allocation2 + $0x898] sm:$0xff]
    %v454 = vld [vmem:[#allocation2 + $0x8a0] sm:$0xf]
    %v455 = vld [vmem:[#allocation2 + $0x8a4] sm:$0xff]
    %v456 = vld [vmem:[#allocation2 + $0x8ac] sm:$0xff]
    %v457 = vld [vmem:[#allocation2 + $0x8b4] sm:$0xff]
    %v458 = vld [vmem:[#allocation2 + $0x8bc] sm:$0xf]
    %v459 = vld [vmem:[#allocation2 + $0x8c0] sm:$0xff]
    %v460 = vld [vmem:[#allocation2 + $0x8c8] sm:$0xff]
    %v461 = vld [vmem:[#allocation2 + $0x8d0] sm:$0xff]
    %v462 = vld [vmem:[#allocation2 + $0x8d8] sm:$0xf]
    %v463 = vld [vmem:[#allocation2 + $0x8dc] sm:$0xff]
    %v464 = vld [vmem:[#allocation2 + $0x8e4] sm:$0xff]
    %v465 = vld [vmem:[#allocation2 + $0x8ec] sm:$0xff]
    %v466 = vld [vmem:[#allocation2 + $0x8f4] sm:$0xf]
    %v467 = vld [vmem:[#allocation2 + $0x8f8] sm:$0xff]
    %v468 = vld [vmem:[#allocation2 + $0x900] sm:$0xff]
    %v469 = vld [vmem:[#allocation2 + $0x908] sm:$0xff]
    %v470 = vld [vmem:[#allocation2 + $0x910] sm:$0xf]
    %v471 = vld [vmem:[#allocation2 + $0x914] sm:$0xff]
    %v472 = vld [vmem:[#allocation2 + $0x91c] sm:$0xff]
    %v473 = vld [vmem:[#allocation2 + $0x924] sm:$0xff]
    %v474 = vld [vmem:[#allocation2 + $0x92c] sm:$0xf]
    %v475 = vld [vmem:[#allocation2 + $0x930] sm:$0xff]
    %v476 = vld [vmem:[#allocation2 + $0x938] sm:$0xff]
    %v477 = vld [vmem:[#allocation2 + $0x940] sm:$0xff]
    %v478 = vld [vmem:[#allocation2 + $0x948] sm:$0xf]
    %v479 = vld [vmem:[#allocation2 + $0x94c] sm:$0xff]
    %v480 = vld [vmem:[#allocation2 + $0x954] sm:$0xff]
    %v481 = vld [vmem:[#allocation2 + $0x95c] sm:$0xff]
    %v482 = vld [vmem:[#allocation2 + $0x964] sm:$0xf]
    %v483 = vld [vmem:[#allocation2 + $0x968] sm:$0xff]
    %v484 = vld [vmem:[#allocation2 + $0x970] sm:$0xff]
    %v485 = vld [vmem:[#allocation2 + $0x978] sm:$0xff]
    %v486 = vld [vmem:[#allocation2 + $0x980] sm:$0xf]
    %v487 = vld [vmem:[#allocation2 + $0x984] sm:$0xff]
    %v488 = vld [vmem:[#allocation2 + $0x98c] sm:$0xff]
    %v489 = vld [vmem:[#allocation2 + $0x994] sm:$0xff]
    %v490 = vld [vmem:[#allocation2 + $0x99c] sm:$0xf]
    %v491 = vld [vmem:[#allocation2 + $0x9a0] sm:$0xff]
    %v492 = vld [vmem:[#allocation2 + $0x9a8] sm:$0xff]
    %v493 = vld [vmem:[#allocation2 + $0x9b0] sm:$0xff]
    %v494 = vld [vmem:[#allocation2 + $0x9b8] sm:$0xf]
    %v495 = vld [vmem:[#allocation2 + $0x9bc] sm:$0xff]
    %v496 = vld [vmem:[#allocation2 + $0x9c4] sm:$0xff]
    %v497 = vld [vmem:[#allocation2 + $0x9cc] sm:$0xff]
    %v498 = vld [vmem:[#allocation2 + $0x9d4] sm:$0xf]
    %v499 = vld [vmem:[#allocation2 + $0x9d8] sm:$0xff]
    %v500 = vld [vmem:[#allocation2 + $0x9e0] sm:$0xff]
    %v501 = vld [vmem:[#allocation2 + $0x9e8] sm:$0xff]
    %v502 = vld [vmem:[#allocation2 + $0x9f0] sm:$0xf]
    %v503 = vld [vmem:[#allocation2 + $0x9f4] sm:$0xff]
    %v504 = vld [vmem:[#allocation2 + $0x9fc] sm:$0xff]
    %v505 = vld [vmem:[#allocation2 + $0xa04] sm:$0xff]
    %v506 = vld [vmem:[#allocation2 + $0xa0c] sm:$0xf]
    %v507 = vld [vmem:[#allocation2 + $0xa10] sm:$0xff]
    %v508 = vld [vmem:[#allocation2 + $0xa18] sm:$0xff]
    %v509 = vld [vmem:[#allocation2 + $0xa20] sm:$0xff]
    %v510 = vld [vmem:[#allocation2 + $0xa28] sm:$0xf]
    %v511 = vld [vmem:[#allocation2 + $0xa2c] sm:$0xff]
    %v512 = vld [vmem:[#allocation2 + $0xa34] sm:$0xff]
    %v513 = vld [vmem:[#allocation2 + $0xa3c] sm:$0xff]
    %v514 = vld [vmem:[#allocation2 + $0xa44] sm:$0xf]
    %v515 = vld [vmem:[#allocation2 + $0xa48] sm:$0xff]
    %v516 = vld [vmem:[#allocation2 + $0xa50] sm:$0xff]
    %v517 = vld [vmem:[#allocation2 + $0xa58] sm:$0xff]
    %v518 = vld [vmem:[#allocation2 + $0xa60] sm:$0xf]
    %v519 = vld [vmem:[#allocation2 + $0xa64] sm:$0xff]
    %v520 = vld [vmem:[#allocation2 + $0xa6c] sm:$0xff]
    %v521 = vld [vmem:[#allocation2 + $0xa74] sm:$0xff]
    %v522 = vld [vmem:[#allocation2 + $0xa7c] sm:$0xf]
    %v523 = vld [vmem:[#allocation2 + $0xa80] sm:$0xff]
    %v524 = vld [vmem:[#allocation2 + $0xa88] sm:$0xff]
    %v525 = vld [vmem:[#allocation2 + $0xa90] sm:$0xff]
    %v526 = vld [vmem:[#allocation2 + $0xa98] sm:$0xf]
    %v527 = vld [vmem:[#allocation2 + $0xa9c] sm:$0xff]
    %v528 = vld [vmem:[#allocation2 + $0xaa4] sm:$0xff]
    %v529 = vld [vmem:[#allocation2 + $0xaac] sm:$0xff]
    %v530 = vld [vmem:[#allocation2 + $0xab4] sm:$0xf]
    %v531 = vld [vmem:[#allocation2 + $0xab8] sm:$0xff]
    %v532 = vld [vmem:[#allocation2 + $0xac0] sm:$0xff]
    %v533 = vld [vmem:[#allocation2 + $0xac8] sm:$0xff]
    %v534 = vld [vmem:[#allocation2 + $0xad0] sm:$0xf]
    %v535 = vld [vmem:[#allocation2 + $0xad4] sm:$0xff]
    %v536 = vld [vmem:[#allocation2 + $0xadc] sm:$0xff]
    %v537 = vld [vmem:[#allocation2 + $0xae4] sm:$0xff]
    %v538 = vld [vmem:[#allocation2 + $0xaec] sm:$0xf]
    %v539 = vld [vmem:[#allocation2 + $0xaf0] sm:$0xff]
    %v540 = vld [vmem:[#allocation2 + $0xaf8] sm:$0xff]
    %v541 = vld [vmem:[#allocation2 + $0xb00] sm:$0xff]
    %v542 = vld [vmem:[#allocation2 + $0xb08] sm:$0xf]
    %v543 = vld [vmem:[#allocation2 + $0xb0c] sm:$0xff]
    %v544 = vld [vmem:[#allocation2 + $0xb14] sm:$0xff]
    %v545 = vld [vmem:[#allocation2 + $0xb1c] sm:$0xff]
    %v546 = vld [vmem:[#allocation2 + $0xb24] sm:$0xf]
    %v547 = vld [vmem:[#allocation2 + $0xb28] sm:$0xff]
    %v548 = vld [vmem:[#allocation2 + $0xb30] sm:$0xff]
    %v549 = vld [vmem:[#allocation2 + $0xb38] sm:$0xff]
    %v550 = vld [vmem:[#allocation2 + $0xb40] sm:$0xf]
    %v551 = vld [vmem:[#allocation2 + $0xb44] sm:$0xff]
    %v552 = vld [vmem:[#allocation2 + $0xb4c] sm:$0xff]
    %v553 = vld [vmem:[#allocation2 + $0xb54] sm:$0xff]
    %v554 = vld [vmem:[#allocation2 + $0xb5c] sm:$0xf]
    %v555 = vld [vmem:[#allocation2 + $0xb60] sm:$0xff]
    %v556 = vld [vmem:[#allocation2 + $0xb68] sm:$0xff]
    %v557 = vld [vmem:[#allocation2 + $0xb70] sm:$0xff]
    %v558 = vld [vmem:[#allocation2 + $0xb78] sm:$0xf]
    %v559 = vld [vmem:[#allocation2 + $0xb7c] sm:$0xff]
    %v560 = vld [vmem:[#allocation2 + $0xb84] sm:$0xff]
    %v561 = vld [vmem:[#allocation2 + $0xb8c] sm:$0xff]
    %v562 = vld [vmem:[#allocation2 + $0xb94] sm:$0xf]
    %v563 = vld [vmem:[#allocation2 + $0xb98] sm:$0xff]
    %v564 = vld [vmem:[#allocation2 + $0xba0] sm:$0xff]
    %v565 = vld [vmem:[#allocation2 + $0xba8] sm:$0xff]
    %v566 = vld [vmem:[#allocation2 + $0xbb0] sm:$0xf]
    %v567 = vld [vmem:[#allocation2 + $0xbb4] sm:$0xff]
    %v568 = vld [vmem:[#allocation2 + $0xbbc] sm:$0xff]
    %v569 = vld [vmem:[#allocation2 + $0xbc4] sm:$0xff]
    %v570 = vld [vmem:[#allocation2 + $0xbcc] sm:$0xf]
    %v571 = vld [vmem:[#allocation2 + $0xbd0] sm:$0xff]
    %v572 = vld [vmem:[#allocation2 + $0xbd8] sm:$0xff]
    %v573 = vld [vmem:[#allocation2 + $0xbe0] sm:$0xff]
    %v574 = vld [vmem:[#allocation2 + $0xbe8] sm:$0xf]
    %v575 = vld [vmem:[#allocation2 + $0xbec] sm:$0xff]
    %v576 = vld [vmem:[#allocation2 + $0xbf4] sm:$0xff]
    %v577 = vld [vmem:[#allocation2 + $0xbfc] sm:$0xff]
    %v578 = vld [vmem:[#allocation2 + $0xc04] sm:$0xf]
    %v579 = vld [vmem:[#allocation2 + $0xc08] sm:$0xff]
    %v580 = vld [vmem:[#allocation2 + $0xc10] sm:$0xff]
    %v581 = vld [vmem:[#allocation2 + $0xc18] sm:$0xff]
    %v582 = vld [vmem:[#allocation2 + $0xc20] sm:$0xf]
    %v583 = vld [vmem:[#allocation2 + $0xc24] sm:$0xff]
    %v584 = vld [vmem:[#allocation2 + $0xc2c] sm:$0xff]
    %v585 = vld [vmem:[#allocation2 + $0xc34] sm:$0xff]
    %v586 = vld [vmem:[#allocation2 + $0xc3c] sm:$0xf]
    %v587 = vld [vmem:[#allocation4] sm:$0xff]
    %v589 = vperm.slane %v587, 0
    %v590 = vperm.slane %v587, 1
    %v591 = vperm.slane %v587, 2
    %v592 = vperm.slane %v587, 3
    %v593 = vperm.slane %v587, 4
    %v594 = vperm.slane %v587, 5
    %v595 = vperm.slane %v587, 6
    %v607 = vunpack.c.l.b16 %v135
    %v608 = vunpack.c.h.b16 %v135
    %v609 = vunpack.c.l.b16 %v136
    %v610 = vunpack.c.h.b16 %v136
    %v611 = vunpack.c.l.b16 %v137
    %v612 = vunpack.c.h.b16 %v137
    %v613 = vunpack.c.l.b16 %v138
    %v614 = vpack.c.b16 %v607, %v607
    %v615 = vpack.c.b16 %v608, %v608
    %v616 = vpack.c.b16 %v609, %v609
    %v617 = vpack.c.b16 %v610, %v610
    %v618 = vpack.c.b16 %v611, %v611
    %v619 = vpack.c.b16 %v612, %v612
    %v620 = vpack.c.b16 %v613, %v613
    %v1076 = vunpack.c.l.b16 %v139
    %v1077 = vunpack.c.h.b16 %v139
    %v1078 = vunpack.c.l.b16 %v140
    %v1079 = vunpack.c.h.b16 %v140
    %v1080 = vunpack.c.l.b16 %v141
    %v1081 = vunpack.c.h.b16 %v141
    %v1082 = vunpack.c.l.b16 %v142
    %v1083 = vunpack.c.l.b16 %v143
    %v1084 = vunpack.c.h.b16 %v143
    %v1085 = vunpack.c.l.b16 %v144
    %v1086 = vunpack.c.h.b16 %v144
    %v1087 = vunpack.c.l.b16 %v145
    %v1088 = vunpack.c.h.b16 %v145
    %v1089 = vunpack.c.l.b16 %v146
    %v1090 = vunpack.c.l.b16 %v147
    %v1091 = vunpack.c.h.b16 %v147
    %v1092 = vunpack.c.l.b16 %v148
    %v1093 = vunpack.c.h.b16 %v148
    %v1094 = vunpack.c.l.b16 %v149
    %v1095 = vunpack.c.h.b16 %v149
    %v1096 = vunpack.c.l.b16 %v150
    %v1097 = vunpack.c.l.b16 %v151
    %v1098 = vunpack.c.h.b16 %v151
    %v1099 = vunpack.c.l.b16 %v152
    %v1100 = vunpack.c.h.b16 %v152
    %v1101 = vunpack.c.l.b16 %v153
    %v1102 = vunpack.c.h.b16 %v153
    %v1103 = vunpack.c.l.b16 %v154
    %v1104 = vunpack.c.l.b16 %v155
    %v1105 = vunpack.c.h.b16 %v155
    %v1106 = vunpack.c.l.b16 %v156
    %v1107 = vunpack.c.h.b16 %v156
    %v1108 = vunpack.c.l.b16 %v157
    %v1109 = vunpack.c.h.b16 %v157
    %v1110 = vunpack.c.l.b16 %v158
    %v1111 = vunpack.c.l.b16 %v159
    %v1112 = vunpack.c.h.b16 %v159
    %v1113 = vunpack.c.l.b16 %v160
    %v1114 = vunpack.c.h.b16 %v160
    %v1115 = vunpack.c.l.b16 %v161
    %v1116 = vunpack.c.h.b16 %v161
    %v1117 = vunpack.c.l.b16 %v162
    %v1118 = vunpack.c.l.b16 %v163
    %v1119 = vunpack.c.h.b16 %v163
    %v1120 = vunpack.c.l.b16 %v164
    %v1121 = vunpack.c.h.b16 %v164
    %v1122 = vunpack.c.l.b16 %v165
    %v1123 = vunpack.c.h.b16 %v165
    %v1124 = vunpack.c.l.b16 %v166
    %v1125 = vunpack.c.l.b16 %v167
    %v1126 = vunpack.c.h.b16 %v167
    %v1127 = vunpack.c.l.b16 %v168
    %v1128 = vunpack.c.h.b16 %v168
    %v1129 = vunpack.c.l.b16 %v169
    %v1130 = vunpack.c.h.b16 %v169
    %v1131 = vunpack.c.l.b16 %v170
    %v1132 = vunpack.c.l.b16 %v171
    %v1133 = vunpack.c.h.b16 %v171
    %v1134 = vunpack.c.l.b16 %v172
    %v1135 = vunpack.c.h.b16 %v172
    %v1136 = vunpack.c.l.b16 %v173
    %v1137 = vunpack.c.h.b16 %v173
    %v1138 = vunpack.c.l.b16 %v174
    %v1139 = vunpack.c.l.b16 %v175
    %v1140 = vunpack.c.h.b16 %v175
    %v1141 = vunpack.c.l.b16 %v176
    %v1142 = vunpack.c.h.b16 %v176
    %v1143 = vunpack.c.l.b16 %v177
    %v1144 = vunpack.c.h.b16 %v177
    %v1145 = vunpack.c.l.b16 %v178
    %v1146 = vunpack.c.l.b16 %v179
    %v1147 = vunpack.c.h.b16 %v179
    %v1148 = vunpack.c.l.b16 %v180
    %v1149 = vunpack.c.h.b16 %v180
    %v1150 = vunpack.c.l.b16 %v181
    %v1151 = vunpack.c.h.b16 %v181
    %v1152 = vunpack.c.l.b16 %v182
    %v1153 = vunpack.c.l.b16 %v183
    %v1154 = vunpack.c.h.b16 %v183
    %v1155 = vunpack.c.l.b16 %v184
    %v1156 = vunpack.c.h.b16 %v184
    %v1157 = vunpack.c.l.b16 %v185
    %v1158 = vunpack.c.h.b16 %v185
    %v1159 = vunpack.c.l.b16 %v186
    %v1160 = vunpack.c.l.b16 %v187
    %v1161 = vunpack.c.h.b16 %v187
    %v1162 = vunpack.c.l.b16 %v188
    %v1163 = vunpack.c.h.b16 %v188
    %v1164 = vunpack.c.l.b16 %v189
    %v1165 = vunpack.c.h.b16 %v189
    %v1166 = vunpack.c.l.b16 %v190
    %v1167 = vunpack.c.l.b16 %v191
    %v1168 = vunpack.c.h.b16 %v191
    %v1169 = vunpack.c.l.b16 %v192
    %v1170 = vunpack.c.h.b16 %v192
    %v1171 = vunpack.c.l.b16 %v193
    %v1172 = vunpack.c.h.b16 %v193
    %v1173 = vunpack.c.l.b16 %v194
    %v1174 = vunpack.c.l.b16 %v195
    %v1175 = vunpack.c.h.b16 %v195
    %v1176 = vunpack.c.l.b16 %v196
    %v1177 = vunpack.c.h.b16 %v196
    %v1178 = vunpack.c.l.b16 %v197
    %v1179 = vunpack.c.h.b16 %v197
    %v1180 = vunpack.c.l.b16 %v198
    %v1181 = vunpack.c.l.b16 %v199
    %v1182 = vunpack.c.h.b16 %v199
    %v1183 = vunpack.c.l.b16 %v200
    %v1184 = vunpack.c.h.b16 %v200
    %v1185 = vunpack.c.l.b16 %v201
    %v1186 = vunpack.c.h.b16 %v201
    %v1187 = vunpack.c.l.b16 %v202
    %v1188 = vunpack.c.l.b16 %v203
    %v1189 = vunpack.c.h.b16 %v203
    %v1190 = vunpack.c.l.b16 %v204
    %v1191 = vunpack.c.h.b16 %v204
    %v1192 = vunpack.c.l.b16 %v205
    %v1193 = vunpack.c.h.b16 %v205
    %v1194 = vunpack.c.l.b16 %v206
    %v1195 = vunpack.c.l.b16 %v207
    %v1196 = vunpack.c.h.b16 %v207
    %v1197 = vunpack.c.l.b16 %v208
    %v1198 = vunpack.c.h.b16 %v208
    %v1199 = vunpack.c.l.b16 %v209
    %v1200 = vunpack.c.h.b16 %v209
    %v1201 = vunpack.c.l.b16 %v210
    %v1202 = vunpack.c.l.b16 %v211
    %v1203 = vunpack.c.h.b16 %v211
    %v1204 = vunpack.c.l.b16 %v212
    %v1205 = vunpack.c.h.b16 %v212
    %v1206 = vunpack.c.l.b16 %v213
    %v1207 = vunpack.c.h.b16 %v213
    %v1208 = vunpack.c.l.b16 %v214
    %v1209 = vunpack.c.l.b16 %v215
    %v1210 = vunpack.c.h.b16 %v215
    %v1211 = vunpack.c.l.b16 %v216
    %v1212 = vunpack.c.h.b16 %v216
    %v1213 = vunpack.c.l.b16 %v217
    %v1214 = vunpack.c.h.b16 %v217
    %v1215 = vunpack.c.l.b16 %v218
    %v1216 = vunpack.c.l.b16 %v219
    %v1217 = vunpack.c.h.b16 %v219
    %v1218 = vunpack.c.l.b16 %v220
    %v1219 = vunpack.c.h.b16 %v220
    %v1220 = vunpack.c.l.b16 %v221
    %v1221 = vunpack.c.h.b16 %v221
    %v1222 = vunpack.c.l.b16 %v222
    %v1223 = vunpack.c.l.b16 %v223
    %v1224 = vunpack.c.h.b16 %v223
    %v1225 = vunpack.c.l.b16 %v224
    %v1226 = vunpack.c.h.b16 %v224
    %v1227 = vunpack.c.l.b16 %v225
    %v1228 = vunpack.c.h.b16 %v225
    %v1229 = vunpack.c.l.b16 %v226
    %v1230 = vunpack.c.l.b16 %v227
    %v1231 = vunpack.c.h.b16 %v227
    %v1232 = vunpack.c.l.b16 %v228
    %v1233 = vunpack.c.h.b16 %v228
    %v1234 = vunpack.c.l.b16 %v229
    %v1235 = vunpack.c.h.b16 %v229
    %v1236 = vunpack.c.l.b16 %v230
    %v1237 = vunpack.c.l.b16 %v231
    %v1238 = vunpack.c.h.b16 %v231
    %v1239 = vunpack.c.l.b16 %v232
    %v1240 = vunpack.c.h.b16 %v232
    %v1241 = vunpack.c.l.b16 %v233
    %v1242 = vunpack.c.h.b16 %v233
    %v1243 = vunpack.c.l.b16 %v234
    %v1244 = vunpack.c.l.b16 %v235
    %v1245 = vunpack.c.h.b16 %v235
    %v1246 = vunpack.c.l.b16 %v236
    %v1247 = vunpack.c.h.b16 %v236
    %v1248 = vunpack.c.l.b16 %v237
    %v1249 = vunpack.c.h.b16 %v237
    %v1250 = vunpack.c.l.b16 %v238
    %v1251 = vunpack.c.l.b16 %v239
    %v1252 = vunpack.c.h.b16 %v239
    %v1253 = vunpack.c.l.b16 %v240
    %v1254 = vunpack.c.h.b16 %v240
    %v1255 = vunpack.c.l.b16 %v241
    %v1256 = vunpack.c.h.b16 %v241
    %v1257 = vunpack.c.l.b16 %v242
    %v1258 = vunpack.c.l.b16 %v243
    %v1259 = vunpack.c.h.b16 %v243
    %v1260 = vunpack.c.l.b16 %v244
    %v1261 = vunpack.c.h.b16 %v244
    %v1262 = vunpack.c.l.b16 %v245
    %v1263 = vunpack.c.h.b16 %v245
    %v1264 = vunpack.c.l.b16 %v246
    %v1265 = vunpack.c.l.b16 %v247
    %v1266 = vunpack.c.h.b16 %v247
    %v1267 = vunpack.c.l.b16 %v248
    %v1268 = vunpack.c.h.b16 %v248
    %v1269 = vunpack.c.l.b16 %v249
    %v1270 = vunpack.c.h.b16 %v249
    %v1271 = vunpack.c.l.b16 %v250
    %v1272 = vunpack.c.l.b16 %v251
    %v1273 = vunpack.c.h.b16 %v251
    %v1274 = vunpack.c.l.b16 %v252
    %v1275 = vunpack.c.h.b16 %v252
    %v1276 = vunpack.c.l.b16 %v253
    %v1277 = vunpack.c.h.b16 %v253
    %v1278 = vunpack.c.l.b16 %v254
    %v1279 = vunpack.c.l.b16 %v255
    %v1280 = vunpack.c.h.b16 %v255
    %v1281 = vunpack.c.l.b16 %v256
    %v1282 = vunpack.c.h.b16 %v256
    %v1283 = vunpack.c.l.b16 %v257
    %v1284 = vunpack.c.h.b16 %v257
    %v1285 = vunpack.c.l.b16 %v258
    %v1286 = vunpack.c.l.b16 %v259
    %v1287 = vunpack.c.h.b16 %v259
    %v1288 = vunpack.c.l.b16 %v260
    %v1289 = vunpack.c.h.b16 %v260
    %v1290 = vunpack.c.l.b16 %v261
    %v1291 = vunpack.c.h.b16 %v261
    %v1292 = vunpack.c.l.b16 %v262
    %v1293 = vunpack.c.l.b16 %v263
    %v1294 = vunpack.c.h.b16 %v263
    %v1295 = vunpack.c.l.b16 %v264
    %v1296 = vunpack.c.h.b16 %v264
    %v1297 = vunpack.c.l.b16 %v265
    %v1298 = vunpack.c.h.b16 %v265
    %v1299 = vunpack.c.l.b16 %v266
    %v1300 = vunpack.c.l.b16 %v267
    %v1301 = vunpack.c.h.b16 %v267
    %v1302 = vunpack.c.l.b16 %v268
    %v1303 = vunpack.c.h.b16 %v268
    %v1304 = vunpack.c.l.b16 %v269
    %v1305 = vunpack.c.h.b16 %v269
    %v1306 = vunpack.c.l.b16 %v270
    %v1307 = vunpack.c.l.b16 %v271
    %v1308 = vunpack.c.h.b16 %v271
    %v1309 = vunpack.c.l.b16 %v272
    %v1310 = vunpack.c.h.b16 %v272
    %v1311 = vunpack.c.l.b16 %v273
    %v1312 = vunpack.c.h.b16 %v273
    %v1313 = vunpack.c.l.b16 %v274
    %v1314 = vunpack.c.l.b16 %v275
    %v1315 = vunpack.c.h.b16 %v275
    %v1316 = vunpack.c.l.b16 %v276
    %v1317 = vunpack.c.h.b16 %v276
    %v1318 = vunpack.c.l.b16 %v277
    %v1319 = vunpack.c.h.b16 %v277
    %v1320 = vunpack.c.l.b16 %v278
    %v1321 = vunpack.c.l.b16 %v279
    %v1322 = vunpack.c.h.b16 %v279
    %v1323 = vunpack.c.l.b16 %v280
    %v1324 = vunpack.c.h.b16 %v280
    %v1325 = vunpack.c.l.b16 %v281
    %v1326 = vunpack.c.h.b16 %v281
    %v1327 = vunpack.c.l.b16 %v282
    %v1328 = vunpack.c.l.b16 %v283
    %v1329 = vunpack.c.h.b16 %v283
    %v1330 = vunpack.c.l.b16 %v284
    %v1331 = vunpack.c.h.b16 %v284
    %v1332 = vunpack.c.l.b16 %v285
    %v1333 = vunpack.c.h.b16 %v285
    %v1334 = vunpack.c.l.b16 %v286
    %v1335 = vunpack.c.l.b16 %v287
    %v1336 = vunpack.c.h.b16 %v287
    %v1337 = vunpack.c.l.b16 %v288
    %v1338 = vunpack.c.h.b16 %v288
    %v1339 = vunpack.c.l.b16 %v289
    %v1340 = vunpack.c.h.b16 %v289
    %v1341 = vunpack.c.l.b16 %v290
    %v1342 = vunpack.c.l.b16 %v291
    %v1343 = vunpack.c.h.b16 %v291
    %v1344 = vunpack.c.l.b16 %v292
    %v1345 = vunpack.c.h.b16 %v292
    %v1346 = vunpack.c.l.b16 %v293
    %v1347 = vunpack.c.h.b16 %v293
    %v1348 = vunpack.c.l.b16 %v294
    %v1349 = vunpack.c.l.b16 %v295
    %v1350 = vunpack.c.h.b16 %v295
    %v1351 = vunpack.c.l.b16 %v296
    %v1352 = vunpack.c.h.b16 %v296
    %v1353 = vunpack.c.l.b16 %v297
    %v1354 = vunpack.c.h.b16 %v297
    %v1355 = vunpack.c.l.b16 %v298
    %v1356 = vunpack.c.l.b16 %v299
    %v1357 = vunpack.c.h.b16 %v299
    %v1358 = vunpack.c.l.b16 %v300
    %v1359 = vunpack.c.h.b16 %v300
    %v1360 = vunpack.c.l.b16 %v301
    %v1361 = vunpack.c.h.b16 %v301
    %v1362 = vunpack.c.l.b16 %v302
    %v1363 = vunpack.c.l.b16 %v303
    %v1364 = vunpack.c.h.b16 %v303
    %v1365 = vunpack.c.l.b16 %v304
    %v1366 = vunpack.c.h.b16 %v304
    %v1367 = vunpack.c.l.b16 %v305
    %v1368 = vunpack.c.h.b16 %v305
    %v1369 = vunpack.c.l.b16 %v306
    %v1370 = vunpack.c.l.b16 %v307
    %v1371 = vunpack.c.h.b16 %v307
    %v1372 = vunpack.c.l.b16 %v308
    %v1373 = vunpack.c.h.b16 %v308
    %v1374 = vunpack.c.l.b16 %v309
    %v1375 = vunpack.c.h.b16 %v309
    %v1376 = vunpack.c.l.b16 %v310
    %v1377 = vunpack.c.l.b16 %v311
    %v1378 = vunpack.c.h.b16 %v311
    %v1379 = vunpack.c.l.b16 %v312
    %v1380 = vunpack.c.h.b16 %v312
    %v1381 = vunpack.c.l.b16 %v313
    %v1382 = vunpack.c.h.b16 %v313
    %v1383 = vunpack.c.l.b16 %v314
    %v1384 = vunpack.c.l.b16 %v315
    %v1385 = vunpack.c.h.b16 %v315
    %v1386 = vunpack.c.l.b16 %v316
    %v1387 = vunpack.c.h.b16 %v316
    %v1388 = vunpack.c.l.b16 %v317
    %v1389 = vunpack.c.h.b16 %v317
    %v1390 = vunpack.c.l.b16 %v318
    %v1391 = vunpack.c.l.b16 %v319
    %v1392 = vunpack.c.h.b16 %v319
    %v1393 = vunpack.c.l.b16 %v320
    %v1394 = vunpack.c.h.b16 %v320
    %v1395 = vunpack.c.l.b16 %v321
    %v1396 = vunpack.c.h.b16 %v321
    %v1397 = vunpack.c.l.b16 %v322
    %v1398 = vunpack.c.l.b16 %v323
    %v1399 = vunpack.c.h.b16 %v323
    %v1400 = vunpack.c.l.b16 %v324
    %v1401 = vunpack.c.h.b16 %v324
    %v1402 = vunpack.c.l.b16 %v325
    %v1403 = vunpack.c.h.b16 %v325
    %v1404 = vunpack.c.l.b16 %v326
    %v1405 = vunpack.c.l.b16 %v327
    %v1406 = vunpack.c.h.b16 %v327
    %v1407 = vunpack.c.l.b16 %v328
    %v1408 = vunpack.c.h.b16 %v328
    %v1409 = vunpack.c.l.b16 %v329
    %v1410 = vunpack.c.h.b16 %v329
    %v1411 = vunpack.c.l.b16 %v330
    %v1412 = vunpack.c.l.b16 %v331
    %v1413 = vunpack.c.h.b16 %v331
    %v1414 = vunpack.c.l.b16 %v332
    %v1415 = vunpack.c.h.b16 %v332
    %v1416 = vunpack.c.l.b16 %v333
    %v1417 = vunpack.c.h.b16 %v333
    %v1418 = vunpack.c.l.b16 %v334
    %v1419 = vunpack.c.l.b16 %v335
    %v1420 = vunpack.c.h.b16 %v335
    %v1421 = vunpack.c.l.b16 %v336
    %v1422 = vunpack.c.h.b16 %v336
    %v1423 = vunpack.c.l.b16 %v337
    %v1424 = vunpack.c.h.b16 %v337
    %v1425 = vunpack.c.l.b16 %v338
    %v1426 = vunpack.c.l.b16 %v339
    %v1427 = vunpack.c.h.b16 %v339
    %v1428 = vunpack.c.l.b16 %v340
    %v1429 = vunpack.c.h.b16 %v340
    %v1430 = vunpack.c.l.b16 %v341
    %v1431 = vunpack.c.h.b16 %v341
    %v1432 = vunpack.c.l.b16 %v342
    %v1433 = vunpack.c.l.b16 %v343
    %v1434 = vunpack.c.h.b16 %v343
    %v1435 = vunpack.c.l.b16 %v344
    %v1436 = vunpack.c.h.b16 %v344
    %v1437 = vunpack.c.l.b16 %v345
    %v1438 = vunpack.c.h.b16 %v345
    %v1439 = vunpack.c.l.b16 %v346
    %v1440 = vunpack.c.l.b16 %v347
    %v1441 = vunpack.c.h.b16 %v347
    %v1442 = vunpack.c.l.b16 %v348
    %v1443 = vunpack.c.h.b16 %v348
    %v1444 = vunpack.c.l.b16 %v349
    %v1445 = vunpack.c.h.b16 %v349
    %v1446 = vunpack.c.l.b16 %v350
    %v1447 = vunpack.c.l.b16 %v351
    %v1448 = vunpack.c.h.b16 %v351
    %v1449 = vunpack.c.l.b16 %v352
    %v1450 = vunpack.c.h.b16 %v352
    %v1451 = vunpack.c.l.b16 %v353
    %v1452 = vunpack.c.h.b16 %v353
    %v1453 = vunpack.c.l.b16 %v354
    %v1454 = vunpack.c.l.b16 %v355
    %v1455 = vunpack.c.h.b16 %v355
    %v1456 = vunpack.c.l.b16 %v356
    %v1457 = vunpack.c.h.b16 %v356
    %v1458 = vunpack.c.l.b16 %v357
    %v1459 = vunpack.c.h.b16 %v357
    %v1460 = vunpack.c.l.b16 %v358
    %v1461 = vunpack.c.l.b16 %v359
    %v1462 = vunpack.c.h.b16 %v359
    %v1463 = vunpack.c.l.b16 %v360
    %v1464 = vunpack.c.h.b16 %v360
    %v1465 = vunpack.c.l.b16 %v361
    %v1466 = vunpack.c.h.b16 %v361
    %v1467 = vunpack.c.l.b16 %v362
    %v1468 = vunpack.c.l.b16 %v363
    %v1469 = vunpack.c.h.b16 %v363
    %v1470 = vunpack.c.l.b16 %v364
    %v1471 = vunpack.c.h.b16 %v364
    %v1472 = vunpack.c.l.b16 %v365
    %v1473 = vunpack.c.h.b16 %v365
    %v1474 = vunpack.c.l.b16 %v366
    %v1475 = vunpack.c.l.b16 %v367
    %v1476 = vunpack.c.h.b16 %v367
    %v1477 = vunpack.c.l.b16 %v368
    %v1478 = vunpack.c.h.b16 %v368
    %v1479 = vunpack.c.l.b16 %v369
    %v1480 = vunpack.c.h.b16 %v369
    %v1481 = vunpack.c.l.b16 %v370
    %v1482 = vunpack.c.l.b16 %v371
    %v1483 = vunpack.c.h.b16 %v371
    %v1484 = vunpack.c.l.b16 %v372
    %v1485 = vunpack.c.h.b16 %v372
    %v1486 = vunpack.c.l.b16 %v373
    %v1487 = vunpack.c.h.b16 %v373
    %v1488 = vunpack.c.l.b16 %v374
    %v1489 = vunpack.c.l.b16 %v375
    %v1490 = vunpack.c.h.b16 %v375
    %v1491 = vunpack.c.l.b16 %v376
    %v1492 = vunpack.c.h.b16 %v376
    %v1493 = vunpack.c.l.b16 %v377
    %v1494 = vunpack.c.h.b16 %v377
    %v1495 = vunpack.c.l.b16 %v378
    %v1496 = vunpack.c.l.b16 %v379
    %v1497 = vunpack.c.h.b16 %v379
    %v1498 = vunpack.c.l.b16 %v380
    %v1499 = vunpack.c.h.b16 %v380
    %v1500 = vunpack.c.l.b16 %v381
    %v1501 = vunpack.c.h.b16 %v381
    %v1502 = vunpack.c.l.b16 %v382
    %v1503 = vunpack.c.l.b16 %v383
    %v1504 = vunpack.c.h.b16 %v383
    %v1505 = vunpack.c.l.b16 %v384
    %v1506 = vunpack.c.h.b16 %v384
    %v1507 = vunpack.c.l.b16 %v385
    %v1508 = vunpack.c.h.b16 %v385
    %v1509 = vunpack.c.l.b16 %v386
    %v1510 = vunpack.c.l.b16 %v387
    %v1511 = vunpack.c.h.b16 %v387
    %v1512 = vunpack.c.l.b16 %v388
    %v1513 = vunpack.c.h.b16 %v388
    %v1514 = vunpack.c.l.b16 %v389
    %v1515 = vunpack.c.h.b16 %v389
    %v1516 = vunpack.c.l.b16 %v390
    %v1517 = vunpack.c.l.b16 %v391
    %v1518 = vunpack.c.h.b16 %v391
    %v1519 = vunpack.c.l.b16 %v392
    %v1520 = vunpack.c.h.b16 %v392
    %v1521 = vunpack.c.l.b16 %v393
    %v1522 = vunpack.c.h.b16 %v393
    %v1523 = vunpack.c.l.b16 %v394
    %v1524 = vunpack.c.l.b16 %v395
    %v1525 = vunpack.c.h.b16 %v395
    %v1526 = vunpack.c.l.b16 %v396
    %v1527 = vunpack.c.h.b16 %v396
    %v1528 = vunpack.c.l.b16 %v397
    %v1529 = vunpack.c.h.b16 %v397
    %v1530 = vunpack.c.l.b16 %v398
    %v1531 = vunpack.c.l.b16 %v399
    %v1532 = vunpack.c.h.b16 %v399
    %v1533 = vunpack.c.l.b16 %v400
    %v1534 = vunpack.c.h.b16 %v400
    %v1535 = vunpack.c.l.b16 %v401
    %v1536 = vunpack.c.h.b16 %v401
    %v1537 = vunpack.c.l.b16 %v402
    %v1538 = vunpack.c.l.b16 %v403
    %v1539 = vunpack.c.h.b16 %v403
    %v1540 = vunpack.c.l.b16 %v404
    %v1541 = vunpack.c.h.b16 %v404
    %v1542 = vunpack.c.l.b16 %v405
    %v1543 = vunpack.c.h.b16 %v405
    %v1544 = vunpack.c.l.b16 %v406
    %v1545 = vunpack.c.l.b16 %v407
    %v1546 = vunpack.c.h.b16 %v407
    %v1547 = vunpack.c.l.b16 %v408
    %v1548 = vunpack.c.h.b16 %v408
    %v1549 = vunpack.c.l.b16 %v409
    %v1550 = vunpack.c.h.b16 %v409
    %v1551 = vunpack.c.l.b16 %v410
    %v1552 = vunpack.c.l.b16 %v411
    %v1553 = vunpack.c.h.b16 %v411
    %v1554 = vunpack.c.l.b16 %v412
    %v1555 = vunpack.c.h.b16 %v412
    %v1556 = vunpack.c.l.b16 %v413
    %v1557 = vunpack.c.h.b16 %v413
    %v1558 = vunpack.c.l.b16 %v414
    %v1559 = vunpack.c.l.b16 %v415
    %v1560 = vunpack.c.h.b16 %v415
    %v1561 = vunpack.c.l.b16 %v416
    %v1562 = vunpack.c.h.b16 %v416
    %v1563 = vunpack.c.l.b16 %v417
    %v1564 = vunpack.c.h.b16 %v417
    %v1565 = vunpack.c.l.b16 %v418
    %v1566 = vunpack.c.l.b16 %v419
    %v1567 = vunpack.c.h.b16 %v419
    %v1568 = vunpack.c.l.b16 %v420
    %v1569 = vunpack.c.h.b16 %v420
    %v1570 = vunpack.c.l.b16 %v421
    %v1571 = vunpack.c.h.b16 %v421
    %v1572 = vunpack.c.l.b16 %v422
    %v1573 = vunpack.c.l.b16 %v423
    %v1574 = vunpack.c.h.b16 %v423
    %v1575 = vunpack.c.l.b16 %v424
    %v1576 = vunpack.c.h.b16 %v424
    %v1577 = vunpack.c.l.b16 %v425
    %v1578 = vunpack.c.h.b16 %v425
    %v1579 = vunpack.c.l.b16 %v426
    %v1580 = vunpack.c.l.b16 %v427
    %v1581 = vunpack.c.h.b16 %v427
    %v1582 = vunpack.c.l.b16 %v428
    %v1583 = vunpack.c.h.b16 %v428
    %v1584 = vunpack.c.l.b16 %v429
    %v1585 = vunpack.c.h.b16 %v429
    %v1586 = vunpack.c.l.b16 %v430
    %v1587 = vunpack.c.l.b16 %v431
    %v1588 = vunpack.c.h.b16 %v431
    %v1589 = vunpack.c.l.b16 %v432
    %v1590 = vunpack.c.h.b16 %v432
    %v1591 = vunpack.c.l.b16 %v433
    %v1592 = vunpack.c.h.b16 %v433
    %v1593 = vunpack.c.l.b16 %v434
    %v1594 = vunpack.c.l.b16 %v435
    %v1595 = vunpack.c.h.b16 %v435
    %v1596 = vunpack.c.l.b16 %v436
    %v1597 = vunpack.c.h.b16 %v436
    %v1598 = vunpack.c.l.b16 %v437
    %v1599 = vunpack.c.h.b16 %v437
    %v1600 = vunpack.c.l.b16 %v438
    %v1601 = vunpack.c.l.b16 %v439
    %v1602 = vunpack.c.h.b16 %v439
    %v1603 = vunpack.c.l.b16 %v440
    %v1604 = vunpack.c.h.b16 %v440
    %v1605 = vunpack.c.l.b16 %v441
    %v1606 = vunpack.c.h.b16 %v441
    %v1607 = vunpack.c.l.b16 %v442
    %v1608 = vunpack.c.l.b16 %v443
    %v1609 = vunpack.c.h.b16 %v443
    %v1610 = vunpack.c.l.b16 %v444
    %v1611 = vunpack.c.h.b16 %v444
    %v1612 = vunpack.c.l.b16 %v445
    %v1613 = vunpack.c.h.b16 %v445
    %v1614 = vunpack.c.l.b16 %v446
    %v1615 = vunpack.c.l.b16 %v447
    %v1616 = vunpack.c.h.b16 %v447
    %v1617 = vunpack.c.l.b16 %v448
    %v1618 = vunpack.c.h.b16 %v448
    %v1619 = vunpack.c.l.b16 %v449
    %v1620 = vunpack.c.h.b16 %v449
    %v1621 = vunpack.c.l.b16 %v450
    %v1622 = vunpack.c.l.b16 %v451
    %v1623 = vunpack.c.h.b16 %v451
    %v1624 = vunpack.c.l.b16 %v452
    %v1625 = vunpack.c.h.b16 %v452
    %v1626 = vunpack.c.l.b16 %v453
    %v1627 = vunpack.c.h.b16 %v453
    %v1628 = vunpack.c.l.b16 %v454
    %v1629 = vunpack.c.l.b16 %v455
    %v1630 = vunpack.c.h.b16 %v455
    %v1631 = vunpack.c.l.b16 %v456
    %v1632 = vunpack.c.h.b16 %v456
    %v1633 = vunpack.c.l.b16 %v457
    %v1634 = vunpack.c.h.b16 %v457
    %v1635 = vunpack.c.l.b16 %v458
    %v1636 = vunpack.c.l.b16 %v459
    %v1637 = vunpack.c.h.b16 %v459
    %v1638 = vunpack.c.l.b16 %v460
    %v1639 = vunpack.c.h.b16 %v460
    %v1640 = vunpack.c.l.b16 %v461
    %v1641 = vunpack.c.h.b16 %v461
    %v1642 = vunpack.c.l.b16 %v462
    %v1643 = vunpack.c.l.b16 %v463
    %v1644 = vunpack.c.h.b16 %v463
    %v1645 = vunpack.c.l.b16 %v464
    %v1646 = vunpack.c.h.b16 %v464
    %v1647 = vunpack.c.l.b16 %v465
    %v1648 = vunpack.c.h.b16 %v465
    %v1649 = vunpack.c.l.b16 %v466
    %v1650 = vunpack.c.l.b16 %v467
    %v1651 = vunpack.c.h.b16 %v467
    %v1652 = vunpack.c.l.b16 %v468
    %v1653 = vunpack.c.h.b16 %v468
    %v1654 = vunpack.c.l.b16 %v469
    %v1655 = vunpack.c.h.b16 %v469
    %v1656 = vunpack.c.l.b16 %v470
    %v1657 = vunpack.c.l.b16 %v471
    %v1658 = vunpack.c.h.b16 %v471
    %v1659 = vunpack.c.l.b16 %v472
    %v1660 = vunpack.c.h.b16 %v472
    %v1661 = vunpack.c.l.b16 %v473
    %v1662 = vunpack.c.h.b16 %v473
    %v1663 = vunpack.c.l.b16 %v474
    %v1664 = vunpack.c.l.b16 %v475
    %v1665 = vunpack.c.h.b16 %v475
    %v1666 = vunpack.c.l.b16 %v476
    %v1667 = vunpack.c.h.b16 %v476
    %v1668 = vunpack.c.l.b16 %v477
    %v1669 = vunpack.c.h.b16 %v477
    %v1670 = vunpack.c.l.b16 %v478
    %v1671 = vunpack.c.l.b16 %v479
    %v1672 = vunpack.c.h.b16 %v479
    %v1673 = vunpack.c.l.b16 %v480
    %v1674 = vunpack.c.h.b16 %v480
    %v1675 = vunpack.c.l.b16 %v481
    %v1676 = vunpack.c.h.b16 %v481
    %v1677 = vunpack.c.l.b16 %v482
    %v1678 = vunpack.c.l.b16 %v483
    %v1679 = vunpack.c.h.b16 %v483
    %v1680 = vunpack.c.l.b16 %v484
    %v1681 = vunpack.c.h.b16 %v484
    %v1682 = vunpack.c.l.b16 %v485
    %v1683 = vunpack.c.h.b16 %v485
    %v1684 = vunpack.c.l.b16 %v486
    %v1685 = vunpack.c.l.b16 %v487
    %v1686 = vunpack.c.h.b16 %v487
    %v1687 = vunpack.c.l.b16 %v488
    %v1688 = vunpack.c.h.b16 %v488
    %v1689 = vunpack.c.l.b16 %v489
    %v1690 = vunpack.c.h.b16 %v489
    %v1691 = vunpack.c.l.b16 %v490
    %v1692 = vunpack.c.l.b16 %v491
    %v1693 = vunpack.c.h.b16 %v491
    %v1694 = vunpack.c.l.b16 %v492
    %v1695 = vunpack.c.h.b16 %v492
    %v1696 = vunpack.c.l.b16 %v493
    %v1697 = vunpack.c.h.b16 %v493
    %v1698 = vunpack.c.l.b16 %v494
    %v1699 = vunpack.c.l.b16 %v495
    %v1700 = vunpack.c.h.b16 %v495
    %v1701 = vunpack.c.l.b16 %v496
    %v1702 = vunpack.c.h.b16 %v496
    %v1703 = vunpack.c.l.b16 %v497
    %v1704 = vunpack.c.h.b16 %v497
    %v1705 = vunpack.c.l.b16 %v498
    %v1706 = vunpack.c.l.b16 %v499
    %v1707 = vunpack.c.h.b16 %v499
    %v1708 = vunpack.c.l.b16 %v500
    %v1709 = vunpack.c.h.b16 %v500
    %v1710 = vunpack.c.l.b16 %v501
    %v1711 = vunpack.c.h.b16 %v501
    %v1712 = vunpack.c.l.b16 %v502
    %v1713 = vunpack.c.l.b16 %v503
    %v1714 = vunpack.c.h.b16 %v503
    %v1715 = vunpack.c.l.b16 %v504
    %v1716 = vunpack.c.h.b16 %v504
    %v1717 = vunpack.c.l.b16 %v505
    %v1718 = vunpack.c.h.b16 %v505
    %v1719 = vunpack.c.l.b16 %v506
    %v1720 = vunpack.c.l.b16 %v507
    %v1721 = vunpack.c.h.b16 %v507
    %v1722 = vunpack.c.l.b16 %v508
    %v1723 = vunpack.c.h.b16 %v508
    %v1724 = vunpack.c.l.b16 %v509
    %v1725 = vunpack.c.h.b16 %v509
    %v1726 = vunpack.c.l.b16 %v510
    %v1727 = vunpack.c.l.b16 %v511
    %v1728 = vunpack.c.h.b16 %v511
    %v1729 = vunpack.c.l.b16 %v512
    %v1730 = vunpack.c.h.b16 %v512
    %v1731 = vunpack.c.l.b16 %v513
    %v1732 = vunpack.c.h.b16 %v513
    %v1733 = vunpack.c.l.b16 %v514
    %v1734 = vunpack.c.l.b16 %v515
    %v1735 = vunpack.c.h.b16 %v515
    %v1736 = vunpack.c.l.b16 %v516
    %v1737 = vunpack.c.h.b16 %v516
    %v1738 = vunpack.c.l.b16 %v517
    %v1739 = vunpack.c.h.b16 %v517
    %v1740 = vunpack.c.l.b16 %v518
    %v1741 = vunpack.c.l.b16 %v519
    %v1742 = vunpack.c.h.b16 %v519
    %v1743 = vunpack.c.l.b16 %v520
    %v1744 = vunpack.c.h.b16 %v520
    %v1745 = vunpack.c.l.b16 %v521
    %v1746 = vunpack.c.h.b16 %v521
    %v1747 = vunpack.c.l.b16 %v522
    %v1748 = vunpack.c.l.b16 %v523
    %v1749 = vunpack.c.h.b16 %v523
    %v1750 = vunpack.c.l.b16 %v524
    %v1751 = vunpack.c.h.b16 %v524
    %v1752 = vunpack.c.l.b16 %v525
    %v1753 = vunpack.c.h.b16 %v525
    %v1754 = vunpack.c.l.b16 %v526
    %v1755 = vunpack.c.l.b16 %v527
    %v1756 = vunpack.c.h.b16 %v527
    %v1757 = vunpack.c.l.b16 %v528
    %v1758 = vunpack.c.h.b16 %v528
    %v1759 = vunpack.c.l.b16 %v529
    %v1760 = vunpack.c.h.b16 %v529
    %v1761 = vunpack.c.l.b16 %v530
    %v1762 = vunpack.c.l.b16 %v531
    %v1763 = vunpack.c.h.b16 %v531
    %v1764 = vunpack.c.l.b16 %v532
    %v1765 = vunpack.c.h.b16 %v532
    %v1766 = vunpack.c.l.b16 %v533
    %v1767 = vunpack.c.h.b16 %v533
    %v1768 = vunpack.c.l.b16 %v534
    %v1769 = vunpack.c.l.b16 %v535
    %v1770 = vunpack.c.h.b16 %v535
    %v1771 = vunpack.c.l.b16 %v536
    %v1772 = vunpack.c.h.b16 %v536
    %v1773 = vunpack.c.l.b16 %v537
    %v1774 = vunpack.c.h.b16 %v537
    %v1775 = vunpack.c.l.b16 %v538
    %v1776 = vunpack.c.l.b16 %v539
    %v1777 = vunpack.c.h.b16 %v539
    %v1778 = vunpack.c.l.b16 %v540
    %v1779 = vunpack.c.h.b16 %v540
    %v1780 = vunpack.c.l.b16 %v541
    %v1781 = vunpack.c.h.b16 %v541
    %v1782 = vunpack.c.l.b16 %v542
    %v1783 = vunpack.c.l.b16 %v543
    %v1784 = vunpack.c.h.b16 %v543
    %v1785 = vunpack.c.l.b16 %v544
    %v1786 = vunpack.c.h.b16 %v544
    %v1787 = vunpack.c.l.b16 %v545
    %v1788 = vunpack.c.h.b16 %v545
    %v1789 = vunpack.c.l.b16 %v546
    %v1790 = vunpack.c.l.b16 %v547
    %v1791 = vunpack.c.h.b16 %v547
    %v1792 = vunpack.c.l.b16 %v548
    %v1793 = vunpack.c.h.b16 %v548
    %v1794 = vunpack.c.l.b16 %v549
    %v1795 = vunpack.c.h.b16 %v549
    %v1796 = vunpack.c.l.b16 %v550
    %v1797 = vunpack.c.l.b16 %v551
    %v1798 = vunpack.c.h.b16 %v551
    %v1799 = vunpack.c.l.b16 %v552
    %v1800 = vunpack.c.h.b16 %v552
    %v1801 = vunpack.c.l.b16 %v553
    %v1802 = vunpack.c.h.b16 %v553
    %v1803 = vunpack.c.l.b16 %v554
    %v1804 = vunpack.c.l.b16 %v555
    %v1805 = vunpack.c.h.b16 %v555
    %v1806 = vunpack.c.l.b16 %v556
    %v1807 = vunpack.c.h.b16 %v556
    %v1808 = vunpack.c.l.b16 %v557
    %v1809 = vunpack.c.h.b16 %v557
    %v1810 = vunpack.c.l.b16 %v558
    %v1811 = vunpack.c.l.b16 %v559
    %v1812 = vunpack.c.h.b16 %v559
    %v1813 = vunpack.c.l.b16 %v560
    %v1814 = vunpack.c.h.b16 %v560
    %v1815 = vunpack.c.l.b16 %v561
    %v1816 = vunpack.c.h.b16 %v561
    %v1817 = vunpack.c.l.b16 %v562
    %v1818 = vunpack.c.l.b16 %v563
    %v1819 = vunpack.c.h.b16 %v563
    %v1820 = vunpack.c.l.b16 %v564
    %v1821 = vunpack.c.h.b16 %v564
    %v1822 = vunpack.c.l.b16 %v565
    %v1823 = vunpack.c.h.b16 %v565
    %v1824 = vunpack.c.l.b16 %v566
    %v1825 = vunpack.c.l.b16 %v567
    %v1826 = vunpack.c.h.b16 %v567
    %v1827 = vunpack.c.l.b16 %v568
    %v1828 = vunpack.c.h.b16 %v568
    %v1829 = vunpack.c.l.b16 %v569
    %v1830 = vunpack.c.h.b16 %v569
    %v1831 = vunpack.c.l.b16 %v570
    %v1832 = vunpack.c.l.b16 %v571
    %v1833 = vunpack.c.h.b16 %v571
    %v1834 = vunpack.c.l.b16 %v572
    %v1835 = vunpack.c.h.b16 %v572
    %v1836 = vunpack.c.l.b16 %v573
    %v1837 = vunpack.c.h.b16 %v573
    %v1838 = vunpack.c.l.b16 %v574
    %v1839 = vunpack.c.l.b16 %v575
    %v1840 = vunpack.c.h.b16 %v575
    %v1841 = vunpack.c.l.b16 %v576
    %v1842 = vunpack.c.h.b16 %v576
    %v1843 = vunpack.c.l.b16 %v577
    %v1844 = vunpack.c.h.b16 %v577
    %v1845 = vunpack.c.l.b16 %v578
    %v1846 = vunpack.c.l.b16 %v579
    %v1847 = vunpack.c.h.b16 %v579
    %v1848 = vunpack.c.l.b16 %v580
    %v1849 = vunpack.c.h.b16 %v580
    %v1850 = vunpack.c.l.b16 %v581
    %v1851 = vunpack.c.h.b16 %v581
    %v1852 = vunpack.c.l.b16 %v582
    %v1853 = vunpack.c.l.b16 %v583
    %v1854 = vunpack.c.h.b16 %v583
    %v1855 = vunpack.c.l.b16 %v584
    %v1856 = vunpack.c.h.b16 %v584
    %v1857 = vunpack.c.l.b16 %v585
    %v1858 = vunpack.c.h.b16 %v585
    %v1859 = vunpack.c.l.b16 %v586
    %v1860 = vpack.c.b16 %v1083, %v1076
    %v1861 = vpack.c.b16 %v1084, %v1077
    %v1862 = vpack.c.b16 %v1085, %v1078
    %v1863 = vpack.c.b16 %v1086, %v1079
    %v1864 = vpack.c.b16 %v1087, %v1080
    %v1865 = vpack.c.b16 %v1088, %v1081
    %v1866 = vpack.c.b16 %v1089, %v1082
    %v1867 = vpack.c.b16 %v1097, %v1090
    %v1868 = vpack.c.b16 %v1098, %v1091
    %v1869 = vpack.c.b16 %v1099, %v1092
    %v1870 = vpack.c.b16 %v1100, %v1093
    %v1871 = vpack.c.b16 %v1101, %v1094
    %v1872 = vpack.c.b16 %v1102, %v1095
    %v1873 = vpack.c.b16 %v1103, %v1096
    %v1874 = vpack.c.b16 %v1111, %v1104
    %v1875 = vpack.c.b16 %v1112, %v1105
    %v1876 = vpack.c.b16 %v1113, %v1106
    %v1877 = vpack.c.b16 %v1114, %v1107
    %v1878 = vpack.c.b16 %v1115, %v1108
    %v1879 = vpack.c.b16 %v1116, %v1109
    %v1880 = vpack.c.b16 %v1117, %v1110
    %v1881 = vpack.c.b16 %v1125, %v1118
    %v1882 = vpack.c.b16 %v1126, %v1119
    %v1883 = vpack.c.b16 %v1127, %v1120
    %v1884 = vpack.c.b16 %v1128, %v1121
    %v1885 = vpack.c.b16 %v1129, %v1122
    %v1886 = vpack.c.b16 %v1130, %v1123
    %v1887 = vpack.c.b16 %v1131, %v1124
    %v1888 = vpack.c.b16 %v1139, %v1132
    %v1889 = vpack.c.b16 %v1140, %v1133
    %v1890 = vpack.c.b16 %v1141, %v1134
    %v1891 = vpack.c.b16 %v1142, %v1135
    %v1892 = vpack.c.b16 %v1143, %v1136
    %v1893 = vpack.c.b16 %v1144, %v1137
    %v1894 = vpack.c.b16 %v1145, %v1138
    %v1895 = vpack.c.b16 %v1153, %v1146
    %v1896 = vpack.c.b16 %v1154, %v1147
    %v1897 = vpack.c.b16 %v1155, %v1148
    %v1898 = vpack.c.b16 %v1156, %v1149
    %v1899 = vpack.c.b16 %v1157, %v1150
    %v1900 = vpack.c.b16 %v1158, %v1151
    %v1901 = vpack.c.b16 %v1159, %v1152
    %v1902 = vpack.c.b16 %v1167, %v1160
    %v1903 = vpack.c.b16 %v1168, %v1161
    %v1904 = vpack.c.b16 %v1169, %v1162
    %v1905 = vpack.c.b16 %v1170, %v1163
    %v1906 = vpack.c.b16 %v1171, %v1164
    %v1907 = vpack.c.b16 %v1172, %v1165
    %v1908 = vpack.c.b16 %v1173, %v1166
    %v1909 = vpack.c.b16 %v1181, %v1174
    %v1910 = vpack.c.b16 %v1182, %v1175
    %v1911 = vpack.c.b16 %v1183, %v1176
    %v1912 = vpack.c.b16 %v1184, %v1177
    %v1913 = vpack.c.b16 %v1185, %v1178
    %v1914 = vpack.c.b16 %v1186, %v1179
    %v1915 = vpack.c.b16 %v1187, %v1180
    %v1916 = vpack.c.b16 %v1195, %v1188
    %v1917 = vpack.c.b16 %v1196, %v1189
    %v1918 = vpack.c.b16 %v1197, %v1190
    %v1919 = vpack.c.b16 %v1198, %v1191
    %v1920 = vpack.c.b16 %v1199, %v1192
    %v1921 = vpack.c.b16 %v1200, %v1193
    %v1922 = vpack.c.b16 %v1201, %v1194
    %v1923 = vpack.c.b16 %v1209, %v1202
    %v1924 = vpack.c.b16 %v1210, %v1203
    %v1925 = vpack.c.b16 %v1211, %v1204
    %v1926 = vpack.c.b16 %v1212, %v1205
    %v1927 = vpack.c.b16 %v1213, %v1206
    %v1928 = vpack.c.b16 %v1214, %v1207
    %v1929 = vpack.c.b16 %v1215, %v1208
    %v1930 = vpack.c.b16 %v1223, %v1216
    %v1931 = vpack.c.b16 %v1224, %v1217
    %v1932 = vpack.c.b16 %v1225, %v1218
    %v1933 = vpack.c.b16 %v1226, %v1219
    %v1934 = vpack.c.b16 %v1227, %v1220
    %v1935 = vpack.c.b16 %v1228, %v1221
    %v1936 = vpack.c.b16 %v1229, %v1222
    %v1937 = vpack.c.b16 %v1237, %v1230
    %v1938 = vpack.c.b16 %v1238, %v1231
    %v1939 = vpack.c.b16 %v1239, %v1232
    %v1940 = vpack.c.b16 %v1240, %v1233
    %v1941 = vpack.c.b16 %v1241, %v1234
    %v1942 = vpack.c.b16 %v1242, %v1235
    %v1943 = vpack.c.b16 %v1243, %v1236
    %v1944 = vpack.c.b16 %v1251, %v1244
    %v1945 = vpack.c.b16 %v1252, %v1245
    %v1946 = vpack.c.b16 %v1253, %v1246
    %v1947 = vpack.c.b16 %v1254, %v1247
    %v1948 = vpack.c.b16 %v1255, %v1248
    %v1949 = vpack.c.b16 %v1256, %v1249
    %v1950 = vpack.c.b16 %v1257, %v1250
    %v1951 = vpack.c.b16 %v1265, %v1258
    %v1952 = vpack.c.b16 %v1266, %v1259
    %v1953 = vpack.c.b16 %v1267, %v1260
    %v1954 = vpack.c.b16 %v1268, %v1261
    %v1955 = vpack.c.b16 %v1269, %v1262
    %v1956 = vpack.c.b16 %v1270, %v1263
    %v1957 = vpack.c.b16 %v1271, %v1264
    %v1958 = vpack.c.b16 %v1279, %v1272
    %v1959 = vpack.c.b16 %v1280, %v1273
    %v1960 = vpack.c.b16 %v1281, %v1274
    %v1961 = vpack.c.b16 %v1282, %v1275
    %v1962 = vpack.c.b16 %v1283, %v1276
    %v1963 = vpack.c.b16 %v1284, %v1277
    %v1964 = vpack.c.b16 %v1285, %v1278
    %v1965 = vpack.c.b16 %v1293, %v1286
    %v1966 = vpack.c.b16 %v1294, %v1287
    %v1967 = vpack.c.b16 %v1295, %v1288
    %v1968 = vpack.c.b16 %v1296, %v1289
    %v1969 = vpack.c.b16 %v1297, %v1290
    %v1970 = vpack.c.b16 %v1298, %v1291
    %v1971 = vpack.c.b16 %v1299, %v1292
    %v1972 = vpack.c.b16 %v1307, %v1300
    %v1973 = vpack.c.b16 %v1308, %v1301
    %v1974 = vpack.c.b16 %v1309, %v1302
    %v1975 = vpack.c.b16 %v1310, %v1303
    %v1976 = vpack.c.b16 %v1311, %v1304
    %v1977 = vpack.c.b16 %v1312, %v1305
    %v1978 = vpack.c.b16 %v1313, %v1306
    %v1979 = vpack.c.b16 %v1321, %v1314
    %v1980 = vpack.c.b16 %v1322, %v1315
    %v1981 = vpack.c.b16 %v1323, %v1316
    %v1982 = vpack.c.b16 %v1324, %v1317
    %v1983 = vpack.c.b16 %v1325, %v1318
    %v1984 = vpack.c.b16 %v1326, %v1319
    %v1985 = vpack.c.b16 %v1327, %v1320
    %v1986 = vpack.c.b16 %v1335, %v1328
    %v1987 = vpack.c.b16 %v1336, %v1329
    %v1988 = vpack.c.b16 %v1337, %v1330
    %v1989 = vpack.c.b16 %v1338, %v1331
    %v1990 = vpack.c.b16 %v1339, %v1332
    %v1991 = vpack.c.b16 %v1340, %v1333
    %v1992 = vpack.c.b16 %v1341, %v1334
    %v1993 = vpack.c.b16 %v1349, %v1342
    %v1994 = vpack.c.b16 %v1350, %v1343
    %v1995 = vpack.c.b16 %v1351, %v1344
    %v1996 = vpack.c.b16 %v1352, %v1345
    %v1997 = vpack.c.b16 %v1353, %v1346
    %v1998 = vpack.c.b16 %v1354, %v1347
    %v1999 = vpack.c.b16 %v1355, %v1348
    %v2000 = vpack.c.b16 %v1363, %v1356
    %v2001 = vpack.c.b16 %v1364, %v1357
    %v2002 = vpack.c.b16 %v1365, %v1358
    %v2003 = vpack.c.b16 %v1366, %v1359
    %v2004 = vpack.c.b16 %v1367, %v1360
    %v2005 = vpack.c.b16 %v1368, %v1361
    %v2006 = vpack.c.b16 %v1369, %v1362
    %v2007 = vpack.c.b16 %v1377, %v1370
    %v2008 = vpack.c.b16 %v1378, %v1371
    %v2009 = vpack.c.b16 %v1379, %v1372
    %v2010 = vpack.c.b16 %v1380, %v1373
    %v2011 = vpack.c.b16 %v1381, %v1374
    %v2012 = vpack.c.b16 %v1382, %v1375
    %v2013 = vpack.c.b16 %v1383, %v1376
    %v2014 = vpack.c.b16 %v1391, %v1384
    %v2015 = vpack.c.b16 %v1392, %v1385
    %v2016 = vpack.c.b16 %v1393, %v1386
    %v2017 = vpack.c.b16 %v1394, %v1387
    %v2018 = vpack.c.b16 %v1395, %v1388
    %v2019 = vpack.c.b16 %v1396, %v1389
    %v2020 = vpack.c.b16 %v1397, %v1390
    %v2021 = vpack.c.b16 %v1405, %v1398
    %v2022 = vpack.c.b16 %v1406, %v1399
    %v2023 = vpack.c.b16 %v1407, %v1400
    %v2024 = vpack.c.b16 %v1408, %v1401
    %v2025 = vpack.c.b16 %v1409, %v1402
    %v2026 = vpack.c.b16 %v1410, %v1403
    %v2027 = vpack.c.b16 %v1411, %v1404
    %v2028 = vpack.c.b16 %v1419, %v1412
    %v2029 = vpack.c.b16 %v1420, %v1413
    %v2030 = vpack.c.b16 %v1421, %v1414
    %v2031 = vpack.c.b16 %v1422, %v1415
    %v2032 = vpack.c.b16 %v1423, %v1416
    %v2033 = vpack.c.b16 %v1424, %v1417
    %v2034 = vpack.c.b16 %v1425, %v1418
    %v2035 = vpack.c.b16 %v1433, %v1426
    %v2036 = vpack.c.b16 %v1434, %v1427
    %v2037 = vpack.c.b16 %v1435, %v1428
    %v2038 = vpack.c.b16 %v1436, %v1429
    %v2039 = vpack.c.b16 %v1437, %v1430
    %v2040 = vpack.c.b16 %v1438, %v1431
    %v2041 = vpack.c.b16 %v1439, %v1432
    %v2042 = vpack.c.b16 %v1447, %v1440
    %v2043 = vpack.c.b16 %v1448, %v1441
    %v2044 = vpack.c.b16 %v1449, %v1442
    %v2045 = vpack.c.b16 %v1450, %v1443
    %v2046 = vpack.c.b16 %v1451, %v1444
    %v2047 = vpack.c.b16 %v1452, %v1445
    %v2048 = vpack.c.b16 %v1453, %v1446
    %v2049 = vpack.c.b16 %v1461, %v1454
    %v2050 = vpack.c.b16 %v1462, %v1455
    %v2051 = vpack.c.b16 %v1463, %v1456
    %v2052 = vpack.c.b16 %v1464, %v1457
    %v2053 = vpack.c.b16 %v1465, %v1458
    %v2054 = vpack.c.b16 %v1466, %v1459
    %v2055 = vpack.c.b16 %v1467, %v1460
    %v2056 = vpack.c.b16 %v1475, %v1468
    %v2057 = vpack.c.b16 %v1476, %v1469
    %v2058 = vpack.c.b16 %v1477, %v1470
    %v2059 = vpack.c.b16 %v1478, %v1471
    %v2060 = vpack.c.b16 %v1479, %v1472
    %v2061 = vpack.c.b16 %v1480, %v1473
    %v2062 = vpack.c.b16 %v1481, %v1474
    %v2063 = vpack.c.b16 %v1489, %v1482
    %v2064 = vpack.c.b16 %v1490, %v1483
    %v2065 = vpack.c.b16 %v1491, %v1484
    %v2066 = vpack.c.b16 %v1492, %v1485
    %v2067 = vpack.c.b16 %v1493, %v1486
    %v2068 = vpack.c.b16 %v1494, %v1487
    %v2069 = vpack.c.b16 %v1495, %v1488
    %v2070 = vpack.c.b16 %v1503, %v1496
    %v2071 = vpack.c.b16 %v1504, %v1497
    %v2072 = vpack.c.b16 %v1505, %v1498
    %v2073 = vpack.c.b16 %v1506, %v1499
    %v2074 = vpack.c.b16 %v1507, %v1500
    %v2075 = vpack.c.b16 %v1508, %v1501
    %v2076 = vpack.c.b16 %v1509, %v1502
    %v2077 = vpack.c.b16 %v1517, %v1510
    %v2078 = vpack.c.b16 %v1518, %v1511
    %v2079 = vpack.c.b16 %v1519, %v1512
    %v2080 = vpack.c.b16 %v1520, %v1513
    %v2081 = vpack.c.b16 %v1521, %v1514
    %v2082 = vpack.c.b16 %v1522, %v1515
    %v2083 = vpack.c.b16 %v1523, %v1516
    %v2084 = vpack.c.b16 %v1531, %v1524
    %v2085 = vpack.c.b16 %v1532, %v1525
    %v2086 = vpack.c.b16 %v1533, %v1526
    %v2087 = vpack.c.b16 %v1534, %v1527
    %v2088 = vpack.c.b16 %v1535, %v1528
    %v2089 = vpack.c.b16 %v1536, %v1529
    %v2090 = vpack.c.b16 %v1537, %v1530
    %v2091 = vpack.c.b16 %v1545, %v1538
    %v2092 = vpack.c.b16 %v1546, %v1539
    %v2093 = vpack.c.b16 %v1547, %v1540
    %v2094 = vpack.c.b16 %v1548, %v1541
    %v2095 = vpack.c.b16 %v1549, %v1542
    %v2096 = vpack.c.b16 %v1550, %v1543
    %v2097 = vpack.c.b16 %v1551, %v1544
    %v2098 = vpack.c.b16 %v1559, %v1552
    %v2099 = vpack.c.b16 %v1560, %v1553
    %v2100 = vpack.c.b16 %v1561, %v1554
    %v2101 = vpack.c.b16 %v1562, %v1555
    %v2102 = vpack.c.b16 %v1563, %v1556
    %v2103 = vpack.c.b16 %v1564, %v1557
    %v2104 = vpack.c.b16 %v1565, %v1558
    %v2105 = vpack.c.b16 %v1573, %v1566
    %v2106 = vpack.c.b16 %v1574, %v1567
    %v2107 = vpack.c.b16 %v1575, %v1568
    %v2108 = vpack.c.b16 %v1576, %v1569
    %v2109 = vpack.c.b16 %v1577, %v1570
    %v2110 = vpack.c.b16 %v1578, %v1571
    %v2111 = vpack.c.b16 %v1579, %v1572
    %v2112 = vpack.c.b16 %v1587, %v1580
    %v2113 = vpack.c.b16 %v1588, %v1581
    %v2114 = vpack.c.b16 %v1589, %v1582
    %v2115 = vpack.c.b16 %v1590, %v1583
    %v2116 = vpack.c.b16 %v1591, %v1584
    %v2117 = vpack.c.b16 %v1592, %v1585
    %v2118 = vpack.c.b16 %v1593, %v1586
    %v2119 = vpack.c.b16 %v1601, %v1594
    %v2120 = vpack.c.b16 %v1602, %v1595
    %v2121 = vpack.c.b16 %v1603, %v1596
    %v2122 = vpack.c.b16 %v1604, %v1597
    %v2123 = vpack.c.b16 %v1605, %v1598
    %v2124 = vpack.c.b16 %v1606, %v1599
    %v2125 = vpack.c.b16 %v1607, %v1600
    %v2126 = vpack.c.b16 %v1615, %v1608
    %v2127 = vpack.c.b16 %v1616, %v1609
    %v2128 = vpack.c.b16 %v1617, %v1610
    %v2129 = vpack.c.b16 %v1618, %v1611
    %v2130 = vpack.c.b16 %v1619, %v1612
    %v2131 = vpack.c.b16 %v1620, %v1613
    %v2132 = vpack.c.b16 %v1621, %v1614
    %v2133 = vpack.c.b16 %v1629, %v1622
    %v2134 = vpack.c.b16 %v1630, %v1623
    %v2135 = vpack.c.b16 %v1631, %v1624
    %v2136 = vpack.c.b16 %v1632, %v1625
    %v2137 = vpack.c.b16 %v1633, %v1626
    %v2138 = vpack.c.b16 %v1634, %v1627
    %v2139 = vpack.c.b16 %v1635, %v1628
    %v2140 = vpack.c.b16 %v1643, %v1636
    %v2141 = vpack.c.b16 %v1644, %v1637
    %v2142 = vpack.c.b16 %v1645, %v1638
    %v2143 = vpack.c.b16 %v1646, %v1639
    %v2144 = vpack.c.b16 %v1647, %v1640
    %v2145 = vpack.c.b16 %v1648, %v1641
    %v2146 = vpack.c.b16 %v1649, %v1642
    %v2147 = vpack.c.b16 %v1657, %v1650
    %v2148 = vpack.c.b16 %v1658, %v1651
    %v2149 = vpack.c.b16 %v1659, %v1652
    %v2150 = vpack.c.b16 %v1660, %v1653
    %v2151 = vpack.c.b16 %v1661, %v1654
    %v2152 = vpack.c.b16 %v1662, %v1655
    %v2153 = vpack.c.b16 %v1663, %v1656
    %v2154 = vpack.c.b16 %v1671, %v1664
    %v2155 = vpack.c.b16 %v1672, %v1665
    %v2156 = vpack.c.b16 %v1673, %v1666
    %v2157 = vpack.c.b16 %v1674, %v1667
    %v2158 = vpack.c.b16 %v1675, %v1668
    %v2159 = vpack.c.b16 %v1676, %v1669
    %v2160 = vpack.c.b16 %v1677, %v1670
    %v2161 = vpack.c.b16 %v1685, %v1678
    %v2162 = vpack.c.b16 %v1686, %v1679
    %v2163 = vpack.c.b16 %v1687, %v1680
    %v2164 = vpack.c.b16 %v1688, %v1681
    %v2165 = vpack.c.b16 %v1689, %v1682
    %v2166 = vpack.c.b16 %v1690, %v1683
    %v2167 = vpack.c.b16 %v1691, %v1684
    %v2168 = vpack.c.b16 %v1699, %v1692
    %v2169 = vpack.c.b16 %v1700, %v1693
    %v2170 = vpack.c.b16 %v1701, %v1694
    %v2171 = vpack.c.b16 %v1702, %v1695
    %v2172 = vpack.c.b16 %v1703, %v1696
    %v2173 = vpack.c.b16 %v1704, %v1697
    %v2174 = vpack.c.b16 %v1705, %v1698
    %v2175 = vpack.c.b16 %v1713, %v1706
    %v2176 = vpack.c.b16 %v1714, %v1707
    %v2177 = vpack.c.b16 %v1715, %v1708
    %v2178 = vpack.c.b16 %v1716, %v1709
    %v2179 = vpack.c.b16 %v1717, %v1710
    %v2180 = vpack.c.b16 %v1718, %v1711
    %v2181 = vpack.c.b16 %v1719, %v1712
    %v2182 = vpack.c.b16 %v1727, %v1720
    %v2183 = vpack.c.b16 %v1728, %v1721
    %v2184 = vpack.c.b16 %v1729, %v1722
    %v2185 = vpack.c.b16 %v1730, %v1723
    %v2186 = vpack.c.b16 %v1731, %v1724
    %v2187 = vpack.c.b16 %v1732, %v1725
    %v2188 = vpack.c.b16 %v1733, %v1726
    %v2189 = vpack.c.b16 %v1741, %v1734
    %v2190 = vpack.c.b16 %v1742, %v1735
    %v2191 = vpack.c.b16 %v1743, %v1736
    %v2192 = vpack.c.b16 %v1744, %v1737
    %v2193 = vpack.c.b16 %v1745, %v1738
    %v2194 = vpack.c.b16 %v1746, %v1739
    %v2195 = vpack.c.b16 %v1747, %v1740
    %v2196 = vpack.c.b16 %v1755, %v1748
    %v2197 = vpack.c.b16 %v1756, %v1749
    %v2198 = vpack.c.b16 %v1757, %v1750
    %v2199 = vpack.c.b16 %v1758, %v1751
    %v2200 = vpack.c.b16 %v1759, %v1752
    %v2201 = vpack.c.b16 %v1760, %v1753
    %v2202 = vpack.c.b16 %v1761, %v1754
    %v2203 = vpack.c.b16 %v1769, %v1762
    %v2204 = vpack.c.b16 %v1770, %v1763
    %v2205 = vpack.c.b16 %v1771, %v1764
    %v2206 = vpack.c.b16 %v1772, %v1765
    %v2207 = vpack.c.b16 %v1773, %v1766
    %v2208 = vpack.c.b16 %v1774, %v1767
    %v2209 = vpack.c.b16 %v1775, %v1768
    %v2210 = vpack.c.b16 %v1783, %v1776
    %v2211 = vpack.c.b16 %v1784, %v1777
    %v2212 = vpack.c.b16 %v1785, %v1778
    %v2213 = vpack.c.b16 %v1786, %v1779
    %v2214 = vpack.c.b16 %v1787, %v1780
    %v2215 = vpack.c.b16 %v1788, %v1781
    %v2216 = vpack.c.b16 %v1789, %v1782
    %v2217 = vpack.c.b16 %v1797, %v1790
    %v2218 = vpack.c.b16 %v1798, %v1791
    %v2219 = vpack.c.b16 %v1799, %v1792
    %v2220 = vpack.c.b16 %v1800, %v1793
    %v2221 = vpack.c.b16 %v1801, %v1794
    %v2222 = vpack.c.b16 %v1802, %v1795
    %v2223 = vpack.c.b16 %v1803, %v1796
    %v2224 = vpack.c.b16 %v1811, %v1804
    %v2225 = vpack.c.b16 %v1812, %v1805
    %v2226 = vpack.c.b16 %v1813, %v1806
    %v2227 = vpack.c.b16 %v1814, %v1807
    %v2228 = vpack.c.b16 %v1815, %v1808
    %v2229 = vpack.c.b16 %v1816, %v1809
    %v2230 = vpack.c.b16 %v1817, %v1810
    %v2231 = vpack.c.b16 %v1825, %v1818
    %v2232 = vpack.c.b16 %v1826, %v1819
    %v2233 = vpack.c.b16 %v1827, %v1820
    %v2234 = vpack.c.b16 %v1828, %v1821
    %v2235 = vpack.c.b16 %v1829, %v1822
    %v2236 = vpack.c.b16 %v1830, %v1823
    %v2237 = vpack.c.b16 %v1831, %v1824
    %v2238 = vpack.c.b16 %v1839, %v1832
    %v2239 = vpack.c.b16 %v1840, %v1833
    %v2240 = vpack.c.b16 %v1841, %v1834
    %v2241 = vpack.c.b16 %v1842, %v1835
    %v2242 = vpack.c.b16 %v1843, %v1836
    %v2243 = vpack.c.b16 %v1844, %v1837
    %v2244 = vpack.c.b16 %v1845, %v1838
    %v2245 = vpack.c.b16 %v1853, %v1846
    %v2246 = vpack.c.b16 %v1854, %v1847
    %v2247 = vpack.c.b16 %v1855, %v1848
    %v2248 = vpack.c.b16 %v1856, %v1849
    %v2249 = vpack.c.b16 %v1857, %v1850
    %v2250 = vpack.c.b16 %v1858, %v1851
    %v2251 = vpack.c.b16 %v1859, %v1852
    %2644 = vmatpush.bf16.msra.mxu0 %v1909
    %2645 = vmatpush.bf16.msra.mxu0 %v1902
    %2646 = vmatpush.bf16.msra.mxu0 %v1895
    %2647 = vmatpush.bf16.msra.mxu0 %v1888
    %2648 = vmatpush.bf16.msra.mxu0 %v1881
    %2649 = vmatpush.bf16.msra.mxu0 %v1874
    %2650 = vmatpush.bf16.msra.mxu0 %v1867
    %2651 = vmatpush.bf16.msra.mxu0 %v1860
    %2652 = vmatmul.bf16.gmra.mxu0 %v614
    %v2653 = vpop.f32.mrf.mxu0
    %v2654 = vadd.f32 %v589, %v2653
    %v2655 = vpop.f32.mrf.mxu0
    %2656 = vdwg.mxu0
    %2657 = vmatpush.bf16.msra.mxu0 %v1965
    %2658 = vmatpush.bf16.msra.mxu0 %v1958
    %2659 = vmatpush.bf16.msra.mxu0 %v1951
    %2660 = vmatpush.bf16.msra.mxu0 %v1944
    %2661 = vmatpush.bf16.msra.mxu0 %v1937
    %2662 = vmatpush.bf16.msra.mxu0 %v1930
    %2663 = vmatpush.bf16.msra.mxu0 %v1923
    %2664 = vmatpush.bf16.msra.mxu0 %v1916
    %2665 = vmatmul.bf16.gmra.mxu0 %v615
    %v2666 = vpop.f32.mrf.mxu0
    %v2667 = vadd.f32 %v2654, %v2666
    %v2668 = vpop.f32.mrf.mxu0
    %2669 = vdwg.mxu0
    %2670 = vmatpush.bf16.msra.mxu0 %v2021
    %2671 = vmatpush.bf16.msra.mxu0 %v2014
    %2672 = vmatpush.bf16.msra.mxu0 %v2007
    %2673 = vmatpush.bf16.msra.mxu0 %v2000
    %2674 = vmatpush.bf16.msra.mxu0 %v1993
    %2675 = vmatpush.bf16.msra.mxu0 %v1986
    %2676 = vmatpush.bf16.msra.mxu0 %v1979
    %2677 = vmatpush.bf16.msra.mxu0 %v1972
    %2678 = vmatmul.bf16.gmra.mxu0 %v616
    %v2679 = vpop.f32.mrf.mxu0
    %v2680 = vadd.f32 %v2667, %v2679
    %v2681 = vpop.f32.mrf.mxu0
    %2682 = vdwg.mxu0
    %2683 = vmatpush.bf16.msra.mxu0 %v2077
    %2684 = vmatpush.bf16.msra.mxu0 %v2070
    %2685 = vmatpush.bf16.msra.mxu0 %v2063
    %2686 = vmatpush.bf16.msra.mxu0 %v2056
    %2687 = vmatpush.bf16.msra.mxu0 %v2049
    %2688 = vmatpush.bf16.msra.mxu0 %v2042
    %2689 = vmatpush.bf16.msra.mxu0 %v2035
    %2690 = vmatpush.bf16.msra.mxu0 %v2028
    %2691 = vmatmul.bf16.gmra.mxu0 %v617
    %v2692 = vpop.f32.mrf.mxu0
    %v2693 = vadd.f32 %v2680, %v2692
    %v2694 = vpop.f32.mrf.mxu0
    %2695 = vdwg.mxu0
    %2696 = vmatpush.bf16.msra.mxu0 %v2133
    %2697 = vmatpush.bf16.msra.mxu0 %v2126
    %2698 = vmatpush.bf16.msra.mxu0 %v2119
    %2699 = vmatpush.bf16.msra.mxu0 %v2112
    %2700 = vmatpush.bf16.msra.mxu0 %v2105
    %2701 = vmatpush.bf16.msra.mxu0 %v2098
    %2702 = vmatpush.bf16.msra.mxu0 %v2091
    %2703 = vmatpush.bf16.msra.mxu0 %v2084
    %2704 = vmatmul.bf16.gmra.mxu0 %v618
    %v2705 = vpop.f32.mrf.mxu0
    %v2706 = vadd.f32 %v2693, %v2705
    %v2707 = vpop.f32.mrf.mxu0
    %2708 = vdwg.mxu0
    %2709 = vmatpush.bf16.msra.mxu0 %v2189
    %2710 = vmatpush.bf16.msra.mxu0 %v2182
    %2711 = vmatpush.bf16.msra.mxu0 %v2175
    %2712 = vmatpush.bf16.msra.mxu0 %v2168
    %2713 = vmatpush.bf16.msra.mxu0 %v2161
    %2714 = vmatpush.bf16.msra.mxu0 %v2154
    %2715 = vmatpush.bf16.msra.mxu0 %v2147
    %2716 = vmatpush.bf16.msra.mxu0 %v2140
    %2717 = vmatmul.bf16.gmra.mxu0 %v619
    %v2718 = vpop.f32.mrf.mxu0
    %v2719 = vadd.f32 %v2706, %v2718
    %v2720 = vpop.f32.mrf.mxu0
    %2721 = vdwg.mxu0
    %2722 = vmatpush.bf16.msra.mxu0 %v2245
    %2723 = vmatpush.bf16.msra.mxu0 %v2238
    %2724 = vmatpush.bf16.msra.mxu0 %v2231
    %2725 = vmatpush.bf16.msra.mxu0 %v2224
    %2726 = vmatpush.bf16.msra.mxu0 %v2217
    %2727 = vmatpush.bf16.msra.mxu0 %v2210
    %2728 = vmatpush.bf16.msra.mxu0 %v2203
    %2729 = vmatpush.bf16.msra.mxu0 %v2196
    %2730 = vmatmul.bf16.gmra.mxu0 %v620
    %v2731 = vpop.f32.mrf.mxu0
    %v2732 = vadd.f32 %v2719, %v2731
    %v2733 = vpop.f32.mrf.mxu0
    %2734 = vdwg.mxu0
    %2735 = vmatpush.bf16.msra.mxu0 %v1910
    %2736 = vmatpush.bf16.msra.mxu0 %v1903
    %2737 = vmatpush.bf16.msra.mxu0 %v1896
    %2738 = vmatpush.bf16.msra.mxu0 %v1889
    %2739 = vmatpush.bf16.msra.mxu0 %v1882
    %2740 = vmatpush.bf16.msra.mxu0 %v1875
    %2741 = vmatpush.bf16.msra.mxu0 %v1868
    %2742 = vmatpush.bf16.msra.mxu0 %v1861
    %2743 = vmatmul.bf16.gmra.mxu0 %v614
    %v2744 = vpop.f32.mrf.mxu0
    %v2745 = vadd.f32 %v590, %v2744
    %v2746 = vpop.f32.mrf.mxu0
    %2747 = vdwg.mxu0
    %2748 = vmatpush.bf16.msra.mxu0 %v1966
    %2749 = vmatpush.bf16.msra.mxu0 %v1959
    %2750 = vmatpush.bf16.msra.mxu0 %v1952
    %2751 = vmatpush.bf16.msra.mxu0 %v1945
    %2752 = vmatpush.bf16.msra.mxu0 %v1938
    %2753 = vmatpush.bf16.msra.mxu0 %v1931
    %2754 = vmatpush.bf16.msra.mxu0 %v1924
    %2755 = vmatpush.bf16.msra.mxu0 %v1917
    %2756 = vmatmul.bf16.gmra.mxu0 %v615
    %v2757 = vpop.f32.mrf.mxu0
    %v2758 = vadd.f32 %v2745, %v2757
    %v2759 = vpop.f32.mrf.mxu0
    %2760 = vdwg.mxu0
    %2761 = vmatpush.bf16.msra.mxu0 %v2022
    %2762 = vmatpush.bf16.msra.mxu0 %v2015
    %2763 = vmatpush.bf16.msra.mxu0 %v2008
    %2764 = vmatpush.bf16.msra.mxu0 %v2001
    %2765 = vmatpush.bf16.msra.mxu0 %v1994
    %2766 = vmatpush.bf16.msra.mxu0 %v1987
    %2767 = vmatpush.bf16.msra.mxu0 %v1980
    %2768 = vmatpush.bf16.msra.mxu0 %v1973
    %2769 = vmatmul.bf16.gmra.mxu0 %v616
    %v2770 = vpop.f32.mrf.mxu0
    %v2771 = vadd.f32 %v2758, %v2770
    %v2772 = vpop.f32.mrf.mxu0
    %2773 = vdwg.mxu0
    %2774 = vmatpush.bf16.msra.mxu0 %v2078
    %2775 = vmatpush.bf16.msra.mxu0 %v2071
    %2776 = vmatpush.bf16.msra.mxu0 %v2064
    %2777 = vmatpush.bf16.msra.mxu0 %v2057
    %2778 = vmatpush.bf16.msra.mxu0 %v2050
    %2779 = vmatpush.bf16.msra.mxu0 %v2043
    %2780 = vmatpush.bf16.msra.mxu0 %v2036
    %2781 = vmatpush.bf16.msra.mxu0 %v2029
    %2782 = vmatmul.bf16.gmra.mxu0 %v617
    %v2783 = vpop.f32.mrf.mxu0
    %v2784 = vadd.f32 %v2771, %v2783
    %v2785 = vpop.f32.mrf.mxu0
    %2786 = vdwg.mxu0
    %2787 = vmatpush.bf16.msra.mxu0 %v2134
    %2788 = vmatpush.bf16.msra.mxu0 %v2127
    %2789 = vmatpush.bf16.msra.mxu0 %v2120
    %2790 = vmatpush.bf16.msra.mxu0 %v2113
    %2791 = vmatpush.bf16.msra.mxu0 %v2106
    %2792 = vmatpush.bf16.msra.mxu0 %v2099
    %2793 = vmatpush.bf16.msra.mxu0 %v2092
    %2794 = vmatpush.bf16.msra.mxu0 %v2085
    %2795 = vmatmul.bf16.gmra.mxu0 %v618
    %v2796 = vpop.f32.mrf.mxu0
    %v2797 = vadd.f32 %v2784, %v2796
    %v2798 = vpop.f32.mrf.mxu0
    %2799 = vdwg.mxu0
    %2800 = vmatpush.bf16.msra.mxu0 %v2190
    %2801 = vmatpush.bf16.msra.mxu0 %v2183
    %2802 = vmatpush.bf16.msra.mxu0 %v2176
    %2803 = vmatpush.bf16.msra.mxu0 %v2169
    %2804 = vmatpush.bf16.msra.mxu0 %v2162
    %2805 = vmatpush.bf16.msra.mxu0 %v2155
    %2806 = vmatpush.bf16.msra.mxu0 %v2148
    %2807 = vmatpush.bf16.msra.mxu0 %v2141
    %2808 = vmatmul.bf16.gmra.mxu0 %v619
    %v2809 = vpop.f32.mrf.mxu0
    %v2810 = vadd.f32 %v2797, %v2809
    %v2811 = vpop.f32.mrf.mxu0
    %2812 = vdwg.mxu0
    %2813 = vmatpush.bf16.msra.mxu0 %v2246
    %2814 = vmatpush.bf16.msra.mxu0 %v2239
    %2815 = vmatpush.bf16.msra.mxu0 %v2232
    %2816 = vmatpush.bf16.msra.mxu0 %v2225
    %2817 = vmatpush.bf16.msra.mxu0 %v2218
    %2818 = vmatpush.bf16.msra.mxu0 %v2211
    %2819 = vmatpush.bf16.msra.mxu0 %v2204
    %2820 = vmatpush.bf16.msra.mxu0 %v2197
    %2821 = vmatmul.bf16.gmra.mxu0 %v620
    %v2822 = vpop.f32.mrf.mxu0
    %v2823 = vadd.f32 %v2810, %v2822
    %v2824 = vpop.f32.mrf.mxu0
    %2825 = vdwg.mxu0
    %2826 = vmatpush.bf16.msra.mxu0 %v1911
    %2827 = vmatpush.bf16.msra.mxu0 %v1904
    %2828 = vmatpush.bf16.msra.mxu0 %v1897
    %2829 = vmatpush.bf16.msra.mxu0 %v1890
    %2830 = vmatpush.bf16.msra.mxu0 %v1883
    %2831 = vmatpush.bf16.msra.mxu0 %v1876
    %2832 = vmatpush.bf16.msra.mxu0 %v1869
    %2833 = vmatpush.bf16.msra.mxu0 %v1862
    %2834 = vmatmul.bf16.gmra.mxu0 %v614
    %v2835 = vpop.f32.mrf.mxu0
    %v2836 = vadd.f32 %v591, %v2835
    %v2837 = vpop.f32.mrf.mxu0
    %2838 = vdwg.mxu0
    %2839 = vmatpush.bf16.msra.mxu0 %v1967
    %2840 = vmatpush.bf16.msra.mxu0 %v1960
    %2841 = vmatpush.bf16.msra.mxu0 %v1953
    %2842 = vmatpush.bf16.msra.mxu0 %v1946
    %2843 = vmatpush.bf16.msra.mxu0 %v1939
    %2844 = vmatpush.bf16.msra.mxu0 %v1932
    %2845 = vmatpush.bf16.msra.mxu0 %v1925
    %2846 = vmatpush.bf16.msra.mxu0 %v1918
    %2847 = vmatmul.bf16.gmra.mxu0 %v615
    %v2848 = vpop.f32.mrf.mxu0
    %v2849 = vadd.f32 %v2836, %v2848
    %v2850 = vpop.f32.mrf.mxu0
    %2851 = vdwg.mxu0
    %2852 = vmatpush.bf16.msra.mxu0 %v2023
    %2853 = vmatpush.bf16.msra.mxu0 %v2016
    %2854 = vmatpush.bf16.msra.mxu0 %v2009
    %2855 = vmatpush.bf16.msra.mxu0 %v2002
    %2856 = vmatpush.bf16.msra.mxu0 %v1995
    %2857 = vmatpush.bf16.msra.mxu0 %v1988
    %2858 = vmatpush.bf16.msra.mxu0 %v1981
    %2859 = vmatpush.bf16.msra.mxu0 %v1974
    %2860 = vmatmul.bf16.gmra.mxu0 %v616
    %v2861 = vpop.f32.mrf.mxu0
    %v2862 = vadd.f32 %v2849, %v2861
    %v2863 = vpop.f32.mrf.mxu0
    %2864 = vdwg.mxu0
    %2865 = vmatpush.bf16.msra.mxu0 %v2079
    %2866 = vmatpush.bf16.msra.mxu0 %v2072
    %2867 = vmatpush.bf16.msra.mxu0 %v2065
    %2868 = vmatpush.bf16.msra.mxu0 %v2058
    %2869 = vmatpush.bf16.msra.mxu0 %v2051
    %2870 = vmatpush.bf16.msra.mxu0 %v2044
    %2871 = vmatpush.bf16.msra.mxu0 %v2037
    %2872 = vmatpush.bf16.msra.mxu0 %v2030
    %2873 = vmatmul.bf16.gmra.mxu0 %v617
    %v2874 = vpop.f32.mrf.mxu0
    %v2875 = vadd.f32 %v2862, %v2874
    %v2876 = vpop.f32.mrf.mxu0
    %2877 = vdwg.mxu0
    %2878 = vmatpush.bf16.msra.mxu0 %v2135
    %2879 = vmatpush.bf16.msra.mxu0 %v2128
    %2880 = vmatpush.bf16.msra.mxu0 %v2121
    %2881 = vmatpush.bf16.msra.mxu0 %v2114
    %2882 = vmatpush.bf16.msra.mxu0 %v2107
    %2883 = vmatpush.bf16.msra.mxu0 %v2100
    %2884 = vmatpush.bf16.msra.mxu0 %v2093
    %2885 = vmatpush.bf16.msra.mxu0 %v2086
    %2886 = vmatmul.bf16.gmra.mxu0 %v618
    %v2887 = vpop.f32.mrf.mxu0
    %v2888 = vadd.f32 %v2875, %v2887
    %v2889 = vpop.f32.mrf.mxu0
    %2890 = vdwg.mxu0
    %2891 = vmatpush.bf16.msra.mxu0 %v2191
    %2892 = vmatpush.bf16.msra.mxu0 %v2184
    %2893 = vmatpush.bf16.msra.mxu0 %v2177
    %2894 = vmatpush.bf16.msra.mxu0 %v2170
    %2895 = vmatpush.bf16.msra.mxu0 %v2163
    %2896 = vmatpush.bf16.msra.mxu0 %v2156
    %2897 = vmatpush.bf16.msra.mxu0 %v2149
    %2898 = vmatpush.bf16.msra.mxu0 %v2142
    %2899 = vmatmul.bf16.gmra.mxu0 %v619
    %v2900 = vpop.f32.mrf.mxu0
    %v2901 = vadd.f32 %v2888, %v2900
    %v2902 = vpop.f32.mrf.mxu0
    %2903 = vdwg.mxu0
    %2904 = vmatpush.bf16.msra.mxu0 %v2247
    %2905 = vmatpush.bf16.msra.mxu0 %v2240
    %2906 = vmatpush.bf16.msra.mxu0 %v2233
    %2907 = vmatpush.bf16.msra.mxu0 %v2226
    %2908 = vmatpush.bf16.msra.mxu0 %v2219
    %2909 = vmatpush.bf16.msra.mxu0 %v2212
    %2910 = vmatpush.bf16.msra.mxu0 %v2205
    %2911 = vmatpush.bf16.msra.mxu0 %v2198
    %2912 = vmatmul.bf16.gmra.mxu0 %v620
    %v2913 = vpop.f32.mrf.mxu0
    %v2914 = vadd.f32 %v2901, %v2913
    %v2915 = vpop.f32.mrf.mxu0
    %2916 = vdwg.mxu0
    %2917 = vmatpush.bf16.msra.mxu0 %v1912
    %2918 = vmatpush.bf16.msra.mxu0 %v1905
    %2919 = vmatpush.bf16.msra.mxu0 %v1898
    %2920 = vmatpush.bf16.msra.mxu0 %v1891
    %2921 = vmatpush.bf16.msra.mxu0 %v1884
    %2922 = vmatpush.bf16.msra.mxu0 %v1877
    %2923 = vmatpush.bf16.msra.mxu0 %v1870
    %2924 = vmatpush.bf16.msra.mxu0 %v1863
    %2925 = vmatmul.bf16.gmra.mxu0 %v614
    %v2926 = vpop.f32.mrf.mxu0
    %v2927 = vadd.f32 %v592, %v2926
    %v2928 = vpop.f32.mrf.mxu0
    %2929 = vdwg.mxu0
    %2930 = vmatpush.bf16.msra.mxu0 %v1968
    %2931 = vmatpush.bf16.msra.mxu0 %v1961
    %2932 = vmatpush.bf16.msra.mxu0 %v1954
    %2933 = vmatpush.bf16.msra.mxu0 %v1947
    %2934 = vmatpush.bf16.msra.mxu0 %v1940
    %2935 = vmatpush.bf16.msra.mxu0 %v1933
    %2936 = vmatpush.bf16.msra.mxu0 %v1926
    %2937 = vmatpush.bf16.msra.mxu0 %v1919
    %2938 = vmatmul.bf16.gmra.mxu0 %v615
    %v2939 = vpop.f32.mrf.mxu0
    %v2940 = vadd.f32 %v2927, %v2939
    %v2941 = vpop.f32.mrf.mxu0
    %2942 = vdwg.mxu0
    %2943 = vmatpush.bf16.msra.mxu0 %v2024
    %2944 = vmatpush.bf16.msra.mxu0 %v2017
    %2945 = vmatpush.bf16.msra.mxu0 %v2010
    %2946 = vmatpush.bf16.msra.mxu0 %v2003
    %2947 = vmatpush.bf16.msra.mxu0 %v1996
    %2948 = vmatpush.bf16.msra.mxu0 %v1989
    %2949 = vmatpush.bf16.msra.mxu0 %v1982
    %2950 = vmatpush.bf16.msra.mxu0 %v1975
    %2951 = vmatmul.bf16.gmra.mxu0 %v616
    %v2952 = vpop.f32.mrf.mxu0
    %v2953 = vadd.f32 %v2940, %v2952
    %v2954 = vpop.f32.mrf.mxu0
    %2955 = vdwg.mxu0
    %2956 = vmatpush.bf16.msra.mxu0 %v2080
    %2957 = vmatpush.bf16.msra.mxu0 %v2073
    %2958 = vmatpush.bf16.msra.mxu0 %v2066
    %2959 = vmatpush.bf16.msra.mxu0 %v2059
    %2960 = vmatpush.bf16.msra.mxu0 %v2052
    %2961 = vmatpush.bf16.msra.mxu0 %v2045
    %2962 = vmatpush.bf16.msra.mxu0 %v2038
    %2963 = vmatpush.bf16.msra.mxu0 %v2031
    %2964 = vmatmul.bf16.gmra.mxu0 %v617
    %v2965 = vpop.f32.mrf.mxu0
    %v2966 = vadd.f32 %v2953, %v2965
    %v2967 = vpop.f32.mrf.mxu0
    %2968 = vdwg.mxu0
    %2969 = vmatpush.bf16.msra.mxu0 %v2136
    %2970 = vmatpush.bf16.msra.mxu0 %v2129
    %2971 = vmatpush.bf16.msra.mxu0 %v2122
    %2972 = vmatpush.bf16.msra.mxu0 %v2115
    %2973 = vmatpush.bf16.msra.mxu0 %v2108
    %2974 = vmatpush.bf16.msra.mxu0 %v2101
    %2975 = vmatpush.bf16.msra.mxu0 %v2094
    %2976 = vmatpush.bf16.msra.mxu0 %v2087
    %2977 = vmatmul.bf16.gmra.mxu0 %v618
    %v2978 = vpop.f32.mrf.mxu0
    %v2979 = vadd.f32 %v2966, %v2978
    %v2980 = vpop.f32.mrf.mxu0
    %2981 = vdwg.mxu0
    %2982 = vmatpush.bf16.msra.mxu0 %v2192
    %2983 = vmatpush.bf16.msra.mxu0 %v2185
    %2984 = vmatpush.bf16.msra.mxu0 %v2178
    %2985 = vmatpush.bf16.msra.mxu0 %v2171
    %2986 = vmatpush.bf16.msra.mxu0 %v2164
    %2987 = vmatpush.bf16.msra.mxu0 %v2157
    %2988 = vmatpush.bf16.msra.mxu0 %v2150
    %2989 = vmatpush.bf16.msra.mxu0 %v2143
    %2990 = vmatmul.bf16.gmra.mxu0 %v619
    %v2991 = vpop.f32.mrf.mxu0
    %v2992 = vadd.f32 %v2979, %v2991
    %v2993 = vpop.f32.mrf.mxu0
    %2994 = vdwg.mxu0
    %2995 = vmatpush.bf16.msra.mxu0 %v2248
    %2996 = vmatpush.bf16.msra.mxu0 %v2241
    %2997 = vmatpush.bf16.msra.mxu0 %v2234
    %2998 = vmatpush.bf16.msra.mxu0 %v2227
    %2999 = vmatpush.bf16.msra.mxu0 %v2220
    %3000 = vmatpush.bf16.msra.mxu0 %v2213
    %3001 = vmatpush.bf16.msra.mxu0 %v2206
    %3002 = vmatpush.bf16.msra.mxu0 %v2199
    %3003 = vmatmul.bf16.gmra.mxu0 %v620
    %v3004 = vpop.f32.mrf.mxu0
    %v3005 = vadd.f32 %v2992, %v3004
    %v3006 = vpop.f32.mrf.mxu0
    %3007 = vdwg.mxu0
    %3008 = vmatpush.bf16.msra.mxu0 %v1913
    %3009 = vmatpush.bf16.msra.mxu0 %v1906
    %3010 = vmatpush.bf16.msra.mxu0 %v1899
    %3011 = vmatpush.bf16.msra.mxu0 %v1892
    %3012 = vmatpush.bf16.msra.mxu0 %v1885
    %3013 = vmatpush.bf16.msra.mxu0 %v1878
    %3014 = vmatpush.bf16.msra.mxu0 %v1871
    %3015 = vmatpush.bf16.msra.mxu0 %v1864
    %3016 = vmatmul.bf16.gmra.mxu0 %v614
    %v3017 = vpop.f32.mrf.mxu0
    %v3018 = vadd.f32 %v593, %v3017
    %v3019 = vpop.f32.mrf.mxu0
    %3020 = vdwg.mxu0
    %3021 = vmatpush.bf16.msra.mxu0 %v1969
    %3022 = vmatpush.bf16.msra.mxu0 %v1962
    %3023 = vmatpush.bf16.msra.mxu0 %v1955
    %3024 = vmatpush.bf16.msra.mxu0 %v1948
    %3025 = vmatpush.bf16.msra.mxu0 %v1941
    %3026 = vmatpush.bf16.msra.mxu0 %v1934
    %3027 = vmatpush.bf16.msra.mxu0 %v1927
    %3028 = vmatpush.bf16.msra.mxu0 %v1920
    %3029 = vmatmul.bf16.gmra.mxu0 %v615
    %v3030 = vpop.f32.mrf.mxu0
    %v3031 = vadd.f32 %v3018, %v3030
    %v3032 = vpop.f32.mrf.mxu0
    %3033 = vdwg.mxu0
    %3034 = vmatpush.bf16.msra.mxu0 %v2025
    %3035 = vmatpush.bf16.msra.mxu0 %v2018
    %3036 = vmatpush.bf16.msra.mxu0 %v2011
    %3037 = vmatpush.bf16.msra.mxu0 %v2004
    %3038 = vmatpush.bf16.msra.mxu0 %v1997
    %3039 = vmatpush.bf16.msra.mxu0 %v1990
    %3040 = vmatpush.bf16.msra.mxu0 %v1983
    %3041 = vmatpush.bf16.msra.mxu0 %v1976
    %3042 = vmatmul.bf16.gmra.mxu0 %v616
    %v3043 = vpop.f32.mrf.mxu0
    %v3044 = vadd.f32 %v3031, %v3043
    %v3045 = vpop.f32.mrf.mxu0
    %3046 = vdwg.mxu0
    %3047 = vmatpush.bf16.msra.mxu0 %v2081
    %3048 = vmatpush.bf16.msra.mxu0 %v2074
    %3049 = vmatpush.bf16.msra.mxu0 %v2067
    %3050 = vmatpush.bf16.msra.mxu0 %v2060
    %3051 = vmatpush.bf16.msra.mxu0 %v2053
    %3052 = vmatpush.bf16.msra.mxu0 %v2046
    %3053 = vmatpush.bf16.msra.mxu0 %v2039
    %3054 = vmatpush.bf16.msra.mxu0 %v2032
    %3055 = vmatmul.bf16.gmra.mxu0 %v617
    %v3056 = vpop.f32.mrf.mxu0
    %v3057 = vadd.f32 %v3044, %v3056
    %v3058 = vpop.f32.mrf.mxu0
    %3059 = vdwg.mxu0
    %3060 = vmatpush.bf16.msra.mxu0 %v2137
    %3061 = vmatpush.bf16.msra.mxu0 %v2130
    %3062 = vmatpush.bf16.msra.mxu0 %v2123
    %3063 = vmatpush.bf16.msra.mxu0 %v2116
    %3064 = vmatpush.bf16.msra.mxu0 %v2109
    %3065 = vmatpush.bf16.msra.mxu0 %v2102
    %3066 = vmatpush.bf16.msra.mxu0 %v2095
    %3067 = vmatpush.bf16.msra.mxu0 %v2088
    %3068 = vmatmul.bf16.gmra.mxu0 %v618
    %v3069 = vpop.f32.mrf.mxu0
    %v3070 = vadd.f32 %v3057, %v3069
    %v3071 = vpop.f32.mrf.mxu0
    %3072 = vdwg.mxu0
    %3073 = vmatpush.bf16.msra.mxu0 %v2193
    %3074 = vmatpush.bf16.msra.mxu0 %v2186
    %3075 = vmatpush.bf16.msra.mxu0 %v2179
    %3076 = vmatpush.bf16.msra.mxu0 %v2172
    %3077 = vmatpush.bf16.msra.mxu0 %v2165
    %3078 = vmatpush.bf16.msra.mxu0 %v2158
    %3079 = vmatpush.bf16.msra.mxu0 %v2151
    %3080 = vmatpush.bf16.msra.mxu0 %v2144
    %3081 = vmatmul.bf16.gmra.mxu0 %v619
    %v3082 = vpop.f32.mrf.mxu0
    %v3083 = vadd.f32 %v3070, %v3082
    %v3084 = vpop.f32.mrf.mxu0
    %3085 = vdwg.mxu0
    %3086 = vmatpush.bf16.msra.mxu0 %v2249
    %3087 = vmatpush.bf16.msra.mxu0 %v2242
    %3088 = vmatpush.bf16.msra.mxu0 %v2235
    %3089 = vmatpush.bf16.msra.mxu0 %v2228
    %3090 = vmatpush.bf16.msra.mxu0 %v2221
    %3091 = vmatpush.bf16.msra.mxu0 %v2214
    %3092 = vmatpush.bf16.msra.mxu0 %v2207
    %3093 = vmatpush.bf16.msra.mxu0 %v2200
    %3094 = vmatmul.bf16.gmra.mxu0 %v620
    %v3095 = vpop.f32.mrf.mxu0
    %v3096 = vadd.f32 %v3083, %v3095
    %v3097 = vpop.f32.mrf.mxu0
    %3098 = vdwg.mxu0
    %3099 = vmatpush.bf16.msra.mxu0 %v1914
    %3100 = vmatpush.bf16.msra.mxu0 %v1907
    %3101 = vmatpush.bf16.msra.mxu0 %v1900
    %3102 = vmatpush.bf16.msra.mxu0 %v1893
    %3103 = vmatpush.bf16.msra.mxu0 %v1886
    %3104 = vmatpush.bf16.msra.mxu0 %v1879
    %3105 = vmatpush.bf16.msra.mxu0 %v1872
    %3106 = vmatpush.bf16.msra.mxu0 %v1865
    %3107 = vmatmul.bf16.gmra.mxu0 %v614
    %v3108 = vpop.f32.mrf.mxu0
    %v3109 = vadd.f32 %v594, %v3108
    %v3110 = vpop.f32.mrf.mxu0
    %3111 = vdwg.mxu0
    %3112 = vmatpush.bf16.msra.mxu0 %v1970
    %3113 = vmatpush.bf16.msra.mxu0 %v1963
    %3114 = vmatpush.bf16.msra.mxu0 %v1956
    %3115 = vmatpush.bf16.msra.mxu0 %v1949
    %3116 = vmatpush.bf16.msra.mxu0 %v1942
    %3117 = vmatpush.bf16.msra.mxu0 %v1935
    %3118 = vmatpush.bf16.msra.mxu0 %v1928
    %3119 = vmatpush.bf16.msra.mxu0 %v1921
    %3120 = vmatmul.bf16.gmra.mxu0 %v615
    %v3121 = vpop.f32.mrf.mxu0
    %v3122 = vadd.f32 %v3109, %v3121
    %v3123 = vpop.f32.mrf.mxu0
    %3124 = vdwg.mxu0
    %3125 = vmatpush.bf16.msra.mxu0 %v2026
    %3126 = vmatpush.bf16.msra.mxu0 %v2019
    %3127 = vmatpush.bf16.msra.mxu0 %v2012
    %3128 = vmatpush.bf16.msra.mxu0 %v2005
    %3129 = vmatpush.bf16.msra.mxu0 %v1998
    %3130 = vmatpush.bf16.msra.mxu0 %v1991
    %3131 = vmatpush.bf16.msra.mxu0 %v1984
    %3132 = vmatpush.bf16.msra.mxu0 %v1977
    %3133 = vmatmul.bf16.gmra.mxu0 %v616
    %v3134 = vpop.f32.mrf.mxu0
    %v3135 = vadd.f32 %v3122, %v3134
    %v3136 = vpop.f32.mrf.mxu0
    %3137 = vdwg.mxu0
    %3138 = vmatpush.bf16.msra.mxu0 %v2082
    %3139 = vmatpush.bf16.msra.mxu0 %v2075
    %3140 = vmatpush.bf16.msra.mxu0 %v2068
    %3141 = vmatpush.bf16.msra.mxu0 %v2061
    %3142 = vmatpush.bf16.msra.mxu0 %v2054
    %3143 = vmatpush.bf16.msra.mxu0 %v2047
    %3144 = vmatpush.bf16.msra.mxu0 %v2040
    %3145 = vmatpush.bf16.msra.mxu0 %v2033
    %3146 = vmatmul.bf16.gmra.mxu0 %v617
    %v3147 = vpop.f32.mrf.mxu0
    %v3148 = vadd.f32 %v3135, %v3147
    %v3149 = vpop.f32.mrf.mxu0
    %3150 = vdwg.mxu0
    %3151 = vmatpush.bf16.msra.mxu0 %v2138
    %3152 = vmatpush.bf16.msra.mxu0 %v2131
    %3153 = vmatpush.bf16.msra.mxu0 %v2124
    %3154 = vmatpush.bf16.msra.mxu0 %v2117
    %3155 = vmatpush.bf16.msra.mxu0 %v2110
    %3156 = vmatpush.bf16.msra.mxu0 %v2103
    %3157 = vmatpush.bf16.msra.mxu0 %v2096
    %3158 = vmatpush.bf16.msra.mxu0 %v2089
    %3159 = vmatmul.bf16.gmra.mxu0 %v618
    %v3160 = vpop.f32.mrf.mxu0
    %v3161 = vadd.f32 %v3148, %v3160
    %v3162 = vpop.f32.mrf.mxu0
    %3163 = vdwg.mxu0
    %3164 = vmatpush.bf16.msra.mxu0 %v2194
    %3165 = vmatpush.bf16.msra.mxu0 %v2187
    %3166 = vmatpush.bf16.msra.mxu0 %v2180
    %3167 = vmatpush.bf16.msra.mxu0 %v2173
    %3168 = vmatpush.bf16.msra.mxu0 %v2166
    %3169 = vmatpush.bf16.msra.mxu0 %v2159
    %3170 = vmatpush.bf16.msra.mxu0 %v2152
    %3171 = vmatpush.bf16.msra.mxu0 %v2145
    %3172 = vmatmul.bf16.gmra.mxu0 %v619
    %v3173 = vpop.f32.mrf.mxu0
    %v3174 = vadd.f32 %v3161, %v3173
    %v3175 = vpop.f32.mrf.mxu0
    %3176 = vdwg.mxu0
    %3177 = vmatpush.bf16.msra.mxu0 %v2250
    %3178 = vmatpush.bf16.msra.mxu0 %v2243
    %3179 = vmatpush.bf16.msra.mxu0 %v2236
    %3180 = vmatpush.bf16.msra.mxu0 %v2229
    %3181 = vmatpush.bf16.msra.mxu0 %v2222
    %3182 = vmatpush.bf16.msra.mxu0 %v2215
    %3183 = vmatpush.bf16.msra.mxu0 %v2208
    %3184 = vmatpush.bf16.msra.mxu0 %v2201
    %3185 = vmatmul.bf16.gmra.mxu0 %v620
    %v3186 = vpop.f32.mrf.mxu0
    %v3187 = vadd.f32 %v3174, %v3186
    %v3188 = vpop.f32.mrf.mxu0
    %3189 = vdwg.mxu0
    %3190 = vmatpush.bf16.msra.mxu0 %v1915
    %3191 = vmatpush.bf16.msra.mxu0 %v1908
    %3192 = vmatpush.bf16.msra.mxu0 %v1901
    %3193 = vmatpush.bf16.msra.mxu0 %v1894
    %3194 = vmatpush.bf16.msra.mxu0 %v1887
    %3195 = vmatpush.bf16.msra.mxu0 %v1880
    %3196 = vmatpush.bf16.msra.mxu0 %v1873
    %3197 = vmatpush.bf16.msra.mxu0 %v1866
    %3198 = vmatmul.bf16.gmra.mxu0 %v614
    %v3199 = vpop.f32.mrf.mxu0
    %v3200 = vadd.f32 %v595, %v3199
    %v3201 = vpop.f32.mrf.mxu0
    %3202 = vdwg.mxu0
    %3203 = vmatpush.bf16.msra.mxu0 %v1971
    %3204 = vmatpush.bf16.msra.mxu0 %v1964
    %3205 = vmatpush.bf16.msra.mxu0 %v1957
    %3206 = vmatpush.bf16.msra.mxu0 %v1950
    %3207 = vmatpush.bf16.msra.mxu0 %v1943
    %3208 = vmatpush.bf16.msra.mxu0 %v1936
    %3209 = vmatpush.bf16.msra.mxu0 %v1929
    %3210 = vmatpush.bf16.msra.mxu0 %v1922
    %3211 = vmatmul.bf16.gmra.mxu0 %v615
    %v3212 = vpop.f32.mrf.mxu0
    %v3213 = vadd.f32 %v3200, %v3212
    %v3214 = vpop.f32.mrf.mxu0
    %3215 = vdwg.mxu0
    %3216 = vmatpush.bf16.msra.mxu0 %v2027
    %3217 = vmatpush.bf16.msra.mxu0 %v2020
    %3218 = vmatpush.bf16.msra.mxu0 %v2013
    %3219 = vmatpush.bf16.msra.mxu0 %v2006
    %3220 = vmatpush.bf16.msra.mxu0 %v1999
    %3221 = vmatpush.bf16.msra.mxu0 %v1992
    %3222 = vmatpush.bf16.msra.mxu0 %v1985
    %3223 = vmatpush.bf16.msra.mxu0 %v1978
    %3224 = vmatmul.bf16.gmra.mxu0 %v616
    %v3225 = vpop.f32.mrf.mxu0
    %v3226 = vadd.f32 %v3213, %v3225
    %v3227 = vpop.f32.mrf.mxu0
    %3228 = vdwg.mxu0
    %3229 = vmatpush.bf16.msra.mxu0 %v2083
    %3230 = vmatpush.bf16.msra.mxu0 %v2076
    %3231 = vmatpush.bf16.msra.mxu0 %v2069
    %3232 = vmatpush.bf16.msra.mxu0 %v2062
    %3233 = vmatpush.bf16.msra.mxu0 %v2055
    %3234 = vmatpush.bf16.msra.mxu0 %v2048
    %3235 = vmatpush.bf16.msra.mxu0 %v2041
    %3236 = vmatpush.bf16.msra.mxu0 %v2034
    %3237 = vmatmul.bf16.gmra.mxu0 %v617
    %v3238 = vpop.f32.mrf.mxu0
    %v3239 = vadd.f32 %v3226, %v3238
    %v3240 = vpop.f32.mrf.mxu0
    %3241 = vdwg.mxu0
    %3242 = vmatpush.bf16.msra.mxu0 %v2139
    %3243 = vmatpush.bf16.msra.mxu0 %v2132
    %3244 = vmatpush.bf16.msra.mxu0 %v2125
    %3245 = vmatpush.bf16.msra.mxu0 %v2118
    %3246 = vmatpush.bf16.msra.mxu0 %v2111
    %3247 = vmatpush.bf16.msra.mxu0 %v2104
    %3248 = vmatpush.bf16.msra.mxu0 %v2097
    %3249 = vmatpush.bf16.msra.mxu0 %v2090
    %3250 = vmatmul.bf16.gmra.mxu0 %v618
    %v3251 = vpop.f32.mrf.mxu0
    %v3252 = vadd.f32 %v3239, %v3251
    %v3253 = vpop.f32.mrf.mxu0
    %3254 = vdwg.mxu0
    %3255 = vmatpush.bf16.msra.mxu0 %v2195
    %3256 = vmatpush.bf16.msra.mxu0 %v2188
    %3257 = vmatpush.bf16.msra.mxu0 %v2181
    %3258 = vmatpush.bf16.msra.mxu0 %v2174
    %3259 = vmatpush.bf16.msra.mxu0 %v2167
    %3260 = vmatpush.bf16.msra.mxu0 %v2160
    %3261 = vmatpush.bf16.msra.mxu0 %v2153
    %3262 = vmatpush.bf16.msra.mxu0 %v2146
    %3263 = vmatmul.bf16.gmra.mxu0 %v619
    %v3264 = vpop.f32.mrf.mxu0
    %v3265 = vadd.f32 %v3252, %v3264
    %v3266 = vpop.f32.mrf.mxu0
    %3267 = vdwg.mxu0
    %3268 = vmatpush.bf16.msra.mxu0 %v2251
    %3269 = vmatpush.bf16.msra.mxu0 %v2244
    %3270 = vmatpush.bf16.msra.mxu0 %v2237
    %3271 = vmatpush.bf16.msra.mxu0 %v2230
    %3272 = vmatpush.bf16.msra.mxu0 %v2223
    %3273 = vmatpush.bf16.msra.mxu0 %v2216
    %3274 = vmatpush.bf16.msra.mxu0 %v2209
    %3275 = vmatpush.bf16.msra.mxu0 %v2202
    %3276 = vmatmul.bf16.gmra.mxu0 %v620
    %v3277 = vpop.f32.mrf.mxu0
    %v3278 = vadd.f32 %v3265, %v3277
    %v3279 = vpop.f32.mrf.mxu0
    %3280 = vdwg.mxu0
    %v3281 = vmax.f32 %v2732, 0.0
    %v3282 = vmax.f32 %v2823, 0.0
    %v3283 = vmax.f32 %v2914, 0.0
    %v3284 = vmax.f32 %v3005, 0.0
    %v3285 = vmax.f32 %v3096, 0.0
    %v3286 = vmax.f32 %v3187, 0.0
    %v3287 = vmax.f32 %v3278, 0.0
    %v3288 = vpack.c.bf16 %v3281, %v3281
    %v3289 = vpack.c.bf16 %v3282, %v3282
    %v3290 = vpack.c.bf16 %v3283, %v3283
    %v3291 = vpack.c.bf16 %v3284, %v3284
    %v3292 = vpack.c.bf16 %v3285, %v3285
    %v3293 = vpack.c.bf16 %v3286, %v3286
    %v3294 = vpack.c.bf16 %v3287, %v3287
    %v3295 = vld [vmem:[#allocation6] sm:$0xff]
    %v3296 = vld [vmem:[#allocation6 + $0x8] sm:$0xff]
    %v3297 = vld [vmem:[#allocation6 + $0x10] sm:$0xff]
    %v3298 = vld [vmem:[#allocation6 + $0x18] sm:$0xff]
    %v3299 = vld [vmem:[#allocation6 + $0x20] sm:$0xff]
    %v3300 = vld [vmem:[#allocation6 + $0x28] sm:$0xff]
    %v3301 = vld [vmem:[#allocation6 + $0x30] sm:$0xff]
    %v3302 = vld [vmem:[#allocation6 + $0x38] sm:$0xff]
    %v3303 = vld [vmem:[#allocation6 + $0x40] sm:$0xff]
    %v3304 = vld [vmem:[#allocation6 + $0x48] sm:$0xff]
    %v3305 = vld [vmem:[#allocation6 + $0x50] sm:$0xff]
    %v3306 = vld [vmem:[#allocation6 + $0x58] sm:$0xff]
    %v3307 = vld [vmem:[#allocation6 + $0x60] sm:$0xff]
    %v3308 = vld [vmem:[#allocation6 + $0x68] sm:$0xff]
    %v3309 = vld [vmem:[#allocation6 + $0x70] sm:$0xff]
    %v3310 = vld [vmem:[#allocation6 + $0x78] sm:$0xff]
    %v3311 = vld [vmem:[#allocation6 + $0x80] sm:$0xff]
    %v3312 = vld [vmem:[#allocation6 + $0x88] sm:$0xff]
    %v3313 = vld [vmem:[#allocation6 + $0x90] sm:$0xff]
    %v3314 = vld [vmem:[#allocation6 + $0x98] sm:$0xff]
    %v3315 = vld [vmem:[#allocation6 + $0xa0] sm:$0xff]
    %v3316 = vld [vmem:[#allocation6 + $0xa8] sm:$0xff]
    %v3317 = vld [vmem:[#allocation6 + $0xb0] sm:$0xff]
    %v3318 = vld [vmem:[#allocation6 + $0xb8] sm:$0xff]
    %v3319 = vld [vmem:[#allocation6 + $0xc0] sm:$0xff]
    %v3320 = vld [vmem:[#allocation6 + $0xc8] sm:$0xff]
    %v3321 = vld [vmem:[#allocation6 + $0xd0] sm:$0xff]
    %v3322 = vld [vmem:[#allocation6 + $0xd8] sm:$0xff]
    %v3323 = vld [vmem:[#allocation6 + $0xe0] sm:$0xff]
    %v3324 = vld [vmem:[#allocation6 + $0xe8] sm:$0xff]
    %v3325 = vld [vmem:[#allocation6 + $0xf0] sm:$0xff]
    %v3326 = vld [vmem:[#allocation6 + $0xf8] sm:$0xff]
    %v3327 = vld [vmem:[#allocation6 + $0x100] sm:$0xff]
    %v3328 = vld [vmem:[#allocation6 + $0x108] sm:$0xff]
    %v3329 = vld [vmem:[#allocation6 + $0x110] sm:$0xff]
    %v3330 = vld [vmem:[#allocation6 + $0x118] sm:$0xff]
    %v3331 = vld [vmem:[#allocation6 + $0x120] sm:$0xff]
    %v3332 = vld [vmem:[#allocation6 + $0x128] sm:$0xff]
    %v3333 = vld [vmem:[#allocation6 + $0x130] sm:$0xff]
    %v3334 = vld [vmem:[#allocation6 + $0x138] sm:$0xff]
    %v3335 = vld [vmem:[#allocation6 + $0x140] sm:$0xff]
    %v3336 = vld [vmem:[#allocation6 + $0x148] sm:$0xff]
    %v3337 = vld [vmem:[#allocation6 + $0x150] sm:$0xff]
    %v3338 = vld [vmem:[#allocation6 + $0x158] sm:$0xff]
    %v3339 = vld [vmem:[#allocation6 + $0x160] sm:$0xff]
    %v3340 = vld [vmem:[#allocation6 + $0x168] sm:$0xff]
    %v3341 = vld [vmem:[#allocation6 + $0x170] sm:$0xff]
    %v3342 = vld [vmem:[#allocation6 + $0x178] sm:$0xff]
    %v3343 = vld [vmem:[#allocation6 + $0x180] sm:$0xff]
    %v3344 = vld [vmem:[#allocation6 + $0x188] sm:$0xff]
    %v3345 = vld [vmem:[#allocation6 + $0x190] sm:$0xff]
    %v3346 = vld [vmem:[#allocation6 + $0x198] sm:$0xff]
    %v3347 = vld [vmem:[#allocation6 + $0x1a0] sm:$0xff]
    %v3348 = vld [vmem:[#allocation6 + $0x1a8] sm:$0xff]
    %v3349 = vld [vmem:[#allocation6 + $0x1b0] sm:$0xff]
    %v3350 = vld [vmem:[#allocation6 + $0x1b8] sm:$0xff]
    %v3351 = vld [vmem:[#allocation6 + $0x1c0] sm:$0xff]
    %v3352 = vld [vmem:[#allocation6 + $0x1c8] sm:$0xff]
    %v3353 = vld [vmem:[#allocation6 + $0x1d0] sm:$0xff]
    %v3354 = vld [vmem:[#allocation6 + $0x1d8] sm:$0xff]
    %v3355 = vld [vmem:[#allocation6 + $0x1e0] sm:$0xff]
    %v3356 = vld [vmem:[#allocation6 + $0x1e8] sm:$0xff]
    %v3357 = vld [vmem:[#allocation6 + $0x1f0] sm:$0xff]
    %v3358 = vld [vmem:[#allocation6 + $0x1f8] sm:$0xff]
    %v3359 = vld [vmem:[#allocation6 + $0x200] sm:$0xff]
    %v3360 = vld [vmem:[#allocation6 + $0x208] sm:$0xff]
    %v3361 = vld [vmem:[#allocation6 + $0x210] sm:$0xff]
    %v3362 = vld [vmem:[#allocation6 + $0x218] sm:$0xff]
    %v3363 = vld [vmem:[#allocation6 + $0x220] sm:$0xff]
    %v3364 = vld [vmem:[#allocation6 + $0x228] sm:$0xff]
    %v3365 = vld [vmem:[#allocation6 + $0x230] sm:$0xff]
    %v3366 = vld [vmem:[#allocation6 + $0x238] sm:$0xff]
    %v3367 = vld [vmem:[#allocation6 + $0x240] sm:$0xff]
    %v3368 = vld [vmem:[#allocation6 + $0x248] sm:$0xff]
    %v3369 = vld [vmem:[#allocation6 + $0x250] sm:$0xff]
    %v3370 = vld [vmem:[#allocation6 + $0x258] sm:$0xff]
    %v3371 = vld [vmem:[#allocation6 + $0x260] sm:$0xff]
    %v3372 = vld [vmem:[#allocation6 + $0x268] sm:$0xff]
    %v3373 = vld [vmem:[#allocation6 + $0x270] sm:$0xff]
    %v3374 = vld [vmem:[#allocation6 + $0x278] sm:$0xff]
    %v3375 = vld [vmem:[#allocation6 + $0x280] sm:$0xff]
    %v3376 = vld [vmem:[#allocation6 + $0x288] sm:$0xff]
    %v3377 = vld [vmem:[#allocation6 + $0x290] sm:$0xff]
    %v3378 = vld [vmem:[#allocation6 + $0x298] sm:$0xff]
    %v3379 = vld [vmem:[#allocation6 + $0x2a0] sm:$0xff]
    %v3380 = vld [vmem:[#allocation6 + $0x2a8] sm:$0xff]
    %v3381 = vld [vmem:[#allocation6 + $0x2b0] sm:$0xff]
    %v3382 = vld [vmem:[#allocation6 + $0x2b8] sm:$0xff]
    %v3383 = vld [vmem:[#allocation6 + $0x2c0] sm:$0xff]
    %v3384 = vld [vmem:[#allocation6 + $0x2c8] sm:$0xff]
    %v3385 = vld [vmem:[#allocation6 + $0x2d0] sm:$0xff]
    %v3386 = vld [vmem:[#allocation6 + $0x2d8] sm:$0xff]
    %v3387 = vld [vmem:[#allocation6 + $0x2e0] sm:$0xff]
    %v3388 = vld [vmem:[#allocation6 + $0x2e8] sm:$0xff]
    %v3389 = vld [vmem:[#allocation6 + $0x2f0] sm:$0xff]
    %v3390 = vld [vmem:[#allocation6 + $0x2f8] sm:$0xff]
    %v3391 = vld [vmem:[#allocation6 + $0x300] sm:$0xff]
    %v3392 = vld [vmem:[#allocation6 + $0x308] sm:$0xff]
    %v3393 = vld [vmem:[#allocation6 + $0x310] sm:$0xff]
    %v3394 = vld [vmem:[#allocation6 + $0x318] sm:$0xff]
    %v3395 = vld [vmem:[#allocation6 + $0x320] sm:$0xff]
    %v3396 = vld [vmem:[#allocation6 + $0x328] sm:$0xff]
    %v3397 = vld [vmem:[#allocation6 + $0x330] sm:$0xff]
    %v3398 = vld [vmem:[#allocation6 + $0x338] sm:$0xff]
    %v3399 = vld [vmem:[#allocation6 + $0x340] sm:$0xff]
    %v3400 = vld [vmem:[#allocation6 + $0x348] sm:$0xff]
    %v3401 = vld [vmem:[#allocation6 + $0x350] sm:$0xff]
    %v3402 = vld [vmem:[#allocation6 + $0x358] sm:$0xff]
    %v3403 = vld [vmem:[#allocation6 + $0x360] sm:$0xff]
    %v3404 = vld [vmem:[#allocation6 + $0x368] sm:$0xff]
    %v3405 = vld [vmem:[#allocation6 + $0x370] sm:$0xff]
    %v3406 = vld [vmem:[#allocation6 + $0x378] sm:$0xff]
    %v3407 = vld [vmem:[#allocation6 + $0x380] sm:$0xff]
    %v3408 = vld [vmem:[#allocation6 + $0x388] sm:$0xff]
    %v3409 = vld [vmem:[#allocation6 + $0x390] sm:$0xff]
    %v3410 = vld [vmem:[#allocation6 + $0x398] sm:$0xff]
    %v3411 = vld [vmem:[#allocation6 + $0x3a0] sm:$0xff]
    %v3412 = vld [vmem:[#allocation6 + $0x3a8] sm:$0xff]
    %v3413 = vld [vmem:[#allocation6 + $0x3b0] sm:$0xff]
    %v3414 = vld [vmem:[#allocation6 + $0x3b8] sm:$0xff]
    %v3415 = vld [vmem:[#allocation6 + $0x3c0] sm:$0xff]
    %v3416 = vld [vmem:[#allocation6 + $0x3c8] sm:$0xff]
    %v3417 = vld [vmem:[#allocation6 + $0x3d0] sm:$0xff]
    %v3418 = vld [vmem:[#allocation6 + $0x3d8] sm:$0xff]
    %v3419 = vld [vmem:[#allocation6 + $0x3e0] sm:$0xff]
    %v3420 = vld [vmem:[#allocation6 + $0x3e8] sm:$0xff]
    %v3421 = vld [vmem:[#allocation6 + $0x3f0] sm:$0xff]
    %v3422 = vld [vmem:[#allocation6 + $0x3f8] sm:$0xff]
    %v3423 = vld [vmem:[#allocation6 + $0x400] sm:$0xff]
    %v3424 = vld [vmem:[#allocation6 + $0x408] sm:$0xff]
    %v3425 = vld [vmem:[#allocation6 + $0x410] sm:$0xff]
    %v3426 = vld [vmem:[#allocation6 + $0x418] sm:$0xff]
    %v3427 = vld [vmem:[#allocation6 + $0x420] sm:$0xff]
    %v3428 = vld [vmem:[#allocation6 + $0x428] sm:$0xff]
    %v3429 = vld [vmem:[#allocation6 + $0x430] sm:$0xff]
    %v3430 = vld [vmem:[#allocation6 + $0x438] sm:$0xff]
    %v3431 = vld [vmem:[#allocation6 + $0x440] sm:$0xff]
    %v3432 = vld [vmem:[#allocation6 + $0x448] sm:$0xff]
    %v3433 = vld [vmem:[#allocation6 + $0x450] sm:$0xff]
    %v3434 = vld [vmem:[#allocation6 + $0x458] sm:$0xff]
    %v3435 = vld [vmem:[#allocation6 + $0x460] sm:$0xff]
    %v3436 = vld [vmem:[#allocation6 + $0x468] sm:$0xff]
    %v3437 = vld [vmem:[#allocation6 + $0x470] sm:$0xff]
    %v3438 = vld [vmem:[#allocation6 + $0x478] sm:$0xff]
    %v3439 = vld [vmem:[#allocation6 + $0x480] sm:$0xff]
    %v3440 = vld [vmem:[#allocation6 + $0x488] sm:$0xff]
    %v3441 = vld [vmem:[#allocation6 + $0x490] sm:$0xff]
    %v3442 = vld [vmem:[#allocation6 + $0x498] sm:$0xff]
    %v3443 = vld [vmem:[#allocation6 + $0x4a0] sm:$0xff]
    %v3444 = vld [vmem:[#allocation6 + $0x4a8] sm:$0xff]
    %v3445 = vld [vmem:[#allocation6 + $0x4b0] sm:$0xff]
    %v3446 = vld [vmem:[#allocation6 + $0x4b8] sm:$0xff]
    %v3447 = vld [vmem:[#allocation6 + $0x4c0] sm:$0xff]
    %v3448 = vld [vmem:[#allocation6 + $0x4c8] sm:$0xff]
    %v3449 = vld [vmem:[#allocation6 + $0x4d0] sm:$0xff]
    %v3450 = vld [vmem:[#allocation6 + $0x4d8] sm:$0xff]
    %v3451 = vld [vmem:[#allocation6 + $0x4e0] sm:$0xff]
    %v3452 = vld [vmem:[#allocation6 + $0x4e8] sm:$0xff]
    %v3453 = vld [vmem:[#allocation6 + $0x4f0] sm:$0xff]
    %v3454 = vld [vmem:[#allocation6 + $0x4f8] sm:$0xff]
    %v3455 = vld [vmem:[#allocation6 + $0x500] sm:$0xff]
    %v3456 = vld [vmem:[#allocation6 + $0x508] sm:$0xff]
    %v3457 = vld [vmem:[#allocation6 + $0x510] sm:$0xff]
    %v3458 = vld [vmem:[#allocation6 + $0x518] sm:$0xff]
    %v3459 = vld [vmem:[#allocation6 + $0x520] sm:$0xff]
    %v3460 = vld [vmem:[#allocation6 + $0x528] sm:$0xff]
    %v3461 = vld [vmem:[#allocation6 + $0x530] sm:$0xff]
    %v3462 = vld [vmem:[#allocation6 + $0x538] sm:$0xff]
    %v3463 = vld [vmem:[#allocation6 + $0x540] sm:$0xff]
    %v3464 = vld [vmem:[#allocation6 + $0x548] sm:$0xff]
    %v3465 = vld [vmem:[#allocation6 + $0x550] sm:$0xff]
    %v3466 = vld [vmem:[#allocation6 + $0x558] sm:$0xff]
    %v3467 = vld [vmem:[#allocation6 + $0x560] sm:$0xff]
    %v3468 = vld [vmem:[#allocation6 + $0x568] sm:$0xff]
    %v3469 = vld [vmem:[#allocation6 + $0x570] sm:$0xff]
    %v3470 = vld [vmem:[#allocation6 + $0x578] sm:$0xff]
    %v3471 = vld [vmem:[#allocation6 + $0x580] sm:$0xff]
    %v3472 = vld [vmem:[#allocation6 + $0x588] sm:$0xff]
    %v3473 = vld [vmem:[#allocation6 + $0x590] sm:$0xff]
    %v3474 = vld [vmem:[#allocation6 + $0x598] sm:$0xff]
    %v3475 = vld [vmem:[#allocation6 + $0x5a0] sm:$0xff]
    %v3476 = vld [vmem:[#allocation6 + $0x5a8] sm:$0xff]
    %v3477 = vld [vmem:[#allocation6 + $0x5b0] sm:$0xff]
    %v3478 = vld [vmem:[#allocation6 + $0x5b8] sm:$0xff]
    %v3479 = vld [vmem:[#allocation6 + $0x5c0] sm:$0xff]
    %v3480 = vld [vmem:[#allocation6 + $0x5c8] sm:$0xff]
    %v3481 = vld [vmem:[#allocation6 + $0x5d0] sm:$0xff]
    %v3482 = vld [vmem:[#allocation6 + $0x5d8] sm:$0xff]
    %v3483 = vld [vmem:[#allocation6 + $0x5e0] sm:$0xff]
    %v3484 = vld [vmem:[#allocation6 + $0x5e8] sm:$0xff]
    %v3485 = vld [vmem:[#allocation6 + $0x5f0] sm:$0xff]
    %v3486 = vld [vmem:[#allocation6 + $0x5f8] sm:$0xff]
    %v3487 = vld [vmem:[#allocation6 + $0x600] sm:$0xff]
    %v3488 = vld [vmem:[#allocation6 + $0x608] sm:$0xff]
    %v3489 = vld [vmem:[#allocation6 + $0x610] sm:$0xff]
    %v3490 = vld [vmem:[#allocation6 + $0x618] sm:$0xff]
    %v3491 = vld [vmem:[#allocation6 + $0x620] sm:$0xff]
    %v3492 = vld [vmem:[#allocation6 + $0x628] sm:$0xff]
    %v3493 = vld [vmem:[#allocation6 + $0x630] sm:$0xff]
    %v3494 = vld [vmem:[#allocation6 + $0x638] sm:$0xff]
    %v3495 = vld [vmem:[#allocation6 + $0x640] sm:$0xff]
    %v3496 = vld [vmem:[#allocation6 + $0x648] sm:$0xff]
    %v3497 = vld [vmem:[#allocation6 + $0x650] sm:$0xff]
    %v3498 = vld [vmem:[#allocation6 + $0x658] sm:$0xff]
    %v3499 = vld [vmem:[#allocation6 + $0x660] sm:$0xff]
    %v3500 = vld [vmem:[#allocation6 + $0x668] sm:$0xff]
    %v3501 = vld [vmem:[#allocation6 + $0x670] sm:$0xff]
    %v3502 = vld [vmem:[#allocation6 + $0x678] sm:$0xff]
    %v3503 = vld [vmem:[#allocation6 + $0x680] sm:$0xff]
    %v3504 = vld [vmem:[#allocation6 + $0x688] sm:$0xff]
    %v3505 = vld [vmem:[#allocation6 + $0x690] sm:$0xff]
    %v3506 = vld [vmem:[#allocation6 + $0x698] sm:$0xff]
    %v3507 = vld [vmem:[#allocation6 + $0x6a0] sm:$0xff]
    %v3508 = vld [vmem:[#allocation6 + $0x6a8] sm:$0xff]
    %v3509 = vld [vmem:[#allocation6 + $0x6b0] sm:$0xff]
    %v3510 = vld [vmem:[#allocation6 + $0x6b8] sm:$0xff]
    %v3511 = vld [vmem:[#allocation6 + $0x6c0] sm:$0xff]
    %v3512 = vld [vmem:[#allocation6 + $0x6c8] sm:$0xff]
    %v3513 = vld [vmem:[#allocation6 + $0x6d0] sm:$0xff]
    %v3514 = vld [vmem:[#allocation6 + $0x6d8] sm:$0xff]
    %v3515 = vld [vmem:[#allocation6 + $0x6e0] sm:$0xff]
    %v3516 = vld [vmem:[#allocation6 + $0x6e8] sm:$0xff]
    %v3517 = vld [vmem:[#allocation6 + $0x6f0] sm:$0xff]
    %v3518 = vld [vmem:[#allocation6 + $0x6f8] sm:$0xff]
    %v3519 = vld [vmem:[#allocation7] sm:$0xf]
    %v3521 = vperm.slane %v3519, 0
    %v3522 = vperm.slane %v3519, 1
    %v3523 = vperm.slane %v3519, 2
    %v3524 = vperm.slane %v3519, 3
    %v3753 = vunpack.c.l.b16 %v3295
    %v3754 = vunpack.c.h.b16 %v3295
    %v3755 = vunpack.c.l.b16 %v3296
    %v3756 = vunpack.c.h.b16 %v3296
    %v3757 = vunpack.c.l.b16 %v3297
    %v3758 = vunpack.c.h.b16 %v3297
    %v3759 = vunpack.c.l.b16 %v3298
    %v3760 = vunpack.c.h.b16 %v3298
    %v3761 = vunpack.c.l.b16 %v3299
    %v3762 = vunpack.c.h.b16 %v3299
    %v3763 = vunpack.c.l.b16 %v3300
    %v3764 = vunpack.c.h.b16 %v3300
    %v3765 = vunpack.c.l.b16 %v3301
    %v3766 = vunpack.c.h.b16 %v3301
    %v3767 = vunpack.c.l.b16 %v3302
    %v3768 = vunpack.c.h.b16 %v3302
    %v3769 = vunpack.c.l.b16 %v3303
    %v3770 = vunpack.c.h.b16 %v3303
    %v3771 = vunpack.c.l.b16 %v3304
    %v3772 = vunpack.c.h.b16 %v3304
    %v3773 = vunpack.c.l.b16 %v3305
    %v3774 = vunpack.c.h.b16 %v3305
    %v3775 = vunpack.c.l.b16 %v3306
    %v3776 = vunpack.c.h.b16 %v3306
    %v3777 = vunpack.c.l.b16 %v3307
    %v3778 = vunpack.c.h.b16 %v3307
    %v3779 = vunpack.c.l.b16 %v3308
    %v3780 = vunpack.c.h.b16 %v3308
    %v3781 = vunpack.c.l.b16 %v3309
    %v3782 = vunpack.c.h.b16 %v3309
    %v3783 = vunpack.c.l.b16 %v3310
    %v3784 = vunpack.c.h.b16 %v3310
    %v3785 = vunpack.c.l.b16 %v3311
    %v3786 = vunpack.c.h.b16 %v3311
    %v3787 = vunpack.c.l.b16 %v3312
    %v3788 = vunpack.c.h.b16 %v3312
    %v3789 = vunpack.c.l.b16 %v3313
    %v3790 = vunpack.c.h.b16 %v3313
    %v3791 = vunpack.c.l.b16 %v3314
    %v3792 = vunpack.c.h.b16 %v3314
    %v3793 = vunpack.c.l.b16 %v3315
    %v3794 = vunpack.c.h.b16 %v3315
    %v3795 = vunpack.c.l.b16 %v3316
    %v3796 = vunpack.c.h.b16 %v3316
    %v3797 = vunpack.c.l.b16 %v3317
    %v3798 = vunpack.c.h.b16 %v3317
    %v3799 = vunpack.c.l.b16 %v3318
    %v3800 = vunpack.c.h.b16 %v3318
    %v3801 = vunpack.c.l.b16 %v3319
    %v3802 = vunpack.c.h.b16 %v3319
    %v3803 = vunpack.c.l.b16 %v3320
    %v3804 = vunpack.c.h.b16 %v3320
    %v3805 = vunpack.c.l.b16 %v3321
    %v3806 = vunpack.c.h.b16 %v3321
    %v3807 = vunpack.c.l.b16 %v3322
    %v3808 = vunpack.c.h.b16 %v3322
    %v3809 = vunpack.c.l.b16 %v3323
    %v3810 = vunpack.c.h.b16 %v3323
    %v3811 = vunpack.c.l.b16 %v3324
    %v3812 = vunpack.c.h.b16 %v3324
    %v3813 = vunpack.c.l.b16 %v3325
    %v3814 = vunpack.c.h.b16 %v3325
    %v3815 = vunpack.c.l.b16 %v3326
    %v3816 = vunpack.c.h.b16 %v3326
    %v3817 = vunpack.c.l.b16 %v3327
    %v3818 = vunpack.c.h.b16 %v3327
    %v3819 = vunpack.c.l.b16 %v3328
    %v3820 = vunpack.c.h.b16 %v3328
    %v3821 = vunpack.c.l.b16 %v3329
    %v3822 = vunpack.c.h.b16 %v3329
    %v3823 = vunpack.c.l.b16 %v3330
    %v3824 = vunpack.c.h.b16 %v3330
    %v3825 = vunpack.c.l.b16 %v3331
    %v3826 = vunpack.c.h.b16 %v3331
    %v3827 = vunpack.c.l.b16 %v3332
    %v3828 = vunpack.c.h.b16 %v3332
    %v3829 = vunpack.c.l.b16 %v3333
    %v3830 = vunpack.c.h.b16 %v3333
    %v3831 = vunpack.c.l.b16 %v3334
    %v3832 = vunpack.c.h.b16 %v3334
    %v3833 = vunpack.c.l.b16 %v3335
    %v3834 = vunpack.c.h.b16 %v3335
    %v3835 = vunpack.c.l.b16 %v3336
    %v3836 = vunpack.c.h.b16 %v3336
    %v3837 = vunpack.c.l.b16 %v3337
    %v3838 = vunpack.c.h.b16 %v3337
    %v3839 = vunpack.c.l.b16 %v3338
    %v3840 = vunpack.c.h.b16 %v3338
    %v3841 = vunpack.c.l.b16 %v3339
    %v3842 = vunpack.c.h.b16 %v3339
    %v3843 = vunpack.c.l.b16 %v3340
    %v3844 = vunpack.c.h.b16 %v3340
    %v3845 = vunpack.c.l.b16 %v3341
    %v3846 = vunpack.c.h.b16 %v3341
    %v3847 = vunpack.c.l.b16 %v3342
    %v3848 = vunpack.c.h.b16 %v3342
    %v3849 = vunpack.c.l.b16 %v3343
    %v3850 = vunpack.c.h.b16 %v3343
    %v3851 = vunpack.c.l.b16 %v3344
    %v3852 = vunpack.c.h.b16 %v3344
    %v3853 = vunpack.c.l.b16 %v3345
    %v3854 = vunpack.c.h.b16 %v3345
    %v3855 = vunpack.c.l.b16 %v3346
    %v3856 = vunpack.c.h.b16 %v3346
    %v3857 = vunpack.c.l.b16 %v3347
    %v3858 = vunpack.c.h.b16 %v3347
    %v3859 = vunpack.c.l.b16 %v3348
    %v3860 = vunpack.c.h.b16 %v3348
    %v3861 = vunpack.c.l.b16 %v3349
    %v3862 = vunpack.c.h.b16 %v3349
    %v3863 = vunpack.c.l.b16 %v3350
    %v3864 = vunpack.c.h.b16 %v3350
    %v3865 = vunpack.c.l.b16 %v3351
    %v3866 = vunpack.c.h.b16 %v3351
    %v3867 = vunpack.c.l.b16 %v3352
    %v3868 = vunpack.c.h.b16 %v3352
    %v3869 = vunpack.c.l.b16 %v3353
    %v3870 = vunpack.c.h.b16 %v3353
    %v3871 = vunpack.c.l.b16 %v3354
    %v3872 = vunpack.c.h.b16 %v3354
    %v3873 = vunpack.c.l.b16 %v3355
    %v3874 = vunpack.c.h.b16 %v3355
    %v3875 = vunpack.c.l.b16 %v3356
    %v3876 = vunpack.c.h.b16 %v3356
    %v3877 = vunpack.c.l.b16 %v3357
    %v3878 = vunpack.c.h.b16 %v3357
    %v3879 = vunpack.c.l.b16 %v3358
    %v3880 = vunpack.c.h.b16 %v3358
    %v3881 = vunpack.c.l.b16 %v3359
    %v3882 = vunpack.c.h.b16 %v3359
    %v3883 = vunpack.c.l.b16 %v3360
    %v3884 = vunpack.c.h.b16 %v3360
    %v3885 = vunpack.c.l.b16 %v3361
    %v3886 = vunpack.c.h.b16 %v3361
    %v3887 = vunpack.c.l.b16 %v3362
    %v3888 = vunpack.c.h.b16 %v3362
    %v3889 = vunpack.c.l.b16 %v3363
    %v3890 = vunpack.c.h.b16 %v3363
    %v3891 = vunpack.c.l.b16 %v3364
    %v3892 = vunpack.c.h.b16 %v3364
    %v3893 = vunpack.c.l.b16 %v3365
    %v3894 = vunpack.c.h.b16 %v3365
    %v3895 = vunpack.c.l.b16 %v3366
    %v3896 = vunpack.c.h.b16 %v3366
    %v3897 = vunpack.c.l.b16 %v3367
    %v3898 = vunpack.c.h.b16 %v3367
    %v3899 = vunpack.c.l.b16 %v3368
    %v3900 = vunpack.c.h.b16 %v3368
    %v3901 = vunpack.c.l.b16 %v3369
    %v3902 = vunpack.c.h.b16 %v3369
    %v3903 = vunpack.c.l.b16 %v3370
    %v3904 = vunpack.c.h.b16 %v3370
    %v3905 = vunpack.c.l.b16 %v3371
    %v3906 = vunpack.c.h.b16 %v3371
    %v3907 = vunpack.c.l.b16 %v3372
    %v3908 = vunpack.c.h.b16 %v3372
    %v3909 = vunpack.c.l.b16 %v3373
    %v3910 = vunpack.c.h.b16 %v3373
    %v3911 = vunpack.c.l.b16 %v3374
    %v3912 = vunpack.c.h.b16 %v3374
    %v3913 = vunpack.c.l.b16 %v3375
    %v3914 = vunpack.c.h.b16 %v3375
    %v3915 = vunpack.c.l.b16 %v3376
    %v3916 = vunpack.c.h.b16 %v3376
    %v3917 = vunpack.c.l.b16 %v3377
    %v3918 = vunpack.c.h.b16 %v3377
    %v3919 = vunpack.c.l.b16 %v3378
    %v3920 = vunpack.c.h.b16 %v3378
    %v3921 = vunpack.c.l.b16 %v3379
    %v3922 = vunpack.c.h.b16 %v3379
    %v3923 = vunpack.c.l.b16 %v3380
    %v3924 = vunpack.c.h.b16 %v3380
    %v3925 = vunpack.c.l.b16 %v3381
    %v3926 = vunpack.c.h.b16 %v3381
    %v3927 = vunpack.c.l.b16 %v3382
    %v3928 = vunpack.c.h.b16 %v3382
    %v3929 = vunpack.c.l.b16 %v3383
    %v3930 = vunpack.c.h.b16 %v3383
    %v3931 = vunpack.c.l.b16 %v3384
    %v3932 = vunpack.c.h.b16 %v3384
    %v3933 = vunpack.c.l.b16 %v3385
    %v3934 = vunpack.c.h.b16 %v3385
    %v3935 = vunpack.c.l.b16 %v3386
    %v3936 = vunpack.c.h.b16 %v3386
    %v3937 = vunpack.c.l.b16 %v3387
    %v3938 = vunpack.c.h.b16 %v3387
    %v3939 = vunpack.c.l.b16 %v3388
    %v3940 = vunpack.c.h.b16 %v3388
    %v3941 = vunpack.c.l.b16 %v3389
    %v3942 = vunpack.c.h.b16 %v3389
    %v3943 = vunpack.c.l.b16 %v3390
    %v3944 = vunpack.c.h.b16 %v3390
    %v3945 = vunpack.c.l.b16 %v3391
    %v3946 = vunpack.c.h.b16 %v3391
    %v3947 = vunpack.c.l.b16 %v3392
    %v3948 = vunpack.c.h.b16 %v3392
    %v3949 = vunpack.c.l.b16 %v3393
    %v3950 = vunpack.c.h.b16 %v3393
    %v3951 = vunpack.c.l.b16 %v3394
    %v3952 = vunpack.c.h.b16 %v3394
    %v3953 = vunpack.c.l.b16 %v3395
    %v3954 = vunpack.c.h.b16 %v3395
    %v3955 = vunpack.c.l.b16 %v3396
    %v3956 = vunpack.c.h.b16 %v3396
    %v3957 = vunpack.c.l.b16 %v3397
    %v3958 = vunpack.c.h.b16 %v3397
    %v3959 = vunpack.c.l.b16 %v3398
    %v3960 = vunpack.c.h.b16 %v3398
    %v3961 = vunpack.c.l.b16 %v3399
    %v3962 = vunpack.c.h.b16 %v3399
    %v3963 = vunpack.c.l.b16 %v3400
    %v3964 = vunpack.c.h.b16 %v3400
    %v3965 = vunpack.c.l.b16 %v3401
    %v3966 = vunpack.c.h.b16 %v3401
    %v3967 = vunpack.c.l.b16 %v3402
    %v3968 = vunpack.c.h.b16 %v3402
    %v3969 = vunpack.c.l.b16 %v3403
    %v3970 = vunpack.c.h.b16 %v3403
    %v3971 = vunpack.c.l.b16 %v3404
    %v3972 = vunpack.c.h.b16 %v3404
    %v3973 = vunpack.c.l.b16 %v3405
    %v3974 = vunpack.c.h.b16 %v3405
    %v3975 = vunpack.c.l.b16 %v3406
    %v3976 = vunpack.c.h.b16 %v3406
    %v3977 = vunpack.c.l.b16 %v3407
    %v3978 = vunpack.c.h.b16 %v3407
    %v3979 = vunpack.c.l.b16 %v3408
    %v3980 = vunpack.c.h.b16 %v3408
    %v3981 = vunpack.c.l.b16 %v3409
    %v3982 = vunpack.c.h.b16 %v3409
    %v3983 = vunpack.c.l.b16 %v3410
    %v3984 = vunpack.c.h.b16 %v3410
    %v3985 = vunpack.c.l.b16 %v3411
    %v3986 = vunpack.c.h.b16 %v3411
    %v3987 = vunpack.c.l.b16 %v3412
    %v3988 = vunpack.c.h.b16 %v3412
    %v3989 = vunpack.c.l.b16 %v3413
    %v3990 = vunpack.c.h.b16 %v3413
    %v3991 = vunpack.c.l.b16 %v3414
    %v3992 = vunpack.c.h.b16 %v3414
    %v3993 = vunpack.c.l.b16 %v3415
    %v3994 = vunpack.c.h.b16 %v3415
    %v3995 = vunpack.c.l.b16 %v3416
    %v3996 = vunpack.c.h.b16 %v3416
    %v3997 = vunpack.c.l.b16 %v3417
    %v3998 = vunpack.c.h.b16 %v3417
    %v3999 = vunpack.c.l.b16 %v3418
    %v4000 = vunpack.c.h.b16 %v3418
    %v4001 = vunpack.c.l.b16 %v3419
    %v4002 = vunpack.c.h.b16 %v3419
    %v4003 = vunpack.c.l.b16 %v3420
    %v4004 = vunpack.c.h.b16 %v3420
    %v4005 = vunpack.c.l.b16 %v3421
    %v4006 = vunpack.c.h.b16 %v3421
    %v4007 = vunpack.c.l.b16 %v3422
    %v4008 = vunpack.c.h.b16 %v3422
    %v4009 = vunpack.c.l.b16 %v3423
    %v4010 = vunpack.c.h.b16 %v3423
    %v4011 = vunpack.c.l.b16 %v3424
    %v4012 = vunpack.c.h.b16 %v3424
    %v4013 = vunpack.c.l.b16 %v3425
    %v4014 = vunpack.c.h.b16 %v3425
    %v4015 = vunpack.c.l.b16 %v3426
    %v4016 = vunpack.c.h.b16 %v3426
    %v4017 = vunpack.c.l.b16 %v3427
    %v4018 = vunpack.c.h.b16 %v3427
    %v4019 = vunpack.c.l.b16 %v3428
    %v4020 = vunpack.c.h.b16 %v3428
    %v4021 = vunpack.c.l.b16 %v3429
    %v4022 = vunpack.c.h.b16 %v3429
    %v4023 = vunpack.c.l.b16 %v3430
    %v4024 = vunpack.c.h.b16 %v3430
    %v4025 = vunpack.c.l.b16 %v3431
    %v4026 = vunpack.c.h.b16 %v3431
    %v4027 = vunpack.c.l.b16 %v3432
    %v4028 = vunpack.c.h.b16 %v3432
    %v4029 = vunpack.c.l.b16 %v3433
    %v4030 = vunpack.c.h.b16 %v3433
    %v4031 = vunpack.c.l.b16 %v3434
    %v4032 = vunpack.c.h.b16 %v3434
    %v4033 = vunpack.c.l.b16 %v3435
    %v4034 = vunpack.c.h.b16 %v3435
    %v4035 = vunpack.c.l.b16 %v3436
    %v4036 = vunpack.c.h.b16 %v3436
    %v4037 = vunpack.c.l.b16 %v3437
    %v4038 = vunpack.c.h.b16 %v3437
    %v4039 = vunpack.c.l.b16 %v3438
    %v4040 = vunpack.c.h.b16 %v3438
    %v4041 = vunpack.c.l.b16 %v3439
    %v4042 = vunpack.c.h.b16 %v3439
    %v4043 = vunpack.c.l.b16 %v3440
    %v4044 = vunpack.c.h.b16 %v3440
    %v4045 = vunpack.c.l.b16 %v3441
    %v4046 = vunpack.c.h.b16 %v3441
    %v4047 = vunpack.c.l.b16 %v3442
    %v4048 = vunpack.c.h.b16 %v3442
    %v4049 = vunpack.c.l.b16 %v3443
    %v4050 = vunpack.c.h.b16 %v3443
    %v4051 = vunpack.c.l.b16 %v3444
    %v4052 = vunpack.c.h.b16 %v3444
    %v4053 = vunpack.c.l.b16 %v3445
    %v4054 = vunpack.c.h.b16 %v3445
    %v4055 = vunpack.c.l.b16 %v3446
    %v4056 = vunpack.c.h.b16 %v3446
    %v4057 = vunpack.c.l.b16 %v3447
    %v4058 = vunpack.c.h.b16 %v3447
    %v4059 = vunpack.c.l.b16 %v3448
    %v4060 = vunpack.c.h.b16 %v3448
    %v4061 = vunpack.c.l.b16 %v3449
    %v4062 = vunpack.c.h.b16 %v3449
    %v4063 = vunpack.c.l.b16 %v3450
    %v4064 = vunpack.c.h.b16 %v3450
    %v4065 = vunpack.c.l.b16 %v3451
    %v4066 = vunpack.c.h.b16 %v3451
    %v4067 = vunpack.c.l.b16 %v3452
    %v4068 = vunpack.c.h.b16 %v3452
    %v4069 = vunpack.c.l.b16 %v3453
    %v4070 = vunpack.c.h.b16 %v3453
    %v4071 = vunpack.c.l.b16 %v3454
    %v4072 = vunpack.c.h.b16 %v3454
    %v4073 = vunpack.c.l.b16 %v3455
    %v4074 = vunpack.c.h.b16 %v3455
    %v4075 = vunpack.c.l.b16 %v3456
    %v4076 = vunpack.c.h.b16 %v3456
    %v4077 = vunpack.c.l.b16 %v3457
    %v4078 = vunpack.c.h.b16 %v3457
    %v4079 = vunpack.c.l.b16 %v3458
    %v4080 = vunpack.c.h.b16 %v3458
    %v4081 = vunpack.c.l.b16 %v3459
    %v4082 = vunpack.c.h.b16 %v3459
    %v4083 = vunpack.c.l.b16 %v3460
    %v4084 = vunpack.c.h.b16 %v3460
    %v4085 = vunpack.c.l.b16 %v3461
    %v4086 = vunpack.c.h.b16 %v3461
    %v4087 = vunpack.c.l.b16 %v3462
    %v4088 = vunpack.c.h.b16 %v3462
    %v4089 = vunpack.c.l.b16 %v3463
    %v4090 = vunpack.c.h.b16 %v3463
    %v4091 = vunpack.c.l.b16 %v3464
    %v4092 = vunpack.c.h.b16 %v3464
    %v4093 = vunpack.c.l.b16 %v3465
    %v4094 = vunpack.c.h.b16 %v3465
    %v4095 = vunpack.c.l.b16 %v3466
    %v4096 = vunpack.c.h.b16 %v3466
    %v4097 = vunpack.c.l.b16 %v3467
    %v4098 = vunpack.c.h.b16 %v3467
    %v4099 = vunpack.c.l.b16 %v3468
    %v4100 = vunpack.c.h.b16 %v3468
    %v4101 = vunpack.c.l.b16 %v3469
    %v4102 = vunpack.c.h.b16 %v3469
    %v4103 = vunpack.c.l.b16 %v3470
    %v4104 = vunpack.c.h.b16 %v3470
    %v4105 = vunpack.c.l.b16 %v3471
    %v4106 = vunpack.c.h.b16 %v3471
    %v4107 = vunpack.c.l.b16 %v3472
    %v4108 = vunpack.c.h.b16 %v3472
    %v4109 = vunpack.c.l.b16 %v3473
    %v4110 = vunpack.c.h.b16 %v3473
    %v4111 = vunpack.c.l.b16 %v3474
    %v4112 = vunpack.c.h.b16 %v3474
    %v4113 = vunpack.c.l.b16 %v3475
    %v4114 = vunpack.c.h.b16 %v3475
    %v4115 = vunpack.c.l.b16 %v3476
    %v4116 = vunpack.c.h.b16 %v3476
    %v4117 = vunpack.c.l.b16 %v3477
    %v4118 = vunpack.c.h.b16 %v3477
    %v4119 = vunpack.c.l.b16 %v3478
    %v4120 = vunpack.c.h.b16 %v3478
    %v4121 = vunpack.c.l.b16 %v3479
    %v4122 = vunpack.c.h.b16 %v3479
    %v4123 = vunpack.c.l.b16 %v3480
    %v4124 = vunpack.c.h.b16 %v3480
    %v4125 = vunpack.c.l.b16 %v3481
    %v4126 = vunpack.c.h.b16 %v3481
    %v4127 = vunpack.c.l.b16 %v3482
    %v4128 = vunpack.c.h.b16 %v3482
    %v4129 = vunpack.c.l.b16 %v3483
    %v4130 = vunpack.c.h.b16 %v3483
    %v4131 = vunpack.c.l.b16 %v3484
    %v4132 = vunpack.c.h.b16 %v3484
    %v4133 = vunpack.c.l.b16 %v3485
    %v4134 = vunpack.c.h.b16 %v3485
    %v4135 = vunpack.c.l.b16 %v3486
    %v4136 = vunpack.c.h.b16 %v3486
    %v4137 = vunpack.c.l.b16 %v3487
    %v4138 = vunpack.c.h.b16 %v3487
    %v4139 = vunpack.c.l.b16 %v3488
    %v4140 = vunpack.c.h.b16 %v3488
    %v4141 = vunpack.c.l.b16 %v3489
    %v4142 = vunpack.c.h.b16 %v3489
    %v4143 = vunpack.c.l.b16 %v3490
    %v4144 = vunpack.c.h.b16 %v3490
    %v4145 = vunpack.c.l.b16 %v3491
    %v4146 = vunpack.c.h.b16 %v3491
    %v4147 = vunpack.c.l.b16 %v3492
    %v4148 = vunpack.c.h.b16 %v3492
    %v4149 = vunpack.c.l.b16 %v3493
    %v4150 = vunpack.c.h.b16 %v3493
    %v4151 = vunpack.c.l.b16 %v3494
    %v4152 = vunpack.c.h.b16 %v3494
    %v4153 = vunpack.c.l.b16 %v3495
    %v4154 = vunpack.c.h.b16 %v3495
    %v4155 = vunpack.c.l.b16 %v3496
    %v4156 = vunpack.c.h.b16 %v3496
    %v4157 = vunpack.c.l.b16 %v3497
    %v4158 = vunpack.c.h.b16 %v3497
    %v4159 = vunpack.c.l.b16 %v3498
    %v4160 = vunpack.c.h.b16 %v3498
    %v4161 = vunpack.c.l.b16 %v3499
    %v4162 = vunpack.c.h.b16 %v3499
    %v4163 = vunpack.c.l.b16 %v3500
    %v4164 = vunpack.c.h.b16 %v3500
    %v4165 = vunpack.c.l.b16 %v3501
    %v4166 = vunpack.c.h.b16 %v3501
    %v4167 = vunpack.c.l.b16 %v3502
    %v4168 = vunpack.c.h.b16 %v3502
    %v4169 = vunpack.c.l.b16 %v3503
    %v4170 = vunpack.c.h.b16 %v3503
    %v4171 = vunpack.c.l.b16 %v3504
    %v4172 = vunpack.c.h.b16 %v3504
    %v4173 = vunpack.c.l.b16 %v3505
    %v4174 = vunpack.c.h.b16 %v3505
    %v4175 = vunpack.c.l.b16 %v3506
    %v4176 = vunpack.c.h.b16 %v3506
    %v4177 = vunpack.c.l.b16 %v3507
    %v4178 = vunpack.c.h.b16 %v3507
    %v4179 = vunpack.c.l.b16 %v3508
    %v4180 = vunpack.c.h.b16 %v3508
    %v4181 = vunpack.c.l.b16 %v3509
    %v4182 = vunpack.c.h.b16 %v3509
    %v4183 = vunpack.c.l.b16 %v3510
    %v4184 = vunpack.c.h.b16 %v3510
    %v4185 = vunpack.c.l.b16 %v3511
    %v4186 = vunpack.c.h.b16 %v3511
    %v4187 = vunpack.c.l.b16 %v3512
    %v4188 = vunpack.c.h.b16 %v3512
    %v4189 = vunpack.c.l.b16 %v3513
    %v4190 = vunpack.c.h.b16 %v3513
    %v4191 = vunpack.c.l.b16 %v3514
    %v4192 = vunpack.c.h.b16 %v3514
    %v4193 = vunpack.c.l.b16 %v3515
    %v4194 = vunpack.c.h.b16 %v3515
    %v4195 = vunpack.c.l.b16 %v3516
    %v4196 = vunpack.c.h.b16 %v3516
    %v4197 = vunpack.c.l.b16 %v3517
    %v4198 = vunpack.c.h.b16 %v3517
    %v4199 = vunpack.c.l.b16 %v3518
    %v4200 = vunpack.c.h.b16 %v3518
    %v4201 = vpack.c.b16 %v3757, %v3753
    %v4202 = vpack.c.b16 %v3758, %v3754
    %v4203 = vpack.c.b16 %v3759, %v3755
    %v4204 = vpack.c.b16 %v3760, %v3756
    %v4205 = vpack.c.b16 %v3765, %v3761
    %v4206 = vpack.c.b16 %v3766, %v3762
    %v4207 = vpack.c.b16 %v3767, %v3763
    %v4208 = vpack.c.b16 %v3768, %v3764
    %v4209 = vpack.c.b16 %v3773, %v3769
    %v4210 = vpack.c.b16 %v3774, %v3770
    %v4211 = vpack.c.b16 %v3775, %v3771
    %v4212 = vpack.c.b16 %v3776, %v3772
    %v4213 = vpack.c.b16 %v3781, %v3777
    %v4214 = vpack.c.b16 %v3782, %v3778
    %v4215 = vpack.c.b16 %v3783, %v3779
    %v4216 = vpack.c.b16 %v3784, %v3780
    %v4217 = vpack.c.b16 %v3789, %v3785
    %v4218 = vpack.c.b16 %v3790, %v3786
    %v4219 = vpack.c.b16 %v3791, %v3787
    %v4220 = vpack.c.b16 %v3792, %v3788
    %v4221 = vpack.c.b16 %v3797, %v3793
    %v4222 = vpack.c.b16 %v3798, %v3794
    %v4223 = vpack.c.b16 %v3799, %v3795
    %v4224 = vpack.c.b16 %v3800, %v3796
    %v4225 = vpack.c.b16 %v3805, %v3801
    %v4226 = vpack.c.b16 %v3806, %v3802
    %v4227 = vpack.c.b16 %v3807, %v3803
    %v4228 = vpack.c.b16 %v3808, %v3804
    %v4229 = vpack.c.b16 %v3813, %v3809
    %v4230 = vpack.c.b16 %v3814, %v3810
    %v4231 = vpack.c.b16 %v3815, %v3811
    %v4232 = vpack.c.b16 %v3816, %v3812
    %v4233 = vpack.c.b16 %v3821, %v3817
    %v4234 = vpack.c.b16 %v3822, %v3818
    %v4235 = vpack.c.b16 %v3823, %v3819
    %v4236 = vpack.c.b16 %v3824, %v3820
    %v4237 = vpack.c.b16 %v3829, %v3825
    %v4238 = vpack.c.b16 %v3830, %v3826
    %v4239 = vpack.c.b16 %v3831, %v3827
    %v4240 = vpack.c.b16 %v3832, %v3828
    %v4241 = vpack.c.b16 %v3837, %v3833
    %v4242 = vpack.c.b16 %v3838, %v3834
    %v4243 = vpack.c.b16 %v3839, %v3835
    %v4244 = vpack.c.b16 %v3840, %v3836
    %v4245 = vpack.c.b16 %v3845, %v3841
    %v4246 = vpack.c.b16 %v3846, %v3842
    %v4247 = vpack.c.b16 %v3847, %v3843
    %v4248 = vpack.c.b16 %v3848, %v3844
    %v4249 = vpack.c.b16 %v3853, %v3849
    %v4250 = vpack.c.b16 %v3854, %v3850
    %v4251 = vpack.c.b16 %v3855, %v3851
    %v4252 = vpack.c.b16 %v3856, %v3852
    %v4253 = vpack.c.b16 %v3861, %v3857
    %v4254 = vpack.c.b16 %v3862, %v3858
    %v4255 = vpack.c.b16 %v3863, %v3859
    %v4256 = vpack.c.b16 %v3864, %v3860
    %v4257 = vpack.c.b16 %v3869, %v3865
    %v4258 = vpack.c.b16 %v3870, %v3866
    %v4259 = vpack.c.b16 %v3871, %v3867
    %v4260 = vpack.c.b16 %v3872, %v3868
    %v4261 = vpack.c.b16 %v3877, %v3873
    %v4262 = vpack.c.b16 %v3878, %v3874
    %v4263 = vpack.c.b16 %v3879, %v3875
    %v4264 = vpack.c.b16 %v3880, %v3876
    %v4265 = vpack.c.b16 %v3885, %v3881
    %v4266 = vpack.c.b16 %v3886, %v3882
    %v4267 = vpack.c.b16 %v3887, %v3883
    %v4268 = vpack.c.b16 %v3888, %v3884
    %v4269 = vpack.c.b16 %v3893, %v3889
    %v4270 = vpack.c.b16 %v3894, %v3890
    %v4271 = vpack.c.b16 %v3895, %v3891
    %v4272 = vpack.c.b16 %v3896, %v3892
    %v4273 = vpack.c.b16 %v3901, %v3897
    %v4274 = vpack.c.b16 %v3902, %v3898
    %v4275 = vpack.c.b16 %v3903, %v3899
    %v4276 = vpack.c.b16 %v3904, %v3900
    %v4277 = vpack.c.b16 %v3909, %v3905
    %v4278 = vpack.c.b16 %v3910, %v3906
    %v4279 = vpack.c.b16 %v3911, %v3907
    %v4280 = vpack.c.b16 %v3912, %v3908
    %v4281 = vpack.c.b16 %v3917, %v3913
    %v4282 = vpack.c.b16 %v3918, %v3914
    %v4283 = vpack.c.b16 %v3919, %v3915
    %v4284 = vpack.c.b16 %v3920, %v3916
    %v4285 = vpack.c.b16 %v3925, %v3921
    %v4286 = vpack.c.b16 %v3926, %v3922
    %v4287 = vpack.c.b16 %v3927, %v3923
    %v4288 = vpack.c.b16 %v3928, %v3924
    %v4289 = vpack.c.b16 %v3933, %v3929
    %v4290 = vpack.c.b16 %v3934, %v3930
    %v4291 = vpack.c.b16 %v3935, %v3931
    %v4292 = vpack.c.b16 %v3936, %v3932
    %v4293 = vpack.c.b16 %v3941, %v3937
    %v4294 = vpack.c.b16 %v3942, %v3938
    %v4295 = vpack.c.b16 %v3943, %v3939
    %v4296 = vpack.c.b16 %v3944, %v3940
    %v4297 = vpack.c.b16 %v3949, %v3945
    %v4298 = vpack.c.b16 %v3950, %v3946
    %v4299 = vpack.c.b16 %v3951, %v3947
    %v4300 = vpack.c.b16 %v3952, %v3948
    %v4301 = vpack.c.b16 %v3957, %v3953
    %v4302 = vpack.c.b16 %v3958, %v3954
    %v4303 = vpack.c.b16 %v3959, %v3955
    %v4304 = vpack.c.b16 %v3960, %v3956
    %v4305 = vpack.c.b16 %v3965, %v3961
    %v4306 = vpack.c.b16 %v3966, %v3962
    %v4307 = vpack.c.b16 %v3967, %v3963
    %v4308 = vpack.c.b16 %v3968, %v3964
    %v4309 = vpack.c.b16 %v3973, %v3969
    %v4310 = vpack.c.b16 %v3974, %v3970
    %v4311 = vpack.c.b16 %v3975, %v3971
    %v4312 = vpack.c.b16 %v3976, %v3972
    %v4313 = vpack.c.b16 %v3981, %v3977
    %v4314 = vpack.c.b16 %v3982, %v3978
    %v4315 = vpack.c.b16 %v3983, %v3979
    %v4316 = vpack.c.b16 %v3984, %v3980
    %v4317 = vpack.c.b16 %v3989, %v3985
    %v4318 = vpack.c.b16 %v3990, %v3986
    %v4319 = vpack.c.b16 %v3991, %v3987
    %v4320 = vpack.c.b16 %v3992, %v3988
    %v4321 = vpack.c.b16 %v3997, %v3993
    %v4322 = vpack.c.b16 %v3998, %v3994
    %v4323 = vpack.c.b16 %v3999, %v3995
    %v4324 = vpack.c.b16 %v4000, %v3996
    %v4325 = vpack.c.b16 %v4005, %v4001
    %v4326 = vpack.c.b16 %v4006, %v4002
    %v4327 = vpack.c.b16 %v4007, %v4003
    %v4328 = vpack.c.b16 %v4008, %v4004
    %v4329 = vpack.c.b16 %v4013, %v4009
    %v4330 = vpack.c.b16 %v4014, %v4010
    %v4331 = vpack.c.b16 %v4015, %v4011
    %v4332 = vpack.c.b16 %v4016, %v4012
    %v4333 = vpack.c.b16 %v4021, %v4017
    %v4334 = vpack.c.b16 %v4022, %v4018
    %v4335 = vpack.c.b16 %v4023, %v4019
    %v4336 = vpack.c.b16 %v4024, %v4020
    %v4337 = vpack.c.b16 %v4029, %v4025
    %v4338 = vpack.c.b16 %v4030, %v4026
    %v4339 = vpack.c.b16 %v4031, %v4027
    %v4340 = vpack.c.b16 %v4032, %v4028
    %v4341 = vpack.c.b16 %v4037, %v4033
    %v4342 = vpack.c.b16 %v4038, %v4034
    %v4343 = vpack.c.b16 %v4039, %v4035
    %v4344 = vpack.c.b16 %v4040, %v4036
    %v4345 = vpack.c.b16 %v4045, %v4041
    %v4346 = vpack.c.b16 %v4046, %v4042
    %v4347 = vpack.c.b16 %v4047, %v4043
    %v4348 = vpack.c.b16 %v4048, %v4044
    %v4349 = vpack.c.b16 %v4053, %v4049
    %v4350 = vpack.c.b16 %v4054, %v4050
    %v4351 = vpack.c.b16 %v4055, %v4051
    %v4352 = vpack.c.b16 %v4056, %v4052
    %v4353 = vpack.c.b16 %v4061, %v4057
    %v4354 = vpack.c.b16 %v4062, %v4058
    %v4355 = vpack.c.b16 %v4063, %v4059
    %v4356 = vpack.c.b16 %v4064, %v4060
    %v4357 = vpack.c.b16 %v4069, %v4065
    %v4358 = vpack.c.b16 %v4070, %v4066
    %v4359 = vpack.c.b16 %v4071, %v4067
    %v4360 = vpack.c.b16 %v4072, %v4068
    %v4361 = vpack.c.b16 %v4077, %v4073
    %v4362 = vpack.c.b16 %v4078, %v4074
    %v4363 = vpack.c.b16 %v4079, %v4075
    %v4364 = vpack.c.b16 %v4080, %v4076
    %v4365 = vpack.c.b16 %v4085, %v4081
    %v4366 = vpack.c.b16 %v4086, %v4082
    %v4367 = vpack.c.b16 %v4087, %v4083
    %v4368 = vpack.c.b16 %v4088, %v4084
    %v4369 = vpack.c.b16 %v4093, %v4089
    %v4370 = vpack.c.b16 %v4094, %v4090
    %v4371 = vpack.c.b16 %v4095, %v4091
    %v4372 = vpack.c.b16 %v4096, %v4092
    %v4373 = vpack.c.b16 %v4101, %v4097
    %v4374 = vpack.c.b16 %v4102, %v4098
    %v4375 = vpack.c.b16 %v4103, %v4099
    %v4376 = vpack.c.b16 %v4104, %v4100
    %v4377 = vpack.c.b16 %v4109, %v4105
    %v4378 = vpack.c.b16 %v4110, %v4106
    %v4379 = vpack.c.b16 %v4111, %v4107
    %v4380 = vpack.c.b16 %v4112, %v4108
    %v4381 = vpack.c.b16 %v4117, %v4113
    %v4382 = vpack.c.b16 %v4118, %v4114
    %v4383 = vpack.c.b16 %v4119, %v4115
    %v4384 = vpack.c.b16 %v4120, %v4116
    %v4385 = vpack.c.b16 %v4125, %v4121
    %v4386 = vpack.c.b16 %v4126, %v4122
    %v4387 = vpack.c.b16 %v4127, %v4123
    %v4388 = vpack.c.b16 %v4128, %v4124
    %v4389 = vpack.c.b16 %v4133, %v4129
    %v4390 = vpack.c.b16 %v4134, %v4130
    %v4391 = vpack.c.b16 %v4135, %v4131
    %v4392 = vpack.c.b16 %v4136, %v4132
    %v4393 = vpack.c.b16 %v4141, %v4137
    %v4394 = vpack.c.b16 %v4142, %v4138
    %v4395 = vpack.c.b16 %v4143, %v4139
    %v4396 = vpack.c.b16 %v4144, %v4140
    %v4397 = vpack.c.b16 %v4149, %v4145
    %v4398 = vpack.c.b16 %v4150, %v4146
    %v4399 = vpack.c.b16 %v4151, %v4147
    %v4400 = vpack.c.b16 %v4152, %v4148
    %v4401 = vpack.c.b16 %v4157, %v4153
    %v4402 = vpack.c.b16 %v4158, %v4154
    %v4403 = vpack.c.b16 %v4159, %v4155
    %v4404 = vpack.c.b16 %v4160, %v4156
    %v4405 = vpack.c.b16 %v4165, %v4161
    %v4406 = vpack.c.b16 %v4166, %v4162
    %v4407 = vpack.c.b16 %v4167, %v4163
    %v4408 = vpack.c.b16 %v4168, %v4164
    %v4409 = vpack.c.b16 %v4173, %v4169
    %v4410 = vpack.c.b16 %v4174, %v4170
    %v4411 = vpack.c.b16 %v4175, %v4171
    %v4412 = vpack.c.b16 %v4176, %v4172
    %v4413 = vpack.c.b16 %v4181, %v4177
    %v4414 = vpack.c.b16 %v4182, %v4178
    %v4415 = vpack.c.b16 %v4183, %v4179
    %v4416 = vpack.c.b16 %v4184, %v4180
    %v4417 = vpack.c.b16 %v4189, %v4185
    %v4418 = vpack.c.b16 %v4190, %v4186
    %v4419 = vpack.c.b16 %v4191, %v4187
    %v4420 = vpack.c.b16 %v4192, %v4188
    %v4421 = vpack.c.b16 %v4197, %v4193
    %v4422 = vpack.c.b16 %v4198, %v4194
    %v4423 = vpack.c.b16 %v4199, %v4195
    %v4424 = vpack.c.b16 %v4200, %v4196
    %4649 = vmatpush.bf16.msra.mxu0 %v4229
    %4650 = vmatpush.bf16.msra.mxu0 %v4225
    %4651 = vmatpush.bf16.msra.mxu0 %v4221
    %4652 = vmatpush.bf16.msra.mxu0 %v4217
    %4653 = vmatpush.bf16.msra.mxu0 %v4213
    %4654 = vmatpush.bf16.msra.mxu0 %v4209
    %4655 = vmatpush.bf16.msra.mxu0 %v4205
    %4656 = vmatpush.bf16.msra.mxu0 %v4201
    %4657 = vmatmul.bf16.gmra.mxu0 %v3288
    %v4658 = vpop.f32.mrf.mxu0
    %v4659 = vadd.f32 %v3521, %v4658
    %v4660 = vpop.f32.mrf.mxu0
    %4661 = vdwg.mxu0
    %4662 = vmatpush.bf16.msra.mxu0 %v4261
    %4663 = vmatpush.bf16.msra.mxu0 %v4257
    %4664 = vmatpush.bf16.msra.mxu0 %v4253
    %4665 = vmatpush.bf16.msra.mxu0 %v4249
    %4666 = vmatpush.bf16.msra.mxu0 %v4245
    %4667 = vmatpush.bf16.msra.mxu0 %v4241
    %4668 = vmatpush.bf16.msra.mxu0 %v4237
    %4669 = vmatpush.bf16.msra.mxu0 %v4233
    %4670 = vmatmul.bf16.gmra.mxu0 %v3289
    %v4671 = vpop.f32.mrf.mxu0
    %v4672 = vadd.f32 %v4659, %v4671
    %v4673 = vpop.f32.mrf.mxu0
    %4674 = vdwg.mxu0
    %4675 = vmatpush.bf16.msra.mxu0 %v4293
    %4676 = vmatpush.bf16.msra.mxu0 %v4289
    %4677 = vmatpush.bf16.msra.mxu0 %v4285
    %4678 = vmatpush.bf16.msra.mxu0 %v4281
    %4679 = vmatpush.bf16.msra.mxu0 %v4277
    %4680 = vmatpush.bf16.msra.mxu0 %v4273
    %4681 = vmatpush.bf16.msra.mxu0 %v4269
    %4682 = vmatpush.bf16.msra.mxu0 %v4265
    %4683 = vmatmul.bf16.gmra.mxu0 %v3290
    %v4684 = vpop.f32.mrf.mxu0
    %v4685 = vadd.f32 %v4672, %v4684
    %v4686 = vpop.f32.mrf.mxu0
    %4687 = vdwg.mxu0
    %4688 = vmatpush.bf16.msra.mxu0 %v4325
    %4689 = vmatpush.bf16.msra.mxu0 %v4321
    %4690 = vmatpush.bf16.msra.mxu0 %v4317
    %4691 = vmatpush.bf16.msra.mxu0 %v4313
    %4692 = vmatpush.bf16.msra.mxu0 %v4309
    %4693 = vmatpush.bf16.msra.mxu0 %v4305
    %4694 = vmatpush.bf16.msra.mxu0 %v4301
    %4695 = vmatpush.bf16.msra.mxu0 %v4297
    %4696 = vmatmul.bf16.gmra.mxu0 %v3291
    %v4697 = vpop.f32.mrf.mxu0
    %v4698 = vadd.f32 %v4685, %v4697
    %v4699 = vpop.f32.mrf.mxu0
    %4700 = vdwg.mxu0
    %4701 = vmatpush.bf16.msra.mxu0 %v4357
    %4702 = vmatpush.bf16.msra.mxu0 %v4353
    %4703 = vmatpush.bf16.msra.mxu0 %v4349
    %4704 = vmatpush.bf16.msra.mxu0 %v4345
    %4705 = vmatpush.bf16.msra.mxu0 %v4341
    %4706 = vmatpush.bf16.msra.mxu0 %v4337
    %4707 = vmatpush.bf16.msra.mxu0 %v4333
    %4708 = vmatpush.bf16.msra.mxu0 %v4329
    %4709 = vmatmul.bf16.gmra.mxu0 %v3292
    %v4710 = vpop.f32.mrf.mxu0
    %v4711 = vadd.f32 %v4698, %v4710
    %v4712 = vpop.f32.mrf.mxu0
    %4713 = vdwg.mxu0
    %4714 = vmatpush.bf16.msra.mxu0 %v4389
    %4715 = vmatpush.bf16.msra.mxu0 %v4385
    %4716 = vmatpush.bf16.msra.mxu0 %v4381
    %4717 = vmatpush.bf16.msra.mxu0 %v4377
    %4718 = vmatpush.bf16.msra.mxu0 %v4373
    %4719 = vmatpush.bf16.msra.mxu0 %v4369
    %4720 = vmatpush.bf16.msra.mxu0 %v4365
    %4721 = vmatpush.bf16.msra.mxu0 %v4361
    %4722 = vmatmul.bf16.gmra.mxu0 %v3293
    %v4723 = vpop.f32.mrf.mxu0
    %v4724 = vadd.f32 %v4711, %v4723
    %v4725 = vpop.f32.mrf.mxu0
    %4726 = vdwg.mxu0
    %4727 = vmatpush.bf16.msra.mxu0 %v4421
    %4728 = vmatpush.bf16.msra.mxu0 %v4417
    %4729 = vmatpush.bf16.msra.mxu0 %v4413
    %4730 = vmatpush.bf16.msra.mxu0 %v4409
    %4731 = vmatpush.bf16.msra.mxu0 %v4405
    %4732 = vmatpush.bf16.msra.mxu0 %v4401
    %4733 = vmatpush.bf16.msra.mxu0 %v4397
    %4734 = vmatpush.bf16.msra.mxu0 %v4393
    %4735 = vmatmul.bf16.gmra.mxu0 %v3294
    %v4736 = vpop.f32.mrf.mxu0
    %v4737 = vadd.f32 %v4724, %v4736
    %v4738 = vpop.f32.mrf.mxu0
    %4739 = vdwg.mxu0
    %4740 = vmatpush.bf16.msra.mxu0 %v4230
    %4741 = vmatpush.bf16.msra.mxu0 %v4226
    %4742 = vmatpush.bf16.msra.mxu0 %v4222
    %4743 = vmatpush.bf16.msra.mxu0 %v4218
    %4744 = vmatpush.bf16.msra.mxu0 %v4214
    %4745 = vmatpush.bf16.msra.mxu0 %v4210
    %4746 = vmatpush.bf16.msra.mxu0 %v4206
    %4747 = vmatpush.bf16.msra.mxu0 %v4202
    %4748 = vmatmul.bf16.gmra.mxu0 %v3288
    %v4749 = vpop.f32.mrf.mxu0
    %v4750 = vadd.f32 %v3522, %v4749
    %v4751 = vpop.f32.mrf.mxu0
    %4752 = vdwg.mxu0
    %4753 = vmatpush.bf16.msra.mxu0 %v4262
    %4754 = vmatpush.bf16.msra.mxu0 %v4258
    %4755 = vmatpush.bf16.msra.mxu0 %v4254
    %4756 = vmatpush.bf16.msra.mxu0 %v4250
    %4757 = vmatpush.bf16.msra.mxu0 %v4246
    %4758 = vmatpush.bf16.msra.mxu0 %v4242
    %4759 = vmatpush.bf16.msra.mxu0 %v4238
    %4760 = vmatpush.bf16.msra.mxu0 %v4234
    %4761 = vmatmul.bf16.gmra.mxu0 %v3289
    %v4762 = vpop.f32.mrf.mxu0
    %v4763 = vadd.f32 %v4750, %v4762
    %v4764 = vpop.f32.mrf.mxu0
    %4765 = vdwg.mxu0
    %4766 = vmatpush.bf16.msra.mxu0 %v4294
    %4767 = vmatpush.bf16.msra.mxu0 %v4290
    %4768 = vmatpush.bf16.msra.mxu0 %v4286
    %4769 = vmatpush.bf16.msra.mxu0 %v4282
    %4770 = vmatpush.bf16.msra.mxu0 %v4278
    %4771 = vmatpush.bf16.msra.mxu0 %v4274
    %4772 = vmatpush.bf16.msra.mxu0 %v4270
    %4773 = vmatpush.bf16.msra.mxu0 %v4266
    %4774 = vmatmul.bf16.gmra.mxu0 %v3290
    %v4775 = vpop.f32.mrf.mxu0
    %v4776 = vadd.f32 %v4763, %v4775
    %v4777 = vpop.f32.mrf.mxu0
    %4778 = vdwg.mxu0
    %4779 = vmatpush.bf16.msra.mxu0 %v4326
    %4780 = vmatpush.bf16.msra.mxu0 %v4322
    %4781 = vmatpush.bf16.msra.mxu0 %v4318
    %4782 = vmatpush.bf16.msra.mxu0 %v4314
    %4783 = vmatpush.bf16.msra.mxu0 %v4310
    %4784 = vmatpush.bf16.msra.mxu0 %v4306
    %4785 = vmatpush.bf16.msra.mxu0 %v4302
    %4786 = vmatpush.bf16.msra.mxu0 %v4298
    %4787 = vmatmul.bf16.gmra.mxu0 %v3291
    %v4788 = vpop.f32.mrf.mxu0
    %v4789 = vadd.f32 %v4776, %v4788
    %v4790 = vpop.f32.mrf.mxu0
    %4791 = vdwg.mxu0
    %4792 = vmatpush.bf16.msra.mxu0 %v4358
    %4793 = vmatpush.bf16.msra.mxu0 %v4354
    %4794 = vmatpush.bf16.msra.mxu0 %v4350
    %4795 = vmatpush.bf16.msra.mxu0 %v4346
    %4796 = vmatpush.bf16.msra.mxu0 %v4342
    %4797 = vmatpush.bf16.msra.mxu0 %v4338
    %4798 = vmatpush.bf16.msra.mxu0 %v4334
    %4799 = vmatpush.bf16.msra.mxu0 %v4330
    %4800 = vmatmul.bf16.gmra.mxu0 %v3292
    %v4801 = vpop.f32.mrf.mxu0
    %v4802 = vadd.f32 %v4789, %v4801
    %v4803 = vpop.f32.mrf.mxu0
    %4804 = vdwg.mxu0
    %4805 = vmatpush.bf16.msra.mxu0 %v4390
    %4806 = vmatpush.bf16.msra.mxu0 %v4386
    %4807 = vmatpush.bf16.msra.mxu0 %v4382
    %4808 = vmatpush.bf16.msra.mxu0 %v4378
    %4809 = vmatpush.bf16.msra.mxu0 %v4374
    %4810 = vmatpush.bf16.msra.mxu0 %v4370
    %4811 = vmatpush.bf16.msra.mxu0 %v4366
    %4812 = vmatpush.bf16.msra.mxu0 %v4362
    %4813 = vmatmul.bf16.gmra.mxu0 %v3293
    %v4814 = vpop.f32.mrf.mxu0
    %v4815 = vadd.f32 %v4802, %v4814
    %v4816 = vpop.f32.mrf.mxu0
    %4817 = vdwg.mxu0
    %4818 = vmatpush.bf16.msra.mxu0 %v4422
    %4819 = vmatpush.bf16.msra.mxu0 %v4418
    %4820 = vmatpush.bf16.msra.mxu0 %v4414
    %4821 = vmatpush.bf16.msra.mxu0 %v4410
    %4822 = vmatpush.bf16.msra.mxu0 %v4406
    %4823 = vmatpush.bf16.msra.mxu0 %v4402
    %4824 = vmatpush.bf16.msra.mxu0 %v4398
    %4825 = vmatpush.bf16.msra.mxu0 %v4394
    %4826 = vmatmul.bf16.gmra.mxu0 %v3294
    %v4827 = vpop.f32.mrf.mxu0
    %v4828 = vadd.f32 %v4815, %v4827
    %v4829 = vpop.f32.mrf.mxu0
    %4830 = vdwg.mxu0
    %4831 = vmatpush.bf16.msra.mxu0 %v4231
    %4832 = vmatpush.bf16.msra.mxu0 %v4227
    %4833 = vmatpush.bf16.msra.mxu0 %v4223
    %4834 = vmatpush.bf16.msra.mxu0 %v4219
    %4835 = vmatpush.bf16.msra.mxu0 %v4215
    %4836 = vmatpush.bf16.msra.mxu0 %v4211
    %4837 = vmatpush.bf16.msra.mxu0 %v4207
    %4838 = vmatpush.bf16.msra.mxu0 %v4203
    %4839 = vmatmul.bf16.gmra.mxu0 %v3288
    %v4840 = vpop.f32.mrf.mxu0
    %v4841 = vadd.f32 %v3523, %v4840
    %v4842 = vpop.f32.mrf.mxu0
    %4843 = vdwg.mxu0
    %4844 = vmatpush.bf16.msra.mxu0 %v4263
    %4845 = vmatpush.bf16.msra.mxu0 %v4259
    %4846 = vmatpush.bf16.msra.mxu0 %v4255
    %4847 = vmatpush.bf16.msra.mxu0 %v4251
    %4848 = vmatpush.bf16.msra.mxu0 %v4247
    %4849 = vmatpush.bf16.msra.mxu0 %v4243
    %4850 = vmatpush.bf16.msra.mxu0 %v4239
    %4851 = vmatpush.bf16.msra.mxu0 %v4235
    %4852 = vmatmul.bf16.gmra.mxu0 %v3289
    %v4853 = vpop.f32.mrf.mxu0
    %v4854 = vadd.f32 %v4841, %v4853
    %v4855 = vpop.f32.mrf.mxu0
    %4856 = vdwg.mxu0
    %4857 = vmatpush.bf16.msra.mxu0 %v4295
    %4858 = vmatpush.bf16.msra.mxu0 %v4291
    %4859 = vmatpush.bf16.msra.mxu0 %v4287
    %4860 = vmatpush.bf16.msra.mxu0 %v4283
    %4861 = vmatpush.bf16.msra.mxu0 %v4279
    %4862 = vmatpush.bf16.msra.mxu0 %v4275
    %4863 = vmatpush.bf16.msra.mxu0 %v4271
    %4864 = vmatpush.bf16.msra.mxu0 %v4267
    %4865 = vmatmul.bf16.gmra.mxu0 %v3290
    %v4866 = vpop.f32.mrf.mxu0
    %v4867 = vadd.f32 %v4854, %v4866
    %v4868 = vpop.f32.mrf.mxu0
    %4869 = vdwg.mxu0
    %4870 = vmatpush.bf16.msra.mxu0 %v4327
    %4871 = vmatpush.bf16.msra.mxu0 %v4323
    %4872 = vmatpush.bf16.msra.mxu0 %v4319
    %4873 = vmatpush.bf16.msra.mxu0 %v4315
    %4874 = vmatpush.bf16.msra.mxu0 %v4311
    %4875 = vmatpush.bf16.msra.mxu0 %v4307
    %4876 = vmatpush.bf16.msra.mxu0 %v4303
    %4877 = vmatpush.bf16.msra.mxu0 %v4299
    %4878 = vmatmul.bf16.gmra.mxu0 %v3291
    %v4879 = vpop.f32.mrf.mxu0
    %v4880 = vadd.f32 %v4867, %v4879
    %v4881 = vpop.f32.mrf.mxu0
    %4882 = vdwg.mxu0
    %4883 = vmatpush.bf16.msra.mxu0 %v4359
    %4884 = vmatpush.bf16.msra.mxu0 %v4355
    %4885 = vmatpush.bf16.msra.mxu0 %v4351
    %4886 = vmatpush.bf16.msra.mxu0 %v4347
    %4887 = vmatpush.bf16.msra.mxu0 %v4343
    %4888 = vmatpush.bf16.msra.mxu0 %v4339
    %4889 = vmatpush.bf16.msra.mxu0 %v4335
    %4890 = vmatpush.bf16.msra.mxu0 %v4331
    %4891 = vmatmul.bf16.gmra.mxu0 %v3292
    %v4892 = vpop.f32.mrf.mxu0
    %v4893 = vadd.f32 %v4880, %v4892
    %v4894 = vpop.f32.mrf.mxu0
    %4895 = vdwg.mxu0
    %4896 = vmatpush.bf16.msra.mxu0 %v4391
    %4897 = vmatpush.bf16.msra.mxu0 %v4387
    %4898 = vmatpush.bf16.msra.mxu0 %v4383
    %4899 = vmatpush.bf16.msra.mxu0 %v4379
    %4900 = vmatpush.bf16.msra.mxu0 %v4375
    %4901 = vmatpush.bf16.msra.mxu0 %v4371
    %4902 = vmatpush.bf16.msra.mxu0 %v4367
    %4903 = vmatpush.bf16.msra.mxu0 %v4363
    %4904 = vmatmul.bf16.gmra.mxu0 %v3293
    %v4905 = vpop.f32.mrf.mxu0
    %v4906 = vadd.f32 %v4893, %v4905
    %v4907 = vpop.f32.mrf.mxu0
    %4908 = vdwg.mxu0
    %4909 = vmatpush.bf16.msra.mxu0 %v4423
    %4910 = vmatpush.bf16.msra.mxu0 %v4419
    %4911 = vmatpush.bf16.msra.mxu0 %v4415
    %4912 = vmatpush.bf16.msra.mxu0 %v4411
    %4913 = vmatpush.bf16.msra.mxu0 %v4407
    %4914 = vmatpush.bf16.msra.mxu0 %v4403
    %4915 = vmatpush.bf16.msra.mxu0 %v4399
    %4916 = vmatpush.bf16.msra.mxu0 %v4395
    %4917 = vmatmul.bf16.gmra.mxu0 %v3294
    %v4918 = vpop.f32.mrf.mxu0
    %v4919 = vadd.f32 %v4906, %v4918
    %v4920 = vpop.f32.mrf.mxu0
    %4921 = vdwg.mxu0
    %4922 = vmatpush.bf16.msra.mxu0 %v4232
    %4923 = vmatpush.bf16.msra.mxu0 %v4228
    %4924 = vmatpush.bf16.msra.mxu0 %v4224
    %4925 = vmatpush.bf16.msra.mxu0 %v4220
    %4926 = vmatpush.bf16.msra.mxu0 %v4216
    %4927 = vmatpush.bf16.msra.mxu0 %v4212
    %4928 = vmatpush.bf16.msra.mxu0 %v4208
    %4929 = vmatpush.bf16.msra.mxu0 %v4204
    %4930 = vmatmul.bf16.gmra.mxu0 %v3288
    %v4931 = vpop.f32.mrf.mxu0
    %v4932 = vadd.f32 %v3524, %v4931
    %v4933 = vpop.f32.mrf.mxu0
    %4934 = vdwg.mxu0
    %4935 = vmatpush.bf16.msra.mxu0 %v4264
    %4936 = vmatpush.bf16.msra.mxu0 %v4260
    %4937 = vmatpush.bf16.msra.mxu0 %v4256
    %4938 = vmatpush.bf16.msra.mxu0 %v4252
    %4939 = vmatpush.bf16.msra.mxu0 %v4248
    %4940 = vmatpush.bf16.msra.mxu0 %v4244
    %4941 = vmatpush.bf16.msra.mxu0 %v4240
    %4942 = vmatpush.bf16.msra.mxu0 %v4236
    %4943 = vmatmul.bf16.gmra.mxu0 %v3289
    %v4944 = vpop.f32.mrf.mxu0
    %v4945 = vadd.f32 %v4932, %v4944
    %v4946 = vpop.f32.mrf.mxu0
    %4947 = vdwg.mxu0
    %4948 = vmatpush.bf16.msra.mxu0 %v4296
    %4949 = vmatpush.bf16.msra.mxu0 %v4292
    %4950 = vmatpush.bf16.msra.mxu0 %v4288
    %4951 = vmatpush.bf16.msra.mxu0 %v4284
    %4952 = vmatpush.bf16.msra.mxu0 %v4280
    %4953 = vmatpush.bf16.msra.mxu0 %v4276
    %4954 = vmatpush.bf16.msra.mxu0 %v4272
    %4955 = vmatpush.bf16.msra.mxu0 %v4268
    %4956 = vmatmul.bf16.gmra.mxu0 %v3290
    %v4957 = vpop.f32.mrf.mxu0
    %v4958 = vadd.f32 %v4945, %v4957
    %v4959 = vpop.f32.mrf.mxu0
    %4960 = vdwg.mxu0
    %4961 = vmatpush.bf16.msra.mxu0 %v4328
    %4962 = vmatpush.bf16.msra.mxu0 %v4324
    %4963 = vmatpush.bf16.msra.mxu0 %v4320
    %4964 = vmatpush.bf16.msra.mxu0 %v4316
    %4965 = vmatpush.bf16.msra.mxu0 %v4312
    %4966 = vmatpush.bf16.msra.mxu0 %v4308
    %4967 = vmatpush.bf16.msra.mxu0 %v4304
    %4968 = vmatpush.bf16.msra.mxu0 %v4300
    %4969 = vmatmul.bf16.gmra.mxu0 %v3291
    %v4970 = vpop.f32.mrf.mxu0
    %v4971 = vadd.f32 %v4958, %v4970
    %v4972 = vpop.f32.mrf.mxu0
    %4973 = vdwg.mxu0
    %4974 = vmatpush.bf16.msra.mxu0 %v4360
    %4975 = vmatpush.bf16.msra.mxu0 %v4356
    %4976 = vmatpush.bf16.msra.mxu0 %v4352
    %4977 = vmatpush.bf16.msra.mxu0 %v4348
    %4978 = vmatpush.bf16.msra.mxu0 %v4344
    %4979 = vmatpush.bf16.msra.mxu0 %v4340
    %4980 = vmatpush.bf16.msra.mxu0 %v4336
    %4981 = vmatpush.bf16.msra.mxu0 %v4332
    %4982 = vmatmul.bf16.gmra.mxu0 %v3292
    %v4983 = vpop.f32.mrf.mxu0
    %v4984 = vadd.f32 %v4971, %v4983
    %v4985 = vpop.f32.mrf.mxu0
    %4986 = vdwg.mxu0
    %4987 = vmatpush.bf16.msra.mxu0 %v4392
    %4988 = vmatpush.bf16.msra.mxu0 %v4388
    %4989 = vmatpush.bf16.msra.mxu0 %v4384
    %4990 = vmatpush.bf16.msra.mxu0 %v4380
    %4991 = vmatpush.bf16.msra.mxu0 %v4376
    %4992 = vmatpush.bf16.msra.mxu0 %v4372
    %4993 = vmatpush.bf16.msra.mxu0 %v4368
    %4994 = vmatpush.bf16.msra.mxu0 %v4364
    %4995 = vmatmul.bf16.gmra.mxu0 %v3293
    %v4996 = vpop.f32.mrf.mxu0
    %v4997 = vadd.f32 %v4984, %v4996
    %v4998 = vpop.f32.mrf.mxu0
    %4999 = vdwg.mxu0
    %5000 = vmatpush.bf16.msra.mxu0 %v4424
    %5001 = vmatpush.bf16.msra.mxu0 %v4420
    %5002 = vmatpush.bf16.msra.mxu0 %v4416
    %5003 = vmatpush.bf16.msra.mxu0 %v4412
    %5004 = vmatpush.bf16.msra.mxu0 %v4408
    %5005 = vmatpush.bf16.msra.mxu0 %v4404
    %5006 = vmatpush.bf16.msra.mxu0 %v4400
    %5007 = vmatpush.bf16.msra.mxu0 %v4396
    %5008 = vmatmul.bf16.gmra.mxu0 %v3294
    %v5009 = vpop.f32.mrf.mxu0
    %v5010 = vadd.f32 %v4997, %v5009
    %v5011 = vpop.f32.mrf.mxu0
    %5012 = vdwg.mxu0
    %v5013 = vmax.f32 %v4737, 0.0
    %v5014 = vmax.f32 %v4828, 0.0
    %v5015 = vmax.f32 %v4919, 0.0
    %v5016 = vmax.f32 %v5010, 0.0
    %v5017 = vpack.c.bf16 %v5013, %v5013
    %v5018 = vpack.c.bf16 %v5014, %v5014
    %v5019 = vpack.c.bf16 %v5015, %v5015
    %v5020 = vpack.c.bf16 %v5016, %v5016
    %v5021 = vld [vmem:[#allocation9] sm:$0xff]
    %v5022 = vld [vmem:[#allocation9 + $0x8] sm:$0xff]
    %v5023 = vld [vmem:[#allocation9 + $0x10] sm:$0xff]
    %v5024 = vld [vmem:[#allocation9 + $0x18] sm:$0xff]
    %v5025 = vld [vmem:[#allocation9 + $0x20] sm:$0xff]
    %v5026 = vld [vmem:[#allocation9 + $0x28] sm:$0xff]
    %v5027 = vld [vmem:[#allocation9 + $0x30] sm:$0xff]
    %v5028 = vld [vmem:[#allocation9 + $0x38] sm:$0xff]
    %v5029 = vld [vmem:[#allocation9 + $0x40] sm:$0xff]
    %v5030 = vld [vmem:[#allocation9 + $0x48] sm:$0xff]
    %v5031 = vld [vmem:[#allocation9 + $0x50] sm:$0xff]
    %v5032 = vld [vmem:[#allocation9 + $0x58] sm:$0xff]
    %v5033 = vld [vmem:[#allocation9 + $0x60] sm:$0xff]
    %v5034 = vld [vmem:[#allocation9 + $0x68] sm:$0xff]
    %v5035 = vld [vmem:[#allocation9 + $0x70] sm:$0xff]
    %v5036 = vld [vmem:[#allocation9 + $0x78] sm:$0xff]
    %v5037 = vld [vmem:[#allocation9 + $0x80] sm:$0xff]
    %v5038 = vld [vmem:[#allocation9 + $0x88] sm:$0xff]
    %v5039 = vld [vmem:[#allocation9 + $0x90] sm:$0xff]
    %v5040 = vld [vmem:[#allocation9 + $0x98] sm:$0xff]
    %v5041 = vld [vmem:[#allocation9 + $0xa0] sm:$0xff]
    %v5042 = vld [vmem:[#allocation9 + $0xa8] sm:$0xff]
    %v5043 = vld [vmem:[#allocation9 + $0xb0] sm:$0xff]
    %v5044 = vld [vmem:[#allocation9 + $0xb8] sm:$0xff]
    %v5045 = vld [vmem:[#allocation9 + $0xc0] sm:$0xff]
    %v5046 = vld [vmem:[#allocation9 + $0xc8] sm:$0xff]
    %v5047 = vld [vmem:[#allocation9 + $0xd0] sm:$0xff]
    %v5048 = vld [vmem:[#allocation9 + $0xd8] sm:$0xff]
    %v5049 = vld [vmem:[#allocation9 + $0xe0] sm:$0xff]
    %v5050 = vld [vmem:[#allocation9 + $0xe8] sm:$0xff]
    %v5051 = vld [vmem:[#allocation9 + $0xf0] sm:$0xff]
    %v5052 = vld [vmem:[#allocation9 + $0xf8] sm:$0xff]
    %v5053 = vld [vmem:[#allocation9 + $0x100] sm:$0xff]
    %v5054 = vld [vmem:[#allocation9 + $0x108] sm:$0xff]
    %v5055 = vld [vmem:[#allocation9 + $0x110] sm:$0xff]
    %v5056 = vld [vmem:[#allocation9 + $0x118] sm:$0xff]
    %v5057 = vld [vmem:[#allocation9 + $0x120] sm:$0xff]
    %v5058 = vld [vmem:[#allocation9 + $0x128] sm:$0xff]
    %v5059 = vld [vmem:[#allocation9 + $0x130] sm:$0xff]
    %v5060 = vld [vmem:[#allocation9 + $0x138] sm:$0xff]
    %v5061 = vld [vmem:[#allocation9 + $0x140] sm:$0xff]
    %v5062 = vld [vmem:[#allocation9 + $0x148] sm:$0xff]
    %v5063 = vld [vmem:[#allocation9 + $0x150] sm:$0xff]
    %v5064 = vld [vmem:[#allocation9 + $0x158] sm:$0xff]
    %v5065 = vld [vmem:[#allocation9 + $0x160] sm:$0xff]
    %v5066 = vld [vmem:[#allocation9 + $0x168] sm:$0xff]
    %v5067 = vld [vmem:[#allocation9 + $0x170] sm:$0xff]
    %v5068 = vld [vmem:[#allocation9 + $0x178] sm:$0xff]
    %v5069 = vld [vmem:[#allocation9 + $0x180] sm:$0xff]
    %v5070 = vld [vmem:[#allocation9 + $0x188] sm:$0xff]
    %v5071 = vld [vmem:[#allocation9 + $0x190] sm:$0xff]
    %v5072 = vld [vmem:[#allocation9 + $0x198] sm:$0xff]
    %v5073 = vld [vmem:[#allocation9 + $0x1a0] sm:$0xff]
    %v5074 = vld [vmem:[#allocation9 + $0x1a8] sm:$0xff]
    %v5075 = vld [vmem:[#allocation9 + $0x1b0] sm:$0xff]
    %v5076 = vld [vmem:[#allocation9 + $0x1b8] sm:$0xff]
    %v5077 = vld [vmem:[#allocation9 + $0x1c0] sm:$0xff]
    %v5078 = vld [vmem:[#allocation9 + $0x1c8] sm:$0xff]
    %v5079 = vld [vmem:[#allocation9 + $0x1d0] sm:$0xff]
    %v5080 = vld [vmem:[#allocation9 + $0x1d8] sm:$0xff]
    %v5081 = vld [vmem:[#allocation9 + $0x1e0] sm:$0xff]
    %v5082 = vld [vmem:[#allocation9 + $0x1e8] sm:$0xff]
    %v5083 = vld [vmem:[#allocation9 + $0x1f0] sm:$0xff]
    %v5084 = vld [vmem:[#allocation9 + $0x1f8] sm:$0xff]
    %v5085 = vld [vmem:[#allocation10] sm:$0x3]
    %v5087 = vperm.slane %v5085, 0
    %v5088 = vperm.slane %v5085, 1
    %v5155 = vunpack.c.l.b16 %v5021
    %v5156 = vunpack.c.h.b16 %v5021
    %v5157 = vunpack.c.l.b16 %v5022
    %v5158 = vunpack.c.h.b16 %v5022
    %v5159 = vunpack.c.l.b16 %v5023
    %v5160 = vunpack.c.h.b16 %v5023
    %v5161 = vunpack.c.l.b16 %v5024
    %v5162 = vunpack.c.h.b16 %v5024
    %v5163 = vunpack.c.l.b16 %v5025
    %v5164 = vunpack.c.h.b16 %v5025
    %v5165 = vunpack.c.l.b16 %v5026
    %v5166 = vunpack.c.h.b16 %v5026
    %v5167 = vunpack.c.l.b16 %v5027
    %v5168 = vunpack.c.h.b16 %v5027
    %v5169 = vunpack.c.l.b16 %v5028
    %v5170 = vunpack.c.h.b16 %v5028
    %v5171 = vunpack.c.l.b16 %v5029
    %v5172 = vunpack.c.h.b16 %v5029
    %v5173 = vunpack.c.l.b16 %v5030
    %v5174 = vunpack.c.h.b16 %v5030
    %v5175 = vunpack.c.l.b16 %v5031
    %v5176 = vunpack.c.h.b16 %v5031
    %v5177 = vunpack.c.l.b16 %v5032
    %v5178 = vunpack.c.h.b16 %v5032
    %v5179 = vunpack.c.l.b16 %v5033
    %v5180 = vunpack.c.h.b16 %v5033
    %v5181 = vunpack.c.l.b16 %v5034
    %v5182 = vunpack.c.h.b16 %v5034
    %v5183 = vunpack.c.l.b16 %v5035
    %v5184 = vunpack.c.h.b16 %v5035
    %v5185 = vunpack.c.l.b16 %v5036
    %v5186 = vunpack.c.h.b16 %v5036
    %v5187 = vunpack.c.l.b16 %v5037
    %v5188 = vunpack.c.h.b16 %v5037
    %v5189 = vunpack.c.l.b16 %v5038
    %v5190 = vunpack.c.h.b16 %v5038
    %v5191 = vunpack.c.l.b16 %v5039
    %v5192 = vunpack.c.h.b16 %v5039
    %v5193 = vunpack.c.l.b16 %v5040
    %v5194 = vunpack.c.h.b16 %v5040
    %v5195 = vunpack.c.l.b16 %v5041
    %v5196 = vunpack.c.h.b16 %v5041
    %v5197 = vunpack.c.l.b16 %v5042
    %v5198 = vunpack.c.h.b16 %v5042
    %v5199 = vunpack.c.l.b16 %v5043
    %v5200 = vunpack.c.h.b16 %v5043
    %v5201 = vunpack.c.l.b16 %v5044
    %v5202 = vunpack.c.h.b16 %v5044
    %v5203 = vunpack.c.l.b16 %v5045
    %v5204 = vunpack.c.h.b16 %v5045
    %v5205 = vunpack.c.l.b16 %v5046
    %v5206 = vunpack.c.h.b16 %v5046
    %v5207 = vunpack.c.l.b16 %v5047
    %v5208 = vunpack.c.h.b16 %v5047
    %v5209 = vunpack.c.l.b16 %v5048
    %v5210 = vunpack.c.h.b16 %v5048
    %v5211 = vunpack.c.l.b16 %v5049
    %v5212 = vunpack.c.h.b16 %v5049
    %v5213 = vunpack.c.l.b16 %v5050
    %v5214 = vunpack.c.h.b16 %v5050
    %v5215 = vunpack.c.l.b16 %v5051
    %v5216 = vunpack.c.h.b16 %v5051
    %v5217 = vunpack.c.l.b16 %v5052
    %v5218 = vunpack.c.h.b16 %v5052
    %v5219 = vunpack.c.l.b16 %v5053
    %v5220 = vunpack.c.h.b16 %v5053
    %v5221 = vunpack.c.l.b16 %v5054
    %v5222 = vunpack.c.h.b16 %v5054
    %v5223 = vunpack.c.l.b16 %v5055
    %v5224 = vunpack.c.h.b16 %v5055
    %v5225 = vunpack.c.l.b16 %v5056
    %v5226 = vunpack.c.h.b16 %v5056
    %v5227 = vunpack.c.l.b16 %v5057
    %v5228 = vunpack.c.h.b16 %v5057
    %v5229 = vunpack.c.l.b16 %v5058
    %v5230 = vunpack.c.h.b16 %v5058
    %v5231 = vunpack.c.l.b16 %v5059
    %v5232 = vunpack.c.h.b16 %v5059
    %v5233 = vunpack.c.l.b16 %v5060
    %v5234 = vunpack.c.h.b16 %v5060
    %v5235 = vunpack.c.l.b16 %v5061
    %v5236 = vunpack.c.h.b16 %v5061
    %v5237 = vunpack.c.l.b16 %v5062
    %v5238 = vunpack.c.h.b16 %v5062
    %v5239 = vunpack.c.l.b16 %v5063
    %v5240 = vunpack.c.h.b16 %v5063
    %v5241 = vunpack.c.l.b16 %v5064
    %v5242 = vunpack.c.h.b16 %v5064
    %v5243 = vunpack.c.l.b16 %v5065
    %v5244 = vunpack.c.h.b16 %v5065
    %v5245 = vunpack.c.l.b16 %v5066
    %v5246 = vunpack.c.h.b16 %v5066
    %v5247 = vunpack.c.l.b16 %v5067
    %v5248 = vunpack.c.h.b16 %v5067
    %v5249 = vunpack.c.l.b16 %v5068
    %v5250 = vunpack.c.h.b16 %v5068
    %v5251 = vunpack.c.l.b16 %v5069
    %v5252 = vunpack.c.h.b16 %v5069
    %v5253 = vunpack.c.l.b16 %v5070
    %v5254 = vunpack.c.h.b16 %v5070
    %v5255 = vunpack.c.l.b16 %v5071
    %v5256 = vunpack.c.h.b16 %v5071
    %v5257 = vunpack.c.l.b16 %v5072
    %v5258 = vunpack.c.h.b16 %v5072
    %v5259 = vunpack.c.l.b16 %v5073
    %v5260 = vunpack.c.h.b16 %v5073
    %v5261 = vunpack.c.l.b16 %v5074
    %v5262 = vunpack.c.h.b16 %v5074
    %v5263 = vunpack.c.l.b16 %v5075
    %v5264 = vunpack.c.h.b16 %v5075
    %v5265 = vunpack.c.l.b16 %v5076
    %v5266 = vunpack.c.h.b16 %v5076
    %v5267 = vunpack.c.l.b16 %v5077
    %v5268 = vunpack.c.h.b16 %v5077
    %v5269 = vunpack.c.l.b16 %v5078
    %v5270 = vunpack.c.h.b16 %v5078
    %v5271 = vunpack.c.l.b16 %v5079
    %v5272 = vunpack.c.h.b16 %v5079
    %v5273 = vunpack.c.l.b16 %v5080
    %v5274 = vunpack.c.h.b16 %v5080
    %v5275 = vunpack.c.l.b16 %v5081
    %v5276 = vunpack.c.h.b16 %v5081
    %v5277 = vunpack.c.l.b16 %v5082
    %v5278 = vunpack.c.h.b16 %v5082
    %v5279 = vunpack.c.l.b16 %v5083
    %v5280 = vunpack.c.h.b16 %v5083
    %v5281 = vunpack.c.l.b16 %v5084
    %v5282 = vunpack.c.h.b16 %v5084
    %v5283 = vpack.c.b16 %v5157, %v5155
    %v5284 = vpack.c.b16 %v5158, %v5156
    %v5285 = vpack.c.b16 %v5161, %v5159
    %v5286 = vpack.c.b16 %v5162, %v5160
    %v5287 = vpack.c.b16 %v5165, %v5163
    %v5288 = vpack.c.b16 %v5166, %v5164
    %v5289 = vpack.c.b16 %v5169, %v5167
    %v5290 = vpack.c.b16 %v5170, %v5168
    %v5291 = vpack.c.b16 %v5173, %v5171
    %v5292 = vpack.c.b16 %v5174, %v5172
    %v5293 = vpack.c.b16 %v5177, %v5175
    %v5294 = vpack.c.b16 %v5178, %v5176
    %v5295 = vpack.c.b16 %v5181, %v5179
    %v5296 = vpack.c.b16 %v5182, %v5180
    %v5297 = vpack.c.b16 %v5185, %v5183
    %v5298 = vpack.c.b16 %v5186, %v5184
    %v5299 = vpack.c.b16 %v5189, %v5187
    %v5300 = vpack.c.b16 %v5190, %v5188
    %v5301 = vpack.c.b16 %v5193, %v5191
    %v5302 = vpack.c.b16 %v5194, %v5192
    %v5303 = vpack.c.b16 %v5197, %v5195
    %v5304 = vpack.c.b16 %v5198, %v5196
    %v5305 = vpack.c.b16 %v5201, %v5199
    %v5306 = vpack.c.b16 %v5202, %v5200
    %v5307 = vpack.c.b16 %v5205, %v5203
    %v5308 = vpack.c.b16 %v5206, %v5204
    %v5309 = vpack.c.b16 %v5209, %v5207
    %v5310 = vpack.c.b16 %v5210, %v5208
    %v5311 = vpack.c.b16 %v5213, %v5211
    %v5312 = vpack.c.b16 %v5214, %v5212
    %v5313 = vpack.c.b16 %v5217, %v5215
    %v5314 = vpack.c.b16 %v5218, %v5216
    %v5315 = vpack.c.b16 %v5221, %v5219
    %v5316 = vpack.c.b16 %v5222, %v5220
    %v5317 = vpack.c.b16 %v5225, %v5223
    %v5318 = vpack.c.b16 %v5226, %v5224
    %v5319 = vpack.c.b16 %v5229, %v5227
    %v5320 = vpack.c.b16 %v5230, %v5228
    %v5321 = vpack.c.b16 %v5233, %v5231
    %v5322 = vpack.c.b16 %v5234, %v5232
    %v5323 = vpack.c.b16 %v5237, %v5235
    %v5324 = vpack.c.b16 %v5238, %v5236
    %v5325 = vpack.c.b16 %v5241, %v5239
    %v5326 = vpack.c.b16 %v5242, %v5240
    %v5327 = vpack.c.b16 %v5245, %v5243
    %v5328 = vpack.c.b16 %v5246, %v5244
    %v5329 = vpack.c.b16 %v5249, %v5247
    %v5330 = vpack.c.b16 %v5250, %v5248
    %v5331 = vpack.c.b16 %v5253, %v5251
    %v5332 = vpack.c.b16 %v5254, %v5252
    %v5333 = vpack.c.b16 %v5257, %v5255
    %v5334 = vpack.c.b16 %v5258, %v5256
    %v5335 = vpack.c.b16 %v5261, %v5259
    %v5336 = vpack.c.b16 %v5262, %v5260
    %v5337 = vpack.c.b16 %v5265, %v5263
    %v5338 = vpack.c.b16 %v5266, %v5264
    %v5339 = vpack.c.b16 %v5269, %v5267
    %v5340 = vpack.c.b16 %v5270, %v5268
    %v5341 = vpack.c.b16 %v5273, %v5271
    %v5342 = vpack.c.b16 %v5274, %v5272
    %v5343 = vpack.c.b16 %v5277, %v5275
    %v5344 = vpack.c.b16 %v5278, %v5276
    %v5345 = vpack.c.b16 %v5281, %v5279
    %v5346 = vpack.c.b16 %v5282, %v5280
    %5411 = vmatpush.bf16.msra.mxu0 %v5297
    %5412 = vmatpush.bf16.msra.mxu0 %v5295
    %5413 = vmatpush.bf16.msra.mxu0 %v5293
    %5414 = vmatpush.bf16.msra.mxu0 %v5291
    %5415 = vmatpush.bf16.msra.mxu0 %v5289
    %5416 = vmatpush.bf16.msra.mxu0 %v5287
    %5417 = vmatpush.bf16.msra.mxu0 %v5285
    %5418 = vmatpush.bf16.msra.mxu0 %v5283
    %5419 = vmatmul.bf16.gmra.mxu0 %v5017
    %v5420 = vpop.f32.mrf.mxu0
    %v5421 = vadd.f32 %v5087, %v5420
    %v5422 = vpop.f32.mrf.mxu0
    %5423 = vdwg.mxu0
    %5424 = vmatpush.bf16.msra.mxu0 %v5313
    %5425 = vmatpush.bf16.msra.mxu0 %v5311
    %5426 = vmatpush.bf16.msra.mxu0 %v5309
    %5427 = vmatpush.bf16.msra.mxu0 %v5307
    %5428 = vmatpush.bf16.msra.mxu0 %v5305
    %5429 = vmatpush.bf16.msra.mxu0 %v5303
    %5430 = vmatpush.bf16.msra.mxu0 %v5301
    %5431 = vmatpush.bf16.msra.mxu0 %v5299
    %5432 = vmatmul.bf16.gmra.mxu0 %v5018
    %v5433 = vpop.f32.mrf.mxu0
    %v5434 = vadd.f32 %v5421, %v5433
    %v5435 = vpop.f32.mrf.mxu0
    %5436 = vdwg.mxu0
    %5437 = vmatpush.bf16.msra.mxu0 %v5329
    %5438 = vmatpush.bf16.msra.mxu0 %v5327
    %5439 = vmatpush.bf16.msra.mxu0 %v5325
    %5440 = vmatpush.bf16.msra.mxu0 %v5323
    %5441 = vmatpush.bf16.msra.mxu0 %v5321
    %5442 = vmatpush.bf16.msra.mxu0 %v5319
    %5443 = vmatpush.bf16.msra.mxu0 %v5317
    %5444 = vmatpush.bf16.msra.mxu0 %v5315
    %5445 = vmatmul.bf16.gmra.mxu0 %v5019
    %v5446 = vpop.f32.mrf.mxu0
    %v5447 = vadd.f32 %v5434, %v5446
    %v5448 = vpop.f32.mrf.mxu0
    %5449 = vdwg.mxu0
    %5450 = vmatpush.bf16.msra.mxu0 %v5345
    %5451 = vmatpush.bf16.msra.mxu0 %v5343
    %5452 = vmatpush.bf16.msra.mxu0 %v5341
    %5453 = vmatpush.bf16.msra.mxu0 %v5339
    %5454 = vmatpush.bf16.msra.mxu0 %v5337
    %5455 = vmatpush.bf16.msra.mxu0 %v5335
    %5456 = vmatpush.bf16.msra.mxu0 %v5333
    %5457 = vmatpush.bf16.msra.mxu0 %v5331
    %5458 = vmatmul.bf16.gmra.mxu0 %v5020
    %v5459 = vpop.f32.mrf.mxu0
    %v5460 = vadd.f32 %v5447, %v5459
    %v5461 = vpop.f32.mrf.mxu0
    %5462 = vdwg.mxu0
    %5463 = vmatpush.bf16.msra.mxu0 %v5298
    %5464 = vmatpush.bf16.msra.mxu0 %v5296
    %5465 = vmatpush.bf16.msra.mxu0 %v5294
    %5466 = vmatpush.bf16.msra.mxu0 %v5292
    %5467 = vmatpush.bf16.msra.mxu0 %v5290
    %5468 = vmatpush.bf16.msra.mxu0 %v5288
    %5469 = vmatpush.bf16.msra.mxu0 %v5286
    %5470 = vmatpush.bf16.msra.mxu0 %v5284
    %5471 = vmatmul.bf16.gmra.mxu0 %v5017
    %v5472 = vpop.f32.mrf.mxu0
    %v5473 = vadd.f32 %v5088, %v5472
    %v5474 = vpop.f32.mrf.mxu0
    %5475 = vdwg.mxu0
    %5476 = vmatpush.bf16.msra.mxu0 %v5314
    %5477 = vmatpush.bf16.msra.mxu0 %v5312
    %5478 = vmatpush.bf16.msra.mxu0 %v5310
    %5479 = vmatpush.bf16.msra.mxu0 %v5308
    %5480 = vmatpush.bf16.msra.mxu0 %v5306
    %5481 = vmatpush.bf16.msra.mxu0 %v5304
    %5482 = vmatpush.bf16.msra.mxu0 %v5302
    %5483 = vmatpush.bf16.msra.mxu0 %v5300
    %5484 = vmatmul.bf16.gmra.mxu0 %v5018
    %v5485 = vpop.f32.mrf.mxu0
    %v5486 = vadd.f32 %v5473, %v5485
    %v5487 = vpop.f32.mrf.mxu0
    %5488 = vdwg.mxu0
    %5489 = vmatpush.bf16.msra.mxu0 %v5330
    %5490 = vmatpush.bf16.msra.mxu0 %v5328
    %5491 = vmatpush.bf16.msra.mxu0 %v5326
    %5492 = vmatpush.bf16.msra.mxu0 %v5324
    %5493 = vmatpush.bf16.msra.mxu0 %v5322
    %5494 = vmatpush.bf16.msra.mxu0 %v5320
    %5495 = vmatpush.bf16.msra.mxu0 %v5318
    %5496 = vmatpush.bf16.msra.mxu0 %v5316
    %5497 = vmatmul.bf16.gmra.mxu0 %v5019
    %v5498 = vpop.f32.mrf.mxu0
    %v5499 = vadd.f32 %v5486, %v5498
    %v5500 = vpop.f32.mrf.mxu0
    %5501 = vdwg.mxu0
    %5502 = vmatpush.bf16.msra.mxu0 %v5346
    %5503 = vmatpush.bf16.msra.mxu0 %v5344
    %5504 = vmatpush.bf16.msra.mxu0 %v5342
    %5505 = vmatpush.bf16.msra.mxu0 %v5340
    %5506 = vmatpush.bf16.msra.mxu0 %v5338
    %5507 = vmatpush.bf16.msra.mxu0 %v5336
    %5508 = vmatpush.bf16.msra.mxu0 %v5334
    %5509 = vmatpush.bf16.msra.mxu0 %v5332
    %5510 = vmatmul.bf16.gmra.mxu0 %v5020
    %v5511 = vpop.f32.mrf.mxu0
    %v5512 = vadd.f32 %v5499, %v5511
    %v5513 = vpop.f32.mrf.mxu0
    %5514 = vdwg.mxu0
    %v5515 = vmax.f32 %v5460, 0.0
    %v5516 = vmax.f32 %v5512, 0.0
    %v5517 = vpack.c.bf16 %v5515, %v5515
    %v5518 = vpack.c.bf16 %v5516, %v5516
    %v5519 = vld [vmem:[%s7] sm:$0xf]
    %v5520 = vld [vmem:[%s7 + $0x4] sm:$0xf]
    %v5521 = vld [vmem:[%s7 + $0x8] sm:$0xf]
    %v5522 = vld [vmem:[%s7 + $0xc] sm:$0xf]
    %v5523 = vld [vmem:[%s7 + $0x10] sm:$0xf]
    %v5524 = vld [vmem:[%s7 + $0x14] sm:$0xf]
    %v5525 = vld [vmem:[%s7 + $0x18] sm:$0xf]
    %v5526 = vld [vmem:[%s7 + $0x1c] sm:$0xf]
    %v5527 = vld [vmem:[%s7 + $0x20] sm:$0xf]
    %v5528 = vld [vmem:[%s7 + $0x24] sm:$0xf]
    %v5529 = vld [vmem:[%s7 + $0x28] sm:$0xf]
    %v5530 = vld [vmem:[%s7 + $0x2c] sm:$0xf]
    %v5531 = vld [vmem:[%s7 + $0x30] sm:$0xf]
    %v5532 = vld [vmem:[%s7 + $0x34] sm:$0xf]
    %v5533 = vld [vmem:[%s7 + $0x38] sm:$0xf]
    %v5534 = vld [vmem:[%s7 + $0x3c] sm:$0xf]
    %v5535 = vld [vmem:[%s7 + $0x40] sm:$0xf]
    %v5536 = vld [vmem:[%s7 + $0x44] sm:$0xf]
    %v5537 = vld [vmem:[%s7 + $0x48] sm:$0xf]
    %v5538 = vld [vmem:[%s7 + $0x4c] sm:$0xf]
    %v5539 = vld [vmem:[%s7 + $0x50] sm:$0xf]
    %v5540 = vld [vmem:[%s7 + $0x54] sm:$0xf]
    %v5541 = vld [vmem:[%s7 + $0x58] sm:$0xf]
    %v5542 = vld [vmem:[%s7 + $0x5c] sm:$0xf]
    %v5543 = vld [vmem:[%s7 + $0x60] sm:$0xf]
    %v5544 = vld [vmem:[%s7 + $0x64] sm:$0xf]
    %v5545 = vld [vmem:[%s7 + $0x68] sm:$0xf]
    %v5546 = vld [vmem:[%s7 + $0x6c] sm:$0xf]
    %v5547 = vld [vmem:[%s7 + $0x70] sm:$0xf]
    %v5548 = vld [vmem:[%s7 + $0x74] sm:$0xf]
    %v5549 = vld [vmem:[%s7 + $0x78] sm:$0xf]
    %v5550 = vld [vmem:[%s7 + $0x7c] sm:$0xf]
    %v5551 = vld [vmem:[#allocation12] sm:$0x1]
    %v5553 = vperm.slane %v5551, 0
    %v5587 = vunpack.c.l.b16 %v5519
    %v5588 = vunpack.c.l.b16 %v5520
    %v5589 = vunpack.c.l.b16 %v5521
    %v5590 = vunpack.c.l.b16 %v5522
    %v5591 = vunpack.c.l.b16 %v5523
    %v5592 = vunpack.c.l.b16 %v5524
    %v5593 = vunpack.c.l.b16 %v5525
    %v5594 = vunpack.c.l.b16 %v5526
    %v5595 = vunpack.c.l.b16 %v5527
    %v5596 = vunpack.c.l.b16 %v5528
    %v5597 = vunpack.c.l.b16 %v5529
    %v5598 = vunpack.c.l.b16 %v5530
    %v5599 = vunpack.c.l.b16 %v5531
    %v5600 = vunpack.c.l.b16 %v5532
    %v5601 = vunpack.c.l.b16 %v5533
    %v5602 = vunpack.c.l.b16 %v5534
    %v5603 = vunpack.c.l.b16 %v5535
    %v5604 = vunpack.c.l.b16 %v5536
    %v5605 = vunpack.c.l.b16 %v5537
    %v5606 = vunpack.c.l.b16 %v5538
    %v5607 = vunpack.c.l.b16 %v5539
    %v5608 = vunpack.c.l.b16 %v5540
    %v5609 = vunpack.c.l.b16 %v5541
    %v5610 = vunpack.c.l.b16 %v5542
    %v5611 = vunpack.c.l.b16 %v5543
    %v5612 = vunpack.c.l.b16 %v5544
    %v5613 = vunpack.c.l.b16 %v5545
    %v5614 = vunpack.c.l.b16 %v5546
    %v5615 = vunpack.c.l.b16 %v5547
    %v5616 = vunpack.c.l.b16 %v5548
    %v5617 = vunpack.c.l.b16 %v5549
    %v5618 = vunpack.c.l.b16 %v5550
    %v5619 = vpack.c.b16 %v5588, %v5587
    %v5620 = vpack.c.b16 %v5590, %v5589
    %v5621 = vpack.c.b16 %v5592, %v5591
    %v5622 = vpack.c.b16 %v5594, %v5593
    %v5623 = vpack.c.b16 %v5596, %v5595
    %v5624 = vpack.c.b16 %v5598, %v5597
    %v5625 = vpack.c.b16 %v5600, %v5599
    %v5626 = vpack.c.b16 %v5602, %v5601
    %v5627 = vpack.c.b16 %v5604, %v5603
    %v5628 = vpack.c.b16 %v5606, %v5605
    %v5629 = vpack.c.b16 %v5608, %v5607
    %v5630 = vpack.c.b16 %v5610, %v5609
    %v5631 = vpack.c.b16 %v5612, %v5611
    %v5632 = vpack.c.b16 %v5614, %v5613
    %v5633 = vpack.c.b16 %v5616, %v5615
    %v5634 = vpack.c.b16 %v5618, %v5617
    %5651 = vmatpush.bf16.msra.mxu0 %v5626
    %5652 = vmatpush.bf16.msra.mxu0 %v5625
    %5653 = vmatpush.bf16.msra.mxu0 %v5624
    %5654 = vmatpush.bf16.msra.mxu0 %v5623
    %5655 = vmatpush.bf16.msra.mxu0 %v5622
    %5656 = vmatpush.bf16.msra.mxu0 %v5621
    %5657 = vmatpush.bf16.msra.mxu0 %v5620
    %5658 = vmatpush.bf16.msra.mxu0 %v5619
    %5659 = vmatmul.bf16.gmra.mxu0 %v5517
    %v5660 = vpop.f32.mrf.mxu0
    %v5661 = vadd.f32 %v5553, %v5660
    %v5662 = vpop.f32.mrf.mxu0
    %5663 = vdwg.mxu0
    %5664 = vmatpush.bf16.msra.mxu0 %v5634
    %5665 = vmatpush.bf16.msra.mxu0 %v5633
    %5666 = vmatpush.bf16.msra.mxu0 %v5632
    %5667 = vmatpush.bf16.msra.mxu0 %v5631
    %5668 = vmatpush.bf16.msra.mxu0 %v5630
    %5669 = vmatpush.bf16.msra.mxu0 %v5629
    %5670 = vmatpush.bf16.msra.mxu0 %v5628
    %5671 = vmatpush.bf16.msra.mxu0 %v5627
    %5672 = vmatmul.bf16.gmra.mxu0 %v5518
    %v5673 = vpop.f32.mrf.mxu0
    %v5674 = vadd.f32 %v5661, %v5673
    %v5675 = vpop.f32.mrf.mxu0
    %5676 = vdwg.mxu0
    %v5677 = vmax.f32 %v5674, 0.0
    %vm5678 = vcmask 80896
    %5679 = vst.msk [vmem:[%s9] sm:$0xff] %vm5678, %v5677
    %v5680 = vsel %vm5678, %v5677, -inf
    %5681 = vmax.xlane.f32.xlu0 %v5680
    %v5682 = vpop.xlane.xlu0 %5681
    %v5683 = vsub.f32 %v5677, %v5682
    %v5684 = vmul.f32 %v5683, 1.442695
    %v5685 = vpow.pop %v5684
    %v5686 = vsel %vm5678, %v5685, 0.0
    %5687 = vadd.xlane.f32.xlu0 %v5686
    %v5688 = vpop.xlane.xlu0 %5687
    %v5689 = vrcp.pop %v5688
    %v5690 = vmul.f32 %v5685, %v5689
    %5691 = vst.msk [vmem:[%s10] sm:$0xff] %vm5678, %v5690
    // Predicated region
    $region66: #{mlp4b_forward.1} parent=1 // pred_check
      _
    $region67: #{mlp4b_forward.1} parent=1 // pred_check_branch
      %5693 = sbr.rel (0) target = $region69
    $region68: #{mlp4b_forward.1} parent=1 // pred_region
      _
    $region69: #{mlp4b_forward.1} parent=1 // pred_fallthru
      _
    // Predicated region
    $region70: #{mlp4b_forward.1} parent=1 // pred_check
      _
    $region71: #{mlp4b_forward.1} parent=1 // pred_check_branch
      %5695 = sbr.rel (0) target = $region73
    $region72: #{mlp4b_forward.1} parent=1 // pred_region
      _
    $region73: #{mlp4b_forward.1} parent=1 // pred_fallthru
      _
    // Predicated region
    $region74: #{mlp4b_forward.1} parent=1 // pred_check
      _
    $region75: #{mlp4b_forward.1} parent=1 // pred_check_branch
      %5697 = sbr.rel (0) target = $region77
    $region76: #{mlp4b_forward.1} parent=1 // pred_region
      _
    $region77: #{mlp4b_forward.1} parent=1 // pred_fallthru
      _
    // Predicated region
    $region78: #{mlp4b_forward.1} parent=1 // pred_check
      _
    $region79: #{mlp4b_forward.1} parent=1 // pred_check_branch
      %5699 = sbr.rel (0) target = $region81
    $region80: #{mlp4b_forward.1} parent=1 // pred_region
      _
    $region81: #{mlp4b_forward.1} parent=1 // pred_fallthru
      _
    %5700 = vsyncpa [#allocation3], 1
    %5701 = vsyncpa [#allocation5], 1
    %5702 = vsyncpa [#allocation8], 1
    %5703 = vsyncpa [#allocation11], 1

</llo_original>
